<compile_context>
chip_gen: v7x
topology: tpu7x:2x2x1
jax: 0.10.0
libtpu: 0.0.40
codegen_flags: <defaults>
</compile_context>

<pallas_src>
import numpy as np
import jax
import jax.numpy as jnp
from jax import lax
from jax.experimental import pallas as pl
from jax.experimental.pallas import tpu as pltpu

H, W = 105, 8                  # fixed by the module's .view(B, 1, 105, 8)
HW = H * W                     # 840: flattened spatial axis (lane axis)
C1 = 64                        # conv1 output channels
BN_EPS = 1e-5

# 3x3 taps, t = kh*3 + kw, offsets relative to the output position.
TAP_DHW = tuple((kh - 1, kw - 1) for kh in range(3) for kw in range(3))
TAP_OFF = tuple(dh * W + dw for dh, dw in TAP_DHW)
CENTER = 4                     # the (dh, dw) == (0, 0) tap


def _tap_masks():
    """(9, HW) f32 0/1 validity masks for a 3x3 / pad=1 conv on a 105x8 image.

    mask[t, h*W + w] = 1 iff (h + dh_t, w + dw_t) lies inside the image, i.e.
    the tap does NOT fall into the zero padding.  Built once on the host so the
    kernel never re-materializes iota/divmod/compare chains.
    """
    hh = np.arange(HW) // W
    ww = np.arange(HW) % W
    m = np.zeros((9, HW), np.float32)
    for t, (dh, dw) in enumerate(TAP_DHW):
        m[t] = ((hh + dh >= 0) & (hh + dh < H)
                & (ww + dw >= 0) & (ww + dw < W)).astype(np.float32)
    return jnp.asarray(m)


# --------------------------- fused Pallas kernel -----------------------------

def generator_kernel(masks_ref, xin_ref, wcat_ref, w1_ref, gamma_ref,
                     beta_ref, w2_ref, b2_ref, o_ref, patches_ref):
    f32 = jnp.float32
    B = xin_ref.shape[0] // 2
    inv_cnt = f32(1.0 / (B * HW))          # precomputed 1/(B*HW)

    masks = masks_ref[...]                 # (9, HW), loaded once

    # Packed FC layer: xin rows are [noise_b | 0 | 1 0] and [0 | wemb_b | 0 1],
    # wcat stacks [Wn; We; bn; be], so x_all rows are n_0, e_0, n_1, e_1, ...
    x_all = jnp.dot(xin_ref[...], wcat_ref[...],
                    preferred_element_type=f32)                   # (2B, HW)

    def shift(x, t):
        """y[..., hw] = x[..., hw + off_t] if tap t stays inside the 105x8
        image, else 0 (the conv's zero padding). Masks are precomputed."""
        off = TAP_OFF[t]
        if off == 0:
            return x
        y = pltpu.roll(x, (-off) % HW, axis=x.ndim - 1)
        return y * masks[t:t + 1, :]

    # --- conv1 (2 -> 64, 3x3, pad 1): shift-then-contract --------------------
    # ONE roll per tap covers every batch and both channels at once.
    shifted = [shift(x_all, t) for t in range(9)]                 # 9 x (2B, HW)

    w1 = w1_ref[...]                                              # (64, 18)
    ys = []
    for b in range(B):
        # 9 two-sublane stores per batch; patch row order = 2*t + channel,
        # matching conv1_w_mat's column order.
        for t in range(9):
            patches_ref[2 * t:2 * t + 2, :] = shifted[t][2 * b:2 * b + 2, :]
        ys.append(jnp.dot(w1, patches_ref[...],
                          preferred_element_type=f32))            # (64, HW)
    # conv1 bias intentionally omitted: training-mode BN's batch-mean
    # subtraction cancels it exactly.

    # --- BatchNorm2d (batch stats, biased variance) + ReLU, affine folded ----
    s = jnp.sum(ys[0], axis=1, keepdims=True)
    for b in range(1, B):
        s = s + jnp.sum(ys[b], axis=1, keepdims=True)
    mean = s * inv_cnt                                            # (64, 1)
    ds = [y - mean for y in ys]
    q = jnp.sum(ds[0] * ds[0], axis=1, keepdims=True)
    for b in range(1, B):
        q = q + jnp.sum(ds[b] * ds[b], axis=1, keepdims=True)
    var = q * inv_cnt                                             # (64, 1)
    scale = gamma_ref[...] * lax.rsqrt(var + BN_EPS)              # (64, 1)
    beta = beta_ref[...]                                          # (64, 1)

    # --- conv2 (64 -> 1, 3x3, pad 1): contract-then-shift --------------------
    w2 = w2_ref[...]                                              # (9, 64)
    b2 = b2_ref[...]                                              # (1, 1)
    for b in range(B):
        a = jnp.maximum(ds[b] * scale + beta, 0.0)                # (64, HW)
        taps = jnp.dot(w2, a, preferred_element_type=f32)         # (9, HW)
        acc = taps[CENTER:CENTER + 1, :]
        for t in range(9):
            if t != CENTER:
                acc = acc + shift(taps[t:t + 1, :], t)
        o_ref[b:b + 1, :] = acc + b2


# ------------------------------- wrapper --------------------------------------

def _pack_inputs(noise, wemb):
    """Interleaved rows [n_0, e_0, n_1, e_1, ...]: noise/wemb features live in
    disjoint column blocks, plus two indicator columns that pick up the two FC
    biases inside the single packed matmul."""
    B, nd = noise.shape
    _, wd = wemb.shape
    rows_n = jnp.concatenate(
        [noise, jnp.zeros((B, wd), noise.dtype),
         jnp.ones((B, 1), noise.dtype), jnp.zeros((B, 1), noise.dtype)], axis=1)
    rows_e = jnp.concatenate(
        [jnp.zeros((B, nd), wemb.dtype), wemb,
         jnp.zeros((B, 1), wemb.dtype), jnp.ones((B, 1), wemb.dtype)], axis=1)
    return jnp.stack([rows_n, rows_e], axis=1).reshape(2 * B, nd + wd + 2)


def generator_forward(noise, word_embedding, params):
    B = noise.shape[0]
    xin = _pack_inputs(noise, word_embedding)                     # (2B, nd+wd+2)
    w_cat = jnp.concatenate([params['fc_noise_w'], params['fc_word_w'],
                             params['fc_noise_b'], params['fc_word_b']],
                            axis=0)                               # (nd+wd+2, HW)
    masks = _tap_masks()                                          # (9, HW)

    def full(shape):
        return pl.BlockSpec(shape, lambda *_: (0,) * len(shape))

    args = (masks, xin, w_cat,
            params['conv1_w_mat'], params['bn1_gamma'], params['bn1_beta'],
            params['conv2_w_taps'], params['conv2_b'])

    out = pl.pallas_call(
        generator_kernel,
        out_shape=jax.ShapeDtypeStruct((B, HW), jnp.float32),
        grid=(1,),
        in_specs=[full(a.shape) for a in args],
        out_specs=full((B, HW)),
        scratch_shapes=[pltpu.VMEM((18, HW), jnp.float32)],
        compiler_params=pltpu.CompilerParams(
            dimension_semantics=("arbitrary",),
            vmem_limit_bytes=32 * 1024 * 1024),
    )(*args)
    # TODO(synk): for large batch, add a batch grid axis ("parallel") with a
    # two-pass BN (per-channel sum/sumsq accumulated across grid steps) so the
    # working set stays inside v7x's 64 MiB VMEM and both v7x TCs are used.
    # Free metadata reshape back to the module's NCHW output layout.
    return out.reshape(B, 1, H, W)


# ---------------------------- pure-JAX reference ------------------------------

def reference_forward(noise, word_embedding, params):
    B = noise.shape[0]
    hi = lax.Precision.HIGHEST
    n = jnp.dot(noise, params['fc_noise_w'], precision=hi) + params['fc_noise_b']
    e = jnp.dot(word_embedding, params['fc_word_w'], precision=hi) + params['fc_word_b']
    x = jnp.concatenate([n.reshape(B, 1, H, W), e.reshape(B, 1, H, W)], axis=1)
    dn = ('NCHW', 'OIHW', 'NCHW')
    y = lax.conv_general_dilated(x, params['conv1_w_oihw'], (1, 1), 'SAME',
                                 dimension_numbers=dn, precision=hi)
    y = y + params['conv1_b'][0][None, :, None, None]   # kernel drops this; BN cancels it
    mean = y.mean(axis=(0, 2, 3), keepdims=True)
    var = ((y - mean) ** 2).mean(axis=(0, 2, 3), keepdims=True)
    y = (y - mean) * lax.rsqrt(var + BN_EPS)
    y = y * params['bn1_gamma'][:, 0][None, :, None, None] \
          + params['bn1_beta'][:, 0][None, :, None, None]
    y = jnp.maximum(y, 0.0)
    z = lax.conv_general_dilated(y, params['conv2_w_oihw'], (1, 1), 'SAME',
                                 dimension_numbers=dn, precision=hi)
    return z + params['conv2_b'][0][None, :, None, None]


# --------------------------- deterministic params -----------------------------

def init_params(key, noise_dim, word_dim):
    ks = jax.random.split(key, 10)

    def u(k, shape, scale):
        return jax.random.uniform(k, shape, jnp.float32, -1.0, 1.0) * scale

    conv1_w = u(ks[4], (C1, 2, 3, 3), 0.2)    # PyTorch OIHW
    conv2_w = u(ks[6], (1, C1, 3, 3), 0.05)   # PyTorch OIHW
    return dict(
        fc_noise_w=u(ks[0], (noise_dim, HW), 0.1),
        fc_noise_b=u(ks[1], (1, HW), 0.1),
        fc_word_w=u(ks[2], (word_dim, HW), 0.1),
        fc_word_b=u(ks[3], (1, HW), 0.1),
        conv1_w_oihw=conv1_w,
        # (64, 18): column index = (kh*3 + kw)*2 + ci — matches the kernel's
        # patch-row order (per-tap noise/embed channel pair).
        conv1_w_mat=conv1_w.transpose(0, 2, 3, 1).reshape(C1, 18),
        conv1_b=u(ks[5], (1, C1), 0.1),        # used only by the reference
        bn1_gamma=1.0 + u(ks[8], (C1, 1), 0.1),
        bn1_beta=u(ks[9], (C1, 1), 0.1),
        conv2_w_oihw=conv2_w,
        # (9, 64): row t = kh*3 + kw holds conv2_w[0, :, kh, kw]
        conv2_w_taps=conv2_w[0].transpose(1, 2, 0).reshape(9, C1),
        conv2_b=u(ks[7], (1, 1), 0.1),
    )


if __name__ == "__main__":
    key = jax.random.PRNGKey(0)
    noise_dim, word_dim, B = 16, 32, 2
    k_params, k_noise, k_emb = jax.random.split(key, 3)

    params = init_params(k_params, noise_dim, word_dim)
    noise = jax.random.normal(k_noise, (B, noise_dim), jnp.float32)
    word_embedding = jax.random.normal(k_emb, (B, word_dim), jnp.float32)

    out = jax.block_until_ready(generator_forward(noise, word_embedding, params))
    assert out.shape == (B, 1, H, W), out.shape

    ref = jax.block_until_ready(reference_forward(noise, word_embedding, params))
    max_err = float(jnp.max(jnp.abs(out - ref)))
    if max_err < 1e-3:
        print("KERNEL_OK")
    else:
        print(f"MAX_ABS_ERR {max_err}")
</pallas_src>

<mosaic_0001>
module attributes {stable_mosaic.version = 11 : i64} {
  func.func @generator_kernel(%arg0: i32, %arg1: memref<9x840xf32, #tpu.memory_space<vmem>>, %arg2: memref<4x50xf32, #tpu.memory_space<vmem>>, %arg3: memref<50x840xf32, #tpu.memory_space<vmem>>, %arg4: memref<64x18xf32, #tpu.memory_space<vmem>>, %arg5: memref<64x1xf32, #tpu.memory_space<vmem>>, %arg6: memref<64x1xf32, #tpu.memory_space<vmem>>, %arg7: memref<9x64xf32, #tpu.memory_space<vmem>>, %arg8: memref<1x1xf32, #tpu.memory_space<vmem>>, %arg9: memref<2x840xf32, #tpu.memory_space<vmem>>, %arg10: memref<18x840xf32, #tpu.memory_space<vmem>>) attributes {dimension_semantics = [#tpu.dimension_semantics<arbitrary>], iteration_bounds = array<i64: 1>, scalar_prefetch = 0 : i64, scratch_operands = 1 : i64, tpu.core_type = #tpu.core_type<tc>, window_params = [{pipeline_mode = #tpu.pipeline_mode<synchronous>, transform_indices = @transform_0, window_bounds = array<i64: 9, 840>}, {pipeline_mode = #tpu.pipeline_mode<synchronous>, transform_indices = @transform_1, window_bounds = array<i64: 4, 50>}, {pipeline_mode = #tpu.pipeline_mode<synchronous>, transform_indices = @transform_2, window_bounds = array<i64: 50, 840>}, {pipeline_mode = #tpu.pipeline_mode<synchronous>, transform_indices = @transform_3, window_bounds = array<i64: 64, 18>}, {pipeline_mode = #tpu.pipeline_mode<synchronous>, transform_indices = @transform_4, window_bounds = array<i64: 64, 1>}, {pipeline_mode = #tpu.pipeline_mode<synchronous>, transform_indices = @transform_5, window_bounds = array<i64: 64, 1>}, {pipeline_mode = #tpu.pipeline_mode<synchronous>, transform_indices = @transform_6, window_bounds = array<i64: 9, 64>}, {pipeline_mode = #tpu.pipeline_mode<synchronous>, transform_indices = @transform_7, window_bounds = array<i64: 1, 1>}, {pipeline_mode = #tpu.pipeline_mode<synchronous>, transform_indices = @transform_8, window_bounds = array<i64: 2, 840>}]} {
    %c0 = arith.constant 0 : index
    %c0_0 = arith.constant 0 : index
    %0 = vector.load %arg1[%c0, %c0_0] : memref<9x840xf32, #tpu.memory_space<vmem>>, vector<9x840xf32>
    %c0_1 = arith.constant 0 : index
    %c0_2 = arith.constant 0 : index
    %1 = vector.load %arg2[%c0_1, %c0_2] : memref<4x50xf32, #tpu.memory_space<vmem>>, vector<4x50xf32>
    %c0_3 = arith.constant 0 : index
    %c0_4 = arith.constant 0 : index
    %2 = vector.load %arg3[%c0_3, %c0_4] : memref<50x840xf32, #tpu.memory_space<vmem>>, vector<50x840xf32>
    %cst = arith.constant dense<0.000000e+00> : vector<4x840xf32>
    %3 = tpu.matmul %1, %2, %cst {dimension_numbers = #tpu.dot_dimension_numbers<[1], [0], [0], [1], [0, 0, 1, 1], [], []>} : vector<4x50xf32>, vector<50x840xf32>, vector<4x840xf32> -> vector<4x840xf32>
    %c9_i32 = arith.constant 9 : i32
    %4 = tpu.dynamic_rotate %3 by %c9_i32 dim 1 : vector<4x840xf32>, i32 -> vector<4x840xf32>
    %5 = vector.extract_strided_slice %0 {offsets = [0, 0], sizes = [1, 840], strides = [1, 1]} : vector<9x840xf32> to vector<1x840xf32>
    %6 = vector.broadcast %5 : vector<1x840xf32> to vector<4x840xf32>
    %7 = arith.mulf %4, %6 : vector<4x840xf32>
    %c8_i32 = arith.constant 8 : i32
    %8 = tpu.dynamic_rotate %3 by %c8_i32 dim 1 : vector<4x840xf32>, i32 -> vector<4x840xf32>
    %9 = vector.extract_strided_slice %0 {offsets = [1, 0], sizes = [1, 840], strides = [1, 1]} : vector<9x840xf32> to vector<1x840xf32>
    %10 = vector.broadcast %9 : vector<1x840xf32> to vector<4x840xf32>
    %11 = arith.mulf %8, %10 : vector<4x840xf32>
    %c7_i32 = arith.constant 7 : i32
    %12 = tpu.dynamic_rotate %3 by %c7_i32 dim 1 : vector<4x840xf32>, i32 -> vector<4x840xf32>
    %13 = vector.extract_strided_slice %0 {offsets = [2, 0], sizes = [1, 840], strides = [1, 1]} : vector<9x840xf32> to vector<1x840xf32>
    %14 = vector.broadcast %13 : vector<1x840xf32> to vector<4x840xf32>
    %15 = arith.mulf %12, %14 : vector<4x840xf32>
    %c1_i32 = arith.constant 1 : i32
    %16 = tpu.dynamic_rotate %3 by %c1_i32 dim 1 : vector<4x840xf32>, i32 -> vector<4x840xf32>
    %17 = vector.extract_strided_slice %0 {offsets = [3, 0], sizes = [1, 840], strides = [1, 1]} : vector<9x840xf32> to vector<1x840xf32>
    %18 = vector.broadcast %17 : vector<1x840xf32> to vector<4x840xf32>
    %19 = arith.mulf %16, %18 : vector<4x840xf32>
    %c839_i32 = arith.constant 839 : i32
    %20 = tpu.dynamic_rotate %3 by %c839_i32 dim 1 : vector<4x840xf32>, i32 -> vector<4x840xf32>
    %21 = vector.extract_strided_slice %0 {offsets = [5, 0], sizes = [1, 840], strides = [1, 1]} : vector<9x840xf32> to vector<1x840xf32>
    %22 = vector.broadcast %21 : vector<1x840xf32> to vector<4x840xf32>
    %23 = arith.mulf %20, %22 : vector<4x840xf32>
    %c833_i32 = arith.constant 833 : i32
    %24 = tpu.dynamic_rotate %3 by %c833_i32 dim 1 : vector<4x840xf32>, i32 -> vector<4x840xf32>
    %25 = vector.extract_strided_slice %0 {offsets = [6, 0], sizes = [1, 840], strides = [1, 1]} : vector<9x840xf32> to vector<1x840xf32>
    %26 = vector.broadcast %25 : vector<1x840xf32> to vector<4x840xf32>
    %27 = arith.mulf %24, %26 : vector<4x840xf32>
    %c832_i32 = arith.constant 832 : i32
    %28 = tpu.dynamic_rotate %3 by %c832_i32 dim 1 : vector<4x840xf32>, i32 -> vector<4x840xf32>
    %29 = vector.extract_strided_slice %0 {offsets = [7, 0], sizes = [1, 840], strides = [1, 1]} : vector<9x840xf32> to vector<1x840xf32>
    %30 = vector.broadcast %29 : vector<1x840xf32> to vector<4x840xf32>
    %31 = arith.mulf %28, %30 : vector<4x840xf32>
    %c831_i32 = arith.constant 831 : i32
    %32 = tpu.dynamic_rotate %3 by %c831_i32 dim 1 : vector<4x840xf32>, i32 -> vector<4x840xf32>
    %33 = vector.extract_strided_slice %0 {offsets = [8, 0], sizes = [1, 840], strides = [1, 1]} : vector<9x840xf32> to vector<1x840xf32>
    %34 = vector.broadcast %33 : vector<1x840xf32> to vector<4x840xf32>
    %35 = arith.mulf %32, %34 : vector<4x840xf32>
    %c0_5 = arith.constant 0 : index
    %c0_6 = arith.constant 0 : index
    %36 = vector.load %arg4[%c0_5, %c0_6] : memref<64x18xf32, #tpu.memory_space<vmem>>, vector<64x18xf32>
    %37 = vector.extract_strided_slice %7 {offsets = [0, 0], sizes = [2, 840], strides = [1, 1]} : vector<4x840xf32> to vector<2x840xf32>
    %c0_7 = arith.constant 0 : index
    %c0_8 = arith.constant 0 : index
    %38 = vector.load %arg10[%c0_7, %c0_8] : memref<18x840xf32, #tpu.memory_space<vmem>>, vector<2x840xf32>
    tpu.vector_store %arg10[%c0_7, %c0_8], %37 {strides = array<i32>} : memref<18x840xf32, #tpu.memory_space<vmem>>, vector<2x840xf32>,
    %39 = vector.extract_strided_slice %11 {offsets = [0, 0], sizes = [2, 840], strides = [1, 1]} : vector<4x840xf32> to vector<2x840xf32>
    %c2 = arith.constant 2 : index
    %c0_9 = arith.constant 0 : index
    %40 = vector.load %arg10[%c2, %c0_9] : memref<18x840xf32, #tpu.memory_space<vmem>>, vector<2x840xf32>
    tpu.vector_store %arg10[%c2, %c0_9], %39 {strides = array<i32>} : memref<18x840xf32, #tpu.memory_space<vmem>>, vector<2x840xf32>,
    %41 = vector.extract_strided_slice %15 {offsets = [0, 0], sizes = [2, 840], strides = [1, 1]} : vector<4x840xf32> to vector<2x840xf32>
    %c4 = arith.constant 4 : index
    %c0_10 = arith.constant 0 : index
    %42 = vector.load %arg10[%c4, %c0_10] : memref<18x840xf32, #tpu.memory_space<vmem>>, vector<2x840xf32>
    tpu.vector_store %arg10[%c4, %c0_10], %41 {strides = array<i32>} : memref<18x840xf32, #tpu.memory_space<vmem>>, vector<2x840xf32>,
    %43 = vector.extract_strided_slice %19 {offsets = [0, 0], sizes = [2, 840], strides = [1, 1]} : vector<4x840xf32> to vector<2x840xf32>
    %c6 = arith.constant 6 : index
    %c0_11 = arith.constant 0 : index
    %44 = vector.load %arg10[%c6, %c0_11] : memref<18x840xf32, #tpu.memory_space<vmem>>, vector<2x840xf32>
    tpu.vector_store %arg10[%c6, %c0_11], %43 {strides = array<i32>} : memref<18x840xf32, #tpu.memory_space<vmem>>, vector<2x840xf32>,
    %45 = vector.extract_strided_slice %3 {offsets = [0, 0], sizes = [2, 840], strides = [1, 1]} : vector<4x840xf32> to vector<2x840xf32>
    %c8 = arith.constant 8 : index
    %c0_12 = arith.constant 0 : index
    %46 = vector.load %arg10[%c8, %c0_12] : memref<18x840xf32, #tpu.memory_space<vmem>>, vector<2x840xf32>
    tpu.vector_store %arg10[%c8, %c0_12], %45 {strides = array<i32>} : memref<18x840xf32, #tpu.memory_space<vmem>>, vector<2x840xf32>,
    %47 = vector.extract_strided_slice %23 {offsets = [0, 0], sizes = [2, 840], strides = [1, 1]} : vector<4x840xf32> to vector<2x840xf32>
    %c10 = arith.constant 10 : index
    %c0_13 = arith.constant 0 : index
    %48 = vector.load %arg10[%c10, %c0_13] : memref<18x840xf32, #tpu.memory_space<vmem>>, vector<2x840xf32>
    tpu.vector_store %arg10[%c10, %c0_13], %47 {strides = array<i32>} : memref<18x840xf32, #tpu.memory_space<vmem>>, vector<2x840xf32>,
    %49 = vector.extract_strided_slice %27 {offsets = [0, 0], sizes = [2, 840], strides = [1, 1]} : vector<4x840xf32> to vector<2x840xf32>
    %c12 = arith.constant 12 : index
    %c0_14 = arith.constant 0 : index
    %50 = vector.load %arg10[%c12, %c0_14] : memref<18x840xf32, #tpu.memory_space<vmem>>, vector<2x840xf32>
    tpu.vector_store %arg10[%c12, %c0_14], %49 {strides = array<i32>} : memref<18x840xf32, #tpu.memory_space<vmem>>, vector<2x840xf32>,
    %51 = vector.extract_strided_slice %31 {offsets = [0, 0], sizes = [2, 840], strides = [1, 1]} : vector<4x840xf32> to vector<2x840xf32>
    %c14 = arith.constant 14 : index
    %c0_15 = arith.constant 0 : index
    %52 = vector.load %arg10[%c14, %c0_15] : memref<18x840xf32, #tpu.memory_space<vmem>>, vector<2x840xf32>
    tpu.vector_store %arg10[%c14, %c0_15], %51 {strides = array<i32>} : memref<18x840xf32, #tpu.memory_space<vmem>>, vector<2x840xf32>,
    %53 = vector.extract_strided_slice %35 {offsets = [0, 0], sizes = [2, 840], strides = [1, 1]} : vector<4x840xf32> to vector<2x840xf32>
    %c16 = arith.constant 16 : index
    %c0_16 = arith.constant 0 : index
    %54 = vector.load %arg10[%c16, %c0_16] : memref<18x840xf32, #tpu.memory_space<vmem>>, vector<2x840xf32>
    tpu.vector_store %arg10[%c16, %c0_16], %53 {strides = array<i32>} : memref<18x840xf32, #tpu.memory_space<vmem>>, vector<2x840xf32>,
    %c0_17 = arith.constant 0 : index
    %c0_18 = arith.constant 0 : index
    %55 = vector.load %arg10[%c0_17, %c0_18] : memref<18x840xf32, #tpu.memory_space<vmem>>, vector<18x840xf32>
    %cst_19 = arith.constant dense<0.000000e+00> : vector<64x840xf32>
    %56 = tpu.matmul %36, %55, %cst_19 {dimension_numbers = #tpu.dot_dimension_numbers<[1], [0], [0], [1], [0, 0, 1, 1], [], []>} : vector<64x18xf32>, vector<18x840xf32>, vector<64x840xf32> -> vector<64x840xf32>
    %57 = vector.extract_strided_slice %7 {offsets = [2, 0], sizes = [2, 840], strides = [1, 1]} : vector<4x840xf32> to vector<2x840xf32>
    %c0_20 = arith.constant 0 : index
    %c0_21 = arith.constant 0 : index
    %58 = vector.load %arg10[%c0_20, %c0_21] : memref<18x840xf32, #tpu.memory_space<vmem>>, vector<2x840xf32>
    tpu.vector_store %arg10[%c0_20, %c0_21], %57 {strides = array<i32>} : memref<18x840xf32, #tpu.memory_space<vmem>>, vector<2x840xf32>,
    %59 = vector.extract_strided_slice %11 {offsets = [2, 0], sizes = [2, 840], strides = [1, 1]} : vector<4x840xf32> to vector<2x840xf32>
    %c2_22 = arith.constant 2 : index
    %c0_23 = arith.constant 0 : index
    %60 = vector.load %arg10[%c2_22, %c0_23] : memref<18x840xf32, #tpu.memory_space<vmem>>, vector<2x840xf32>
    tpu.vector_store %arg10[%c2_22, %c0_23], %59 {strides = array<i32>} : memref<18x840xf32, #tpu.memory_space<vmem>>, vector<2x840xf32>,
    %61 = vector.extract_strided_slice %15 {offsets = [2, 0], sizes = [2, 840], strides = [1, 1]} : vector<4x840xf32> to vector<2x840xf32>
    %c4_24 = arith.constant 4 : index
    %c0_25 = arith.constant 0 : index
    %62 = vector.load %arg10[%c4_24, %c0_25] : memref<18x840xf32, #tpu.memory_space<vmem>>, vector<2x840xf32>
    tpu.vector_store %arg10[%c4_24, %c0_25], %61 {strides = array<i32>} : memref<18x840xf32, #tpu.memory_space<vmem>>, vector<2x840xf32>,
    %63 = vector.extract_strided_slice %19 {offsets = [2, 0], sizes = [2, 840], strides = [1, 1]} : vector<4x840xf32> to vector<2x840xf32>
    %c6_26 = arith.constant 6 : index
    %c0_27 = arith.constant 0 : index
    %64 = vector.load %arg10[%c6_26, %c0_27] : memref<18x840xf32, #tpu.memory_space<vmem>>, vector<2x840xf32>
    tpu.vector_store %arg10[%c6_26, %c0_27], %63 {strides = array<i32>} : memref<18x840xf32, #tpu.memory_space<vmem>>, vector<2x840xf32>,
    %65 = vector.extract_strided_slice %3 {offsets = [2, 0], sizes = [2, 840], strides = [1, 1]} : vector<4x840xf32> to vector<2x840xf32>
    %c8_28 = arith.constant 8 : index
    %c0_29 = arith.constant 0 : index
    %66 = vector.load %arg10[%c8_28, %c0_29] : memref<18x840xf32, #tpu.memory_space<vmem>>, vector<2x840xf32>
    tpu.vector_store %arg10[%c8_28, %c0_29], %65 {strides = array<i32>} : memref<18x840xf32, #tpu.memory_space<vmem>>, vector<2x840xf32>,
    %67 = vector.extract_strided_slice %23 {offsets = [2, 0], sizes = [2, 840], strides = [1, 1]} : vector<4x840xf32> to vector<2x840xf32>
    %c10_30 = arith.constant 10 : index
    %c0_31 = arith.constant 0 : index
    %68 = vector.load %arg10[%c10_30, %c0_31] : memref<18x840xf32, #tpu.memory_space<vmem>>, vector<2x840xf32>
    tpu.vector_store %arg10[%c10_30, %c0_31], %67 {strides = array<i32>} : memref<18x840xf32, #tpu.memory_space<vmem>>, vector<2x840xf32>,
    %69 = vector.extract_strided_slice %27 {offsets = [2, 0], sizes = [2, 840], strides = [1, 1]} : vector<4x840xf32> to vector<2x840xf32>
    %c12_32 = arith.constant 12 : index
    %c0_33 = arith.constant 0 : index
    %70 = vector.load %arg10[%c12_32, %c0_33] : memref<18x840xf32, #tpu.memory_space<vmem>>, vector<2x840xf32>
    tpu.vector_store %arg10[%c12_32, %c0_33], %69 {strides = array<i32>} : memref<18x840xf32, #tpu.memory_space<vmem>>, vector<2x840xf32>,
    %71 = vector.extract_strided_slice %31 {offsets = [2, 0], sizes = [2, 840], strides = [1, 1]} : vector<4x840xf32> to vector<2x840xf32>
    %c14_34 = arith.constant 14 : index
    %c0_35 = arith.constant 0 : index
    %72 = vector.load %arg10[%c14_34, %c0_35] : memref<18x840xf32, #tpu.memory_space<vmem>>, vector<2x840xf32>
    tpu.vector_store %arg10[%c14_34, %c0_35], %71 {strides = array<i32>} : memref<18x840xf32, #tpu.memory_space<vmem>>, vector<2x840xf32>,
    %73 = vector.extract_strided_slice %35 {offsets = [2, 0], sizes = [2, 840], strides = [1, 1]} : vector<4x840xf32> to vector<2x840xf32>
    %c16_36 = arith.constant 16 : index
    %c0_37 = arith.constant 0 : index
    %74 = vector.load %arg10[%c16_36, %c0_37] : memref<18x840xf32, #tpu.memory_space<vmem>>, vector<2x840xf32>
    tpu.vector_store %arg10[%c16_36, %c0_37], %73 {strides = array<i32>} : memref<18x840xf32, #tpu.memory_space<vmem>>, vector<2x840xf32>,
    %c0_38 = arith.constant 0 : index
    %c0_39 = arith.constant 0 : index
    %75 = vector.load %arg10[%c0_38, %c0_39] : memref<18x840xf32, #tpu.memory_space<vmem>>, vector<18x840xf32>
    %cst_40 = arith.constant dense<0.000000e+00> : vector<64x840xf32>
    %76 = tpu.matmul %36, %75, %cst_40 {dimension_numbers = #tpu.dot_dimension_numbers<[1], [0], [0], [1], [0, 0, 1, 1], [], []>} : vector<64x18xf32>, vector<18x840xf32>, vector<64x840xf32> -> vector<64x840xf32>
    %cst_41 = arith.constant dense<0.000000e+00> : vector<64xf32>
    %77 = vector.multi_reduction <add>, %56, %cst_41 [1] : vector<64x840xf32> to vector<64xf32>
    %78 = vector.shape_cast %77 : vector<64xf32> to vector<64x1xf32>
    %cst_42 = arith.constant dense<0.000000e+00> : vector<64xf32>
    %79 = vector.multi_reduction <add>, %76, %cst_42 [1] : vector<64x840xf32> to vector<64xf32>
    %80 = vector.shape_cast %79 : vector<64xf32> to vector<64x1xf32>
    %81 = arith.addf %78, %80 : vector<64x1xf32>
    %cst_43 = arith.constant 5.95238118E-4 : f32
    %82 = vector.broadcast %cst_43 : f32 to vector<64x1xf32>
    %83 = arith.mulf %81, %82 : vector<64x1xf32>
    %84 = vector.broadcast %83 : vector<64x1xf32> to vector<64x840xf32>
    %85 = arith.subf %56, %84 : vector<64x840xf32>
    %86 = vector.broadcast %83 : vector<64x1xf32> to vector<64x840xf32>
    %87 = arith.subf %76, %86 : vector<64x840xf32>
    %88 = arith.mulf %85, %85 : vector<64x840xf32>
    %cst_44 = arith.constant dense<0.000000e+00> : vector<64xf32>
    %89 = vector.multi_reduction <add>, %88, %cst_44 [1] : vector<64x840xf32> to vector<64xf32>
    %90 = vector.shape_cast %89 : vector<64xf32> to vector<64x1xf32>
    %91 = arith.mulf %87, %87 : vector<64x840xf32>
    %cst_45 = arith.constant dense<0.000000e+00> : vector<64xf32>
    %92 = vector.multi_reduction <add>, %91, %cst_45 [1] : vector<64x840xf32> to vector<64xf32>
    %93 = vector.shape_cast %92 : vector<64xf32> to vector<64x1xf32>
    %94 = arith.addf %90, %93 : vector<64x1xf32>
    %cst_46 = arith.constant 5.95238118E-4 : f32
    %95 = vector.broadcast %cst_46 : f32 to vector<64x1xf32>
    %96 = arith.mulf %94, %95 : vector<64x1xf32>
    %c0_47 = arith.constant 0 : index
    %c0_48 = arith.constant 0 : index
    %97 = vector.load %arg5[%c0_47, %c0_48] : memref<64x1xf32, #tpu.memory_space<vmem>>, vector<64x1xf32>
    %cst_49 = arith.constant 9.99999974E-6 : f32
    %98 = vector.broadcast %cst_49 : f32 to vector<64x1xf32>
    %99 = arith.addf %96, %98 : vector<64x1xf32>
    %100 = math.rsqrt %99 : vector<64x1xf32>
    %101 = arith.mulf %97, %100 : vector<64x1xf32>
    %c0_50 = arith.constant 0 : index
    %c0_51 = arith.constant 0 : index
    %102 = vector.load %arg6[%c0_50, %c0_51] : memref<64x1xf32, #tpu.memory_space<vmem>>, vector<64x1xf32>
    %c0_52 = arith.constant 0 : index
    %c0_53 = arith.constant 0 : index
    %103 = vector.load %arg7[%c0_52, %c0_53] : memref<9x64xf32, #tpu.memory_space<vmem>>, vector<9x64xf32>
    %c0_54 = arith.constant 0 : index
    %c0_55 = arith.constant 0 : index
    %104 = vector.load %arg8[%c0_54, %c0_55] : memref<1x1xf32, #tpu.memory_space<vmem>>, vector<1x1xf32>
    %105 = vector.broadcast %101 : vector<64x1xf32> to vector<64x840xf32>
    %106 = arith.mulf %85, %105 : vector<64x840xf32>
    %107 = vector.broadcast %102 : vector<64x1xf32> to vector<64x840xf32>
    %108 = arith.addf %106, %107 : vector<64x840xf32>
    %cst_56 = arith.constant 0.000000e+00 : f32
    %109 = vector.broadcast %cst_56 : f32 to vector<64x840xf32>
    %110 = arith.maximumf %108, %109 : vector<64x840xf32>
    %cst_57 = arith.constant dense<0.000000e+00> : vector<9x840xf32>
    %111 = tpu.matmul %103, %110, %cst_57 {dimension_numbers = #tpu.dot_dimension_numbers<[1], [0], [0], [1], [0, 0, 1, 1], [], []>} : vector<9x64xf32>, vector<64x840xf32>, vector<9x840xf32> -> vector<9x840xf32>
    %112 = vector.extract_strided_slice %111 {offsets = [4, 0], sizes = [1, 840], strides = [1, 1]} : vector<9x840xf32> to vector<1x840xf32>
    %113 = vector.extract_strided_slice %111 {offsets = [0, 0], sizes = [1, 840], strides = [1, 1]} : vector<9x840xf32> to vector<1x840xf32>
    %c9_i32_58 = arith.constant 9 : i32
    %114 = tpu.dynamic_rotate %113 by %c9_i32_58 dim 1 : vector<1x840xf32>, i32 -> vector<1x840xf32>
    %115 = vector.extract_strided_slice %0 {offsets = [0, 0], sizes = [1, 840], strides = [1, 1]} : vector<9x840xf32> to vector<1x840xf32>
    %116 = arith.mulf %114, %115 : vector<1x840xf32>
    %117 = arith.addf %112, %116 : vector<1x840xf32>
    %118 = vector.extract_strided_slice %111 {offsets = [1, 0], sizes = [1, 840], strides = [1, 1]} : vector<9x840xf32> to vector<1x840xf32>
    %c8_i32_59 = arith.constant 8 : i32
    %119 = tpu.dynamic_rotate %118 by %c8_i32_59 dim 1 : vector<1x840xf32>, i32 -> vector<1x840xf32>
    %120 = vector.extract_strided_slice %0 {offsets = [1, 0], sizes = [1, 840], strides = [1, 1]} : vector<9x840xf32> to vector<1x840xf32>
    %121 = arith.mulf %119, %120 : vector<1x840xf32>
    %122 = arith.addf %117, %121 : vector<1x840xf32>
    %123 = vector.extract_strided_slice %111 {offsets = [2, 0], sizes = [1, 840], strides = [1, 1]} : vector<9x840xf32> to vector<1x840xf32>
    %c7_i32_60 = arith.constant 7 : i32
    %124 = tpu.dynamic_rotate %123 by %c7_i32_60 dim 1 : vector<1x840xf32>, i32 -> vector<1x840xf32>
    %125 = vector.extract_strided_slice %0 {offsets = [2, 0], sizes = [1, 840], strides = [1, 1]} : vector<9x840xf32> to vector<1x840xf32>
    %126 = arith.mulf %124, %125 : vector<1x840xf32>
    %127 = arith.addf %122, %126 : vector<1x840xf32>
    %128 = vector.extract_strided_slice %111 {offsets = [3, 0], sizes = [1, 840], strides = [1, 1]} : vector<9x840xf32> to vector<1x840xf32>
    %c1_i32_61 = arith.constant 1 : i32
    %129 = tpu.dynamic_rotate %128 by %c1_i32_61 dim 1 : vector<1x840xf32>, i32 -> vector<1x840xf32>
    %130 = vector.extract_strided_slice %0 {offsets = [3, 0], sizes = [1, 840], strides = [1, 1]} : vector<9x840xf32> to vector<1x840xf32>
    %131 = arith.mulf %129, %130 : vector<1x840xf32>
    %132 = arith.addf %127, %131 : vector<1x840xf32>
    %133 = vector.extract_strided_slice %111 {offsets = [5, 0], sizes = [1, 840], strides = [1, 1]} : vector<9x840xf32> to vector<1x840xf32>
    %c839_i32_62 = arith.constant 839 : i32
    %134 = tpu.dynamic_rotate %133 by %c839_i32_62 dim 1 : vector<1x840xf32>, i32 -> vector<1x840xf32>
    %135 = vector.extract_strided_slice %0 {offsets = [5, 0], sizes = [1, 840], strides = [1, 1]} : vector<9x840xf32> to vector<1x840xf32>
    %136 = arith.mulf %134, %135 : vector<1x840xf32>
    %137 = arith.addf %132, %136 : vector<1x840xf32>
    %138 = vector.extract_strided_slice %111 {offsets = [6, 0], sizes = [1, 840], strides = [1, 1]} : vector<9x840xf32> to vector<1x840xf32>
    %c833_i32_63 = arith.constant 833 : i32
    %139 = tpu.dynamic_rotate %138 by %c833_i32_63 dim 1 : vector<1x840xf32>, i32 -> vector<1x840xf32>
    %140 = vector.extract_strided_slice %0 {offsets = [6, 0], sizes = [1, 840], strides = [1, 1]} : vector<9x840xf32> to vector<1x840xf32>
    %141 = arith.mulf %139, %140 : vector<1x840xf32>
    %142 = arith.addf %137, %141 : vector<1x840xf32>
    %143 = vector.extract_strided_slice %111 {offsets = [7, 0], sizes = [1, 840], strides = [1, 1]} : vector<9x840xf32> to vector<1x840xf32>
    %c832_i32_64 = arith.constant 832 : i32
    %144 = tpu.dynamic_rotate %143 by %c832_i32_64 dim 1 : vector<1x840xf32>, i32 -> vector<1x840xf32>
    %145 = vector.extract_strided_slice %0 {offsets = [7, 0], sizes = [1, 840], strides = [1, 1]} : vector<9x840xf32> to vector<1x840xf32>
    %146 = arith.mulf %144, %145 : vector<1x840xf32>
    %147 = arith.addf %142, %146 : vector<1x840xf32>
    %148 = vector.extract_strided_slice %111 {offsets = [8, 0], sizes = [1, 840], strides = [1, 1]} : vector<9x840xf32> to vector<1x840xf32>
    %c831_i32_65 = arith.constant 831 : i32
    %149 = tpu.dynamic_rotate %148 by %c831_i32_65 dim 1 : vector<1x840xf32>, i32 -> vector<1x840xf32>
    %150 = vector.extract_strided_slice %0 {offsets = [8, 0], sizes = [1, 840], strides = [1, 1]} : vector<9x840xf32> to vector<1x840xf32>
    %151 = arith.mulf %149, %150 : vector<1x840xf32>
    %152 = arith.addf %147, %151 : vector<1x840xf32>
    %153 = vector.broadcast %104 : vector<1x1xf32> to vector<1x840xf32>
    %154 = arith.addf %152, %153 : vector<1x840xf32>
    %c0_66 = arith.constant 0 : index
    %c0_67 = arith.constant 0 : index
    %155 = vector.load %arg9[%c0_66, %c0_67] : memref<2x840xf32, #tpu.memory_space<vmem>>, vector<1x840xf32>
    tpu.vector_store %arg9[%c0_66, %c0_67], %154 {strides = array<i32>} : memref<2x840xf32, #tpu.memory_space<vmem>>, vector<1x840xf32>,
    %156 = vector.broadcast %101 : vector<64x1xf32> to vector<64x840xf32>
    %157 = arith.mulf %87, %156 : vector<64x840xf32>
    %158 = vector.broadcast %102 : vector<64x1xf32> to vector<64x840xf32>
    %159 = arith.addf %157, %158 : vector<64x840xf32>
    %cst_68 = arith.constant 0.000000e+00 : f32
    %160 = vector.broadcast %cst_68 : f32 to vector<64x840xf32>
    %161 = arith.maximumf %159, %160 : vector<64x840xf32>
    %cst_69 = arith.constant dense<0.000000e+00> : vector<9x840xf32>
    %162 = tpu.matmul %103, %161, %cst_69 {dimension_numbers = #tpu.dot_dimension_numbers<[1], [0], [0], [1], [0, 0, 1, 1], [], []>} : vector<9x64xf32>, vector<64x840xf32>, vector<9x840xf32> -> vector<9x840xf32>
    %163 = vector.extract_strided_slice %162 {offsets = [4, 0], sizes = [1, 840], strides = [1, 1]} : vector<9x840xf32> to vector<1x840xf32>
    %164 = vector.extract_strided_slice %162 {offsets = [0, 0], sizes = [1, 840], strides = [1, 1]} : vector<9x840xf32> to vector<1x840xf32>
    %c9_i32_70 = arith.constant 9 : i32
    %165 = tpu.dynamic_rotate %164 by %c9_i32_70 dim 1 : vector<1x840xf32>, i32 -> vector<1x840xf32>
    %166 = vector.extract_strided_slice %0 {offsets = [0, 0], sizes = [1, 840], strides = [1, 1]} : vector<9x840xf32> to vector<1x840xf32>
    %167 = arith.mulf %165, %166 : vector<1x840xf32>
    %168 = arith.addf %163, %167 : vector<1x840xf32>
    %169 = vector.extract_strided_slice %162 {offsets = [1, 0], sizes = [1, 840], strides = [1, 1]} : vector<9x840xf32> to vector<1x840xf32>
    %c8_i32_71 = arith.constant 8 : i32
    %170 = tpu.dynamic_rotate %169 by %c8_i32_71 dim 1 : vector<1x840xf32>, i32 -> vector<1x840xf32>
    %171 = vector.extract_strided_slice %0 {offsets = [1, 0], sizes = [1, 840], strides = [1, 1]} : vector<9x840xf32> to vector<1x840xf32>
    %172 = arith.mulf %170, %171 : vector<1x840xf32>
    %173 = arith.addf %168, %172 : vector<1x840xf32>
    %174 = vector.extract_strided_slice %162 {offsets = [2, 0], sizes = [1, 840], strides = [1, 1]} : vector<9x840xf32> to vector<1x840xf32>
    %c7_i32_72 = arith.constant 7 : i32
    %175 = tpu.dynamic_rotate %174 by %c7_i32_72 dim 1 : vector<1x840xf32>, i32 -> vector<1x840xf32>
    %176 = vector.extract_strided_slice %0 {offsets = [2, 0], sizes = [1, 840], strides = [1, 1]} : vector<9x840xf32> to vector<1x840xf32>
    %177 = arith.mulf %175, %176 : vector<1x840xf32>
    %178 = arith.addf %173, %177 : vector<1x840xf32>
    %179 = vector.extract_strided_slice %162 {offsets = [3, 0], sizes = [1, 840], strides = [1, 1]} : vector<9x840xf32> to vector<1x840xf32>
    %c1_i32_73 = arith.constant 1 : i32
    %180 = tpu.dynamic_rotate %179 by %c1_i32_73 dim 1 : vector<1x840xf32>, i32 -> vector<1x840xf32>
    %181 = vector.extract_strided_slice %0 {offsets = [3, 0], sizes = [1, 840], strides = [1, 1]} : vector<9x840xf32> to vector<1x840xf32>
    %182 = arith.mulf %180, %181 : vector<1x840xf32>
    %183 = arith.addf %178, %182 : vector<1x840xf32>
    %184 = vector.extract_strided_slice %162 {offsets = [5, 0], sizes = [1, 840], strides = [1, 1]} : vector<9x840xf32> to vector<1x840xf32>
    %c839_i32_74 = arith.constant 839 : i32
    %185 = tpu.dynamic_rotate %184 by %c839_i32_74 dim 1 : vector<1x840xf32>, i32 -> vector<1x840xf32>
    %186 = vector.extract_strided_slice %0 {offsets = [5, 0], sizes = [1, 840], strides = [1, 1]} : vector<9x840xf32> to vector<1x840xf32>
    %187 = arith.mulf %185, %186 : vector<1x840xf32>
    %188 = arith.addf %183, %187 : vector<1x840xf32>
    %189 = vector.extract_strided_slice %162 {offsets = [6, 0], sizes = [1, 840], strides = [1, 1]} : vector<9x840xf32> to vector<1x840xf32>
    %c833_i32_75 = arith.constant 833 : i32
    %190 = tpu.dynamic_rotate %189 by %c833_i32_75 dim 1 : vector<1x840xf32>, i32 -> vector<1x840xf32>
    %191 = vector.extract_strided_slice %0 {offsets = [6, 0], sizes = [1, 840], strides = [1, 1]} : vector<9x840xf32> to vector<1x840xf32>
    %192 = arith.mulf %190, %191 : vector<1x840xf32>
    %193 = arith.addf %188, %192 : vector<1x840xf32>
    %194 = vector.extract_strided_slice %162 {offsets = [7, 0], sizes = [1, 840], strides = [1, 1]} : vector<9x840xf32> to vector<1x840xf32>
    %c832_i32_76 = arith.constant 832 : i32
    %195 = tpu.dynamic_rotate %194 by %c832_i32_76 dim 1 : vector<1x840xf32>, i32 -> vector<1x840xf32>
    %196 = vector.extract_strided_slice %0 {offsets = [7, 0], sizes = [1, 840], strides = [1, 1]} : vector<9x840xf32> to vector<1x840xf32>
    %197 = arith.mulf %195, %196 : vector<1x840xf32>
    %198 = arith.addf %193, %197 : vector<1x840xf32>
    %199 = vector.extract_strided_slice %162 {offsets = [8, 0], sizes = [1, 840], strides = [1, 1]} : vector<9x840xf32> to vector<1x840xf32>
    %c831_i32_77 = arith.constant 831 : i32
    %200 = tpu.dynamic_rotate %199 by %c831_i32_77 dim 1 : vector<1x840xf32>, i32 -> vector<1x840xf32>
    %201 = vector.extract_strided_slice %0 {offsets = [8, 0], sizes = [1, 840], strides = [1, 1]} : vector<9x840xf32> to vector<1x840xf32>
    %202 = arith.mulf %200, %201 : vector<1x840xf32>
    %203 = arith.addf %198, %202 : vector<1x840xf32>
    %204 = vector.broadcast %104 : vector<1x1xf32> to vector<1x840xf32>
    %205 = arith.addf %203, %204 : vector<1x840xf32>
    %c1 = arith.constant 1 : index
    %c0_78 = arith.constant 0 : index
    %206 = vector.load %arg9[%c1, %c0_78] : memref<2x840xf32, #tpu.memory_space<vmem>>, vector<1x840xf32>
    tpu.vector_store %arg9[%c1, %c0_78], %205 {strides = array<i32>} : memref<2x840xf32, #tpu.memory_space<vmem>>, vector<1x840xf32>,
    return
  }
  func.func @transform_0(%arg0: i32) -> (i32, i32) {
    %c0_i32 = arith.constant 0 : i32
    %c0_i32_0 = arith.constant 0 : i32
    %c0_i32_1 = arith.constant 0 : i32
    return %c0_i32, %c0_i32_0 : i32, i32
  }
  func.func @transform_1(%arg0: i32) -> (i32, i32) {
    %c0_i32 = arith.constant 0 : i32
    %c0_i32_0 = arith.constant 0 : i32
    %c0_i32_1 = arith.constant 0 : i32
    return %c0_i32, %c0_i32_0 : i32, i32
  }
  func.func @transform_2(%arg0: i32) -> (i32, i32) {
    %c0_i32 = arith.constant 0 : i32
    %c0_i32_0 = arith.constant 0 : i32
    %c0_i32_1 = arith.constant 0 : i32
    return %c0_i32, %c0_i32_0 : i32, i32
  }
  func.func @transform_3(%arg0: i32) -> (i32, i32) {
    %c0_i32 = arith.constant 0 : i32
    %c0_i32_0 = arith.constant 0 : i32
    %c0_i32_1 = arith.constant 0 : i32
    return %c0_i32, %c0_i32_0 : i32, i32
  }
  func.func @transform_4(%arg0: i32) -> (i32, i32) {
    %c0_i32 = arith.constant 0 : i32
    %c0_i32_0 = arith.constant 0 : i32
    %c0_i32_1 = arith.constant 0 : i32
    return %c0_i32, %c0_i32_0 : i32, i32
  }
  func.func @transform_5(%arg0: i32) -> (i32, i32) {
    %c0_i32 = arith.constant 0 : i32
    %c0_i32_0 = arith.constant 0 : i32
    %c0_i32_1 = arith.constant 0 : i32
    return %c0_i32, %c0_i32_0 : i32, i32
  }
  func.func @transform_6(%arg0: i32) -> (i32, i32) {
    %c0_i32 = arith.constant 0 : i32
    %c0_i32_0 = arith.constant 0 : i32
    %c0_i32_1 = arith.constant 0 : i32
    return %c0_i32, %c0_i32_0 : i32, i32
  }
  func.func @transform_7(%arg0: i32) -> (i32, i32) {
    %c0_i32 = arith.constant 0 : i32
    %c0_i32_0 = arith.constant 0 : i32
    %c0_i32_1 = arith.constant 0 : i32
    return %c0_i32, %c0_i32_0 : i32, i32
  }
  func.func @transform_8(%arg0: i32) -> (i32, i32) {
    %c0_i32 = arith.constant 0 : i32
    %c0_i32_0 = arith.constant 0 : i32
    %c0_i32_1 = arith.constant 0 : i32
    return %c0_i32, %c0_i32_0 : i32, i32
  }
}

</mosaic_0001>

<llo_original>
// kernel: tpu_custom_call.1
$region0: #{tpu_custom_call.1}
  #allocation0 [shape = 'u32[]', space=smem, size = 0x4, offset = 0x4, fixed_abs, tag = 'smem constant byte address 0x4 - core index']
  #allocation1 [shape = 'u32[144,128]{1,0:T(1,128)}', space=vmem, size = 0x12000, scoped, tag = 'internal scratch']
  #allocation2 [shape = 'f32[18,840]{1,0:T(8,128)}', space=vmem, size = 0x15000, scoped, tag = 'scratch operand']
  #allocation3 [shape = 'f32[1,1]{1,0:T(1,128)S(1)}', space=vmem, size = 0x200, scoped, tag = 'scoped memory for tpu_custom_call.1']
  %s0 = inlined_call_operand.vmem [shape: f32[9,840], index: 0, kind: input, shape index: {}]
  %s1 = inlined_call_operand.vmem [shape: f32[4,50], index: 1, kind: input, shape index: {}]
  %s2 = inlined_call_operand.hbm [shape: f32[50,840], index: 2, kind: input, shape index: {}]
  %s3 = inlined_call_operand.vmem [shape: f32[64,18], index: 3, kind: input, shape index: {}]
  %s4 = inlined_call_operand.vmem [shape: f32[64,1], index: 4, kind: input, shape index: {}]
  %s5 = inlined_call_operand.vmem [shape: f32[64,1], index: 5, kind: input, shape index: {}]
  %s6 = inlined_call_operand.vmem [shape: f32[9,64], index: 6, kind: input, shape index: {}]
  %s7 = inlined_call_operand.<no memory space> [shape: f32[1,1], index: 7, kind: input, shape index: {}]
  %s8 = inlined_call_operand.hbm [shape: f32[2,840], index: 8, kind: output, shape index: {}]
  %s9 = sld [smem:[#allocation0]]
  $region46: #{tpu_custom_call.1} parent=0
    _
  %s11 = ssub.s32 1, %s9
  %s12 = scalar_select 0, %s11, %s9
  %v13 = vstv %s7
  %14 = vst [vmem:[#allocation3] sm:$0x1] %v13
  $region1: #{tpu_custom_call.1} parent=0
    #allocation4 [shape = 'u8[200704]{0}', space=vmem, size = 0x31000, scoped, tag = 'input window, operand 2, single buffered']
    #allocation5 [shape = 's32[1]{0}', space=sflag, size = 0x4, scoped, tag = 'scoped memory for tpu_custom_call.1']
    #allocation6 [shape = 's32[1]{0}', space=sflag, size = 0x4, scoped, tag = 'scoped memory for tpu_custom_call.1']
    #allocation7 [shape = 'u8[7168]{0}', space=vmem, size = 0x1c00, scoped, tag = 'output window, operand 0, single buffered']
    %15 = vsyncpa [#allocation5], 0
    %16 = vsyncpa [#allocation6], 0
    // Predicated region
    $region2: #{tpu_custom_call.1} parent=1 // pred_check
      _
    $region3: #{tpu_custom_call.1} parent=1 // pred_check_branch
      %18 = sbr.rel (0) target = $region5
    $region4: #{tpu_custom_call.1} parent=1 // pred_region
      _
    $region5: #{tpu_custom_call.1} parent=1 // pred_fallthru
      _
    // Predicated region
    $region6: #{tpu_custom_call.1} parent=1 // pred_check
      _
    $region7: #{tpu_custom_call.1} parent=1 // pred_check_branch
      %20 = sbr.rel (0) target = $region9
    $region8: #{tpu_custom_call.1} parent=1 // pred_region
      _
    $region9: #{tpu_custom_call.1} parent=1 // pred_fallthru
      _
    // Predicated region
    $region10: #{tpu_custom_call.1} parent=1 // pred_check
      _
    $region11: #{tpu_custom_call.1} parent=1 // pred_check_branch
      %22 = sbr.rel (0) target = $region13
    $region12: #{tpu_custom_call.1} parent=1 // pred_region
      %s24 = ssub.s32 6272, 6272
      %25 = vsyncadd [#allocation5], %s24
      %s26 = sshll.u32 [#allocation4], 4
      %s27 = int_to_ptr.vmem [resolvable:$true] %s26
      %32 = dma.hbm_to_vmem [thread:$0]  %s2, 6272, %s27, [#allocation5], 896, 896, 56
    $region13: #{tpu_custom_call.1} parent=1 // pred_fallthru
      _
    // Predicated region
    $region14: #{tpu_custom_call.1} parent=1 // pred_check
      _
    $region15: #{tpu_custom_call.1} parent=1 // pred_check_branch
      %34 = sbr.rel (0) target = $region17
    $region16: #{tpu_custom_call.1} parent=1 // pred_region
      _
    $region17: #{tpu_custom_call.1} parent=1 // pred_fallthru
      _
    // Predicated region
    $region18: #{tpu_custom_call.1} parent=1 // pred_check
      _
    $region19: #{tpu_custom_call.1} parent=1 // pred_check_branch
      %36 = sbr.rel (0) target = $region21
    $region20: #{tpu_custom_call.1} parent=1 // pred_region
      _
    $region21: #{tpu_custom_call.1} parent=1 // pred_fallthru
      _
    // Predicated region
    $region22: #{tpu_custom_call.1} parent=1 // pred_check
      _
    $region23: #{tpu_custom_call.1} parent=1 // pred_check_branch
      %38 = sbr.rel (0) target = $region25
    $region24: #{tpu_custom_call.1} parent=1 // pred_region
      _
    $region25: #{tpu_custom_call.1} parent=1 // pred_fallthru
      _
    // Predicated region
    $region26: #{tpu_custom_call.1} parent=1 // pred_check
      _
    $region27: #{tpu_custom_call.1} parent=1 // pred_check_branch
      %40 = sbr.rel (0) target = $region29
    $region28: #{tpu_custom_call.1} parent=1 // pred_region
      _
    $region29: #{tpu_custom_call.1} parent=1 // pred_fallthru
      _
    // Predicated region
    $region30: #{tpu_custom_call.1} parent=1 // pred_check
      _
    $region31: #{tpu_custom_call.1} parent=1 // pred_check_branch
      %42 = sbr.rel (0) target = $region33
    $region32: #{tpu_custom_call.1} parent=1 // pred_region
      _
    $region33: #{tpu_custom_call.1} parent=1 // pred_fallthru
      _
    // Predicated region
    $region34: #{tpu_custom_call.1} parent=1 // pred_check
      _
    $region35: #{tpu_custom_call.1} parent=1 // pred_check_branch
      %44 = sbr.rel (0) target = $region37
    $region36: #{tpu_custom_call.1} parent=1 // pred_region
      %45 = dma.done [#allocation5], 6272
    $region37: #{tpu_custom_call.1} parent=1 // pred_fallthru
      _
    %v46 = vld [vmem:[%s0] sm:$0xff]
    %v47 = vld [vmem:[%s0 + $0x8] sm:$0xff]
    %v48 = vld [vmem:[%s0 + $0x10] sm:$0xff]
    %v49 = vld [vmem:[%s0 + $0x18] sm:$0xff]
    %v50 = vld [vmem:[%s0 + $0x20] sm:$0xff]
    %v51 = vld [vmem:[%s0 + $0x28] sm:$0xff]
    %v52 = vld [vmem:[%s0 + $0x30] sm:$0xff]
    %v53 = vld [vmem:[%s0 + $0x38] sm:$0x1]
    %v54 = vld [vmem:[%s0 + $0x40] sm:$0x1]
    %v55 = vld [vmem:[%s0 + $0x48] sm:$0x1]
    %v56 = vld [vmem:[%s0 + $0x50] sm:$0x1]
    %v57 = vld [vmem:[%s0 + $0x58] sm:$0x1]
    %v58 = vld [vmem:[%s0 + $0x60] sm:$0x1]
    %v59 = vld [vmem:[%s0 + $0x68] sm:$0x1]
    %v60 = vld [vmem:[%s1] sm:$0xf]
    %v61 = vld [vmem:[#allocation4] sm:$0xff]
    %v62 = vld [vmem:[#allocation4 + $0x8] sm:$0xff]
    %v63 = vld [vmem:[#allocation4 + $0x10] sm:$0xff]
    %v64 = vld [vmem:[#allocation4 + $0x18] sm:$0xff]
    %v65 = vld [vmem:[#allocation4 + $0x20] sm:$0xff]
    %v66 = vld [vmem:[#allocation4 + $0x28] sm:$0xff]
    %v67 = vld [vmem:[#allocation4 + $0x30] sm:$0xff]
    %v68 = vld [vmem:[#allocation4 + $0x38] sm:$0xff]
    %v69 = vld [vmem:[#allocation4 + $0x40] sm:$0xff]
    %v70 = vld [vmem:[#allocation4 + $0x48] sm:$0xff]
    %v71 = vld [vmem:[#allocation4 + $0x50] sm:$0xff]
    %v72 = vld [vmem:[#allocation4 + $0x58] sm:$0xff]
    %v73 = vld [vmem:[#allocation4 + $0x60] sm:$0xff]
    %v74 = vld [vmem:[#allocation4 + $0x68] sm:$0xff]
    %v75 = vld [vmem:[#allocation4 + $0x70] sm:$0xff]
    %v76 = vld [vmem:[#allocation4 + $0x78] sm:$0xff]
    %v77 = vld [vmem:[#allocation4 + $0x80] sm:$0xff]
    %v78 = vld [vmem:[#allocation4 + $0x88] sm:$0xff]
    %v79 = vld [vmem:[#allocation4 + $0x90] sm:$0xff]
    %v80 = vld [vmem:[#allocation4 + $0x98] sm:$0xff]
    %v81 = vld [vmem:[#allocation4 + $0xa0] sm:$0xff]
    %v82 = vld [vmem:[#allocation4 + $0xa8] sm:$0xff]
    %v83 = vld [vmem:[#allocation4 + $0xb0] sm:$0xff]
    %v84 = vld [vmem:[#allocation4 + $0xb8] sm:$0xff]
    %v85 = vld [vmem:[#allocation4 + $0xc0] sm:$0xff]
    %v86 = vld [vmem:[#allocation4 + $0xc8] sm:$0xff]
    %v87 = vld [vmem:[#allocation4 + $0xd0] sm:$0xff]
    %v88 = vld [vmem:[#allocation4 + $0xd8] sm:$0xff]
    %v89 = vld [vmem:[#allocation4 + $0xe0] sm:$0xff]
    %v90 = vld [vmem:[#allocation4 + $0xe8] sm:$0xff]
    %v91 = vld [vmem:[#allocation4 + $0xf0] sm:$0xff]
    %v92 = vld [vmem:[#allocation4 + $0xf8] sm:$0xff]
    %v93 = vld [vmem:[#allocation4 + $0x100] sm:$0xff]
    %v94 = vld [vmem:[#allocation4 + $0x108] sm:$0xff]
    %v95 = vld [vmem:[#allocation4 + $0x110] sm:$0xff]
    %v96 = vld [vmem:[#allocation4 + $0x118] sm:$0xff]
    %v97 = vld [vmem:[#allocation4 + $0x120] sm:$0xff]
    %v98 = vld [vmem:[#allocation4 + $0x128] sm:$0xff]
    %v99 = vld [vmem:[#allocation4 + $0x130] sm:$0xff]
    %v100 = vld [vmem:[#allocation4 + $0x138] sm:$0xff]
    %v101 = vld [vmem:[#allocation4 + $0x140] sm:$0xff]
    %v102 = vld [vmem:[#allocation4 + $0x148] sm:$0xff]
    %v103 = vld [vmem:[#allocation4 + $0x150] sm:$0x3]
    %v104 = vld [vmem:[#allocation4 + $0x158] sm:$0x3]
    %v105 = vld [vmem:[#allocation4 + $0x160] sm:$0x3]
    %v106 = vld [vmem:[#allocation4 + $0x168] sm:$0x3]
    %v107 = vld [vmem:[#allocation4 + $0x170] sm:$0x3]
    %v108 = vld [vmem:[#allocation4 + $0x178] sm:$0x3]
    %v109 = vld [vmem:[#allocation4 + $0x180] sm:$0x3]
    %vm110 = vcmask 408576
    %v112 = vsel %vm110, %v60, 0
    %vm114 = vcmask 1041408
    %v116 = vsel %vm114, %v103, 0
    %v119 = vsel %vm114, %v104, 0
    %v122 = vsel %vm114, %v105, 0
    %v125 = vsel %vm114, %v106, 0
    %v128 = vsel %vm114, %v107, 0
    %v131 = vsel %vm114, %v108, 0
    %v134 = vsel %vm114, %v109, 0
    %136 = vmatprep.subr.mxu0 %v62
    %137 = vmatpush1.msra.mxu0 %v61
    %138 = vmatprep.subr.mxu0 %v69
    %139 = vmatpush1.msra.mxu0 %v68
    %140 = vmatprep.subr.mxu0 %v76
    %141 = vmatpush1.msra.mxu0 %v75
    %142 = vmatprep.subr.mxu0 %v83
    %143 = vmatpush1.msra.mxu0 %v82
    %144 = vmatprep.subr.mxu0 %v90
    %145 = vmatpush1.msra.mxu0 %v89
    %146 = vmatprep.subr.mxu0 %v97
    %147 = vmatpush1.msra.mxu0 %v96
    %148 = vmatprep.subr.mxu0 %v119
    %149 = vmatpush1.msra.mxu0 %v116
    %150 = vmatprep.subr.mxu0 0.0
    %151 = vmatpush1.msra.mxu0 0.0
    %152 = vmatprep.subr.mxu0 0.0
    %153 = vmatpush1.msra.mxu0 0.0
    %154 = vmatprep.subr.mxu0 0.0
    %155 = vmatpush1.msra.mxu0 0.0
    %156 = vmatprep.subr.mxu0 0.0
    %157 = vmatpush1.msra.mxu0 0.0
    %158 = vmatprep.subr.mxu0 0.0
    %159 = vmatpush1.msra.mxu0 0.0
    %160 = vmatprep.subr.mxu0 0.0
    %161 = vmatpush1.msra.mxu0 0.0
    %162 = vmatprep.subr.mxu0 0.0
    %163 = vmatpush1.msra.mxu0 0.0
    %164 = vmatprep.subr.mxu0 0.0
    %165 = vmatpush1.msra.mxu0 0.0
    %166 = vmatprep.subr.mxu0 0.0
    %167 = vmatpush1.msra.mxu0 0.0
    %168 = vmatprep.subr.mxu0 0.0
    %169 = vmatpush1.msra.mxu0 0.0
    %170 = vmatprep.subr.mxu0 0.0
    %171 = vmatpush1.msra.mxu0 0.0
    %172 = vmatprep.subr.mxu0 0.0
    %173 = vmatpush1.msra.mxu0 0.0
    %174 = vmatprep.subr.mxu0 0.0
    %175 = vmatpush1.msra.mxu0 0.0
    %176 = vmatprep.subr.mxu0 0.0
    %177 = vmatpush1.msra.mxu0 0.0
    %178 = vmatprep.subr.mxu0 0.0
    %179 = vmatpush1.msra.mxu0 0.0
    %180 = vmatprep.subr.mxu0 0.0
    %181 = vmatpush1.msra.mxu0 0.0
    %182 = vmatprep.subr.mxu0 0.0
    %183 = vmatpush1.msra.mxu0 0.0
    %184 = vmatprep.subr.mxu0 0.0
    %185 = vmatpush1.msra.mxu0 0.0
    %186 = vmatprep.subr.mxu0 0.0
    %187 = vmatpush1.msra.mxu0 0.0
    %188 = vmatprep.subr.mxu0 0.0
    %189 = vmatpush1.msra.mxu0 0.0
    %190 = vmatprep.subr.mxu0 0.0
    %191 = vmatpush1.msra.mxu0 0.0
    %192 = vmatprep.subr.mxu0 0.0
    %193 = vmatpush1.msra.mxu0 0.0
    %194 = vmatprep.subr.mxu0 0.0
    %195 = vmatpush1.msra.mxu0 0.0
    %196 = vmatprep.subr.mxu0 0.0
    %197 = vmatpush1.msra.mxu0 0.0
    %198 = vmatprep.subr.mxu0 0.0
    %199 = vmatpush1.msra.mxu0 0.0
    %200 = vmatprep.mubr.f32.mxu0 0.0
    %201 = vmatmul.mubr.f32.gmra.mrb[0].mxu0 %v112
    %v202 = vpop.f32.mrb[0].mxu0
    %v203 = vadd.f32 0.0, %v202
    %v204 = vpop.f32.mrb[0].mxu0
    %v205 = vadd.f32 0.0, %v204
    %206 = vdwg.mxu0
    %207 = vmatprep.subr.mxu0 %v64
    %208 = vmatpush1.msra.mxu0 %v63
    %209 = vmatprep.subr.mxu0 %v71
    %210 = vmatpush1.msra.mxu0 %v70
    %211 = vmatprep.subr.mxu0 %v78
    %212 = vmatpush1.msra.mxu0 %v77
    %213 = vmatprep.subr.mxu0 %v85
    %214 = vmatpush1.msra.mxu0 %v84
    %215 = vmatprep.subr.mxu0 %v92
    %216 = vmatpush1.msra.mxu0 %v91
    %217 = vmatprep.subr.mxu0 %v99
    %218 = vmatpush1.msra.mxu0 %v98
    %219 = vmatprep.subr.mxu0 %v125
    %220 = vmatpush1.msra.mxu0 %v122
    %221 = vmatprep.subr.mxu0 0.0
    %222 = vmatpush1.msra.mxu0 0.0
    %223 = vmatprep.subr.mxu0 0.0
    %224 = vmatpush1.msra.mxu0 0.0
    %225 = vmatprep.subr.mxu0 0.0
    %226 = vmatpush1.msra.mxu0 0.0
    %227 = vmatprep.subr.mxu0 0.0
    %228 = vmatpush1.msra.mxu0 0.0
    %229 = vmatprep.subr.mxu0 0.0
    %230 = vmatpush1.msra.mxu0 0.0
    %231 = vmatprep.subr.mxu0 0.0
    %232 = vmatpush1.msra.mxu0 0.0
    %233 = vmatprep.subr.mxu0 0.0
    %234 = vmatpush1.msra.mxu0 0.0
    %235 = vmatprep.subr.mxu0 0.0
    %236 = vmatpush1.msra.mxu0 0.0
    %237 = vmatprep.subr.mxu0 0.0
    %238 = vmatpush1.msra.mxu0 0.0
    %239 = vmatprep.subr.mxu0 0.0
    %240 = vmatpush1.msra.mxu0 0.0
    %241 = vmatprep.subr.mxu0 0.0
    %242 = vmatpush1.msra.mxu0 0.0
    %243 = vmatprep.subr.mxu0 0.0
    %244 = vmatpush1.msra.mxu0 0.0
    %245 = vmatprep.subr.mxu0 0.0
    %246 = vmatpush1.msra.mxu0 0.0
    %247 = vmatprep.subr.mxu0 0.0
    %248 = vmatpush1.msra.mxu0 0.0
    %249 = vmatprep.subr.mxu0 0.0
    %250 = vmatpush1.msra.mxu0 0.0
    %251 = vmatprep.subr.mxu0 0.0
    %252 = vmatpush1.msra.mxu0 0.0
    %253 = vmatprep.subr.mxu0 0.0
    %254 = vmatpush1.msra.mxu0 0.0
    %255 = vmatprep.subr.mxu0 0.0
    %256 = vmatpush1.msra.mxu0 0.0
    %257 = vmatprep.subr.mxu0 0.0
    %258 = vmatpush1.msra.mxu0 0.0
    %259 = vmatprep.subr.mxu0 0.0
    %260 = vmatpush1.msra.mxu0 0.0
    %261 = vmatprep.subr.mxu0 0.0
    %262 = vmatpush1.msra.mxu0 0.0
    %263 = vmatprep.subr.mxu0 0.0
    %264 = vmatpush1.msra.mxu0 0.0
    %265 = vmatprep.subr.mxu0 0.0
    %266 = vmatpush1.msra.mxu0 0.0
    %267 = vmatprep.subr.mxu0 0.0
    %268 = vmatpush1.msra.mxu0 0.0
    %269 = vmatprep.subr.mxu0 0.0
    %270 = vmatpush1.msra.mxu0 0.0
    %271 = vmatprep.mubr.f32.mxu0 0.0
    %272 = vmatmul.mubr.f32.gmra.mrb[0].mxu0 %v112
    %v273 = vpop.f32.mrb[0].mxu0
    %v274 = vadd.f32 0.0, %v273
    %v275 = vpop.f32.mrb[0].mxu0
    %v276 = vadd.f32 0.0, %v275
    %277 = vdwg.mxu0
    %278 = vmatprep.subr.mxu0 %v66
    %279 = vmatpush1.msra.mxu0 %v65
    %280 = vmatprep.subr.mxu0 %v73
    %281 = vmatpush1.msra.mxu0 %v72
    %282 = vmatprep.subr.mxu0 %v80
    %283 = vmatpush1.msra.mxu0 %v79
    %284 = vmatprep.subr.mxu0 %v87
    %285 = vmatpush1.msra.mxu0 %v86
    %286 = vmatprep.subr.mxu0 %v94
    %287 = vmatpush1.msra.mxu0 %v93
    %288 = vmatprep.subr.mxu0 %v101
    %289 = vmatpush1.msra.mxu0 %v100
    %290 = vmatprep.subr.mxu0 %v131
    %291 = vmatpush1.msra.mxu0 %v128
    %292 = vmatprep.subr.mxu0 0.0
    %293 = vmatpush1.msra.mxu0 0.0
    %294 = vmatprep.subr.mxu0 0.0
    %295 = vmatpush1.msra.mxu0 0.0
    %296 = vmatprep.subr.mxu0 0.0
    %297 = vmatpush1.msra.mxu0 0.0
    %298 = vmatprep.subr.mxu0 0.0
    %299 = vmatpush1.msra.mxu0 0.0
    %300 = vmatprep.subr.mxu0 0.0
    %301 = vmatpush1.msra.mxu0 0.0
    %302 = vmatprep.subr.mxu0 0.0
    %303 = vmatpush1.msra.mxu0 0.0
    %304 = vmatprep.subr.mxu0 0.0
    %305 = vmatpush1.msra.mxu0 0.0
    %306 = vmatprep.subr.mxu0 0.0
    %307 = vmatpush1.msra.mxu0 0.0
    %308 = vmatprep.subr.mxu0 0.0
    %309 = vmatpush1.msra.mxu0 0.0
    %310 = vmatprep.subr.mxu0 0.0
    %311 = vmatpush1.msra.mxu0 0.0
    %312 = vmatprep.subr.mxu0 0.0
    %313 = vmatpush1.msra.mxu0 0.0
    %314 = vmatprep.subr.mxu0 0.0
    %315 = vmatpush1.msra.mxu0 0.0
    %316 = vmatprep.subr.mxu0 0.0
    %317 = vmatpush1.msra.mxu0 0.0
    %318 = vmatprep.subr.mxu0 0.0
    %319 = vmatpush1.msra.mxu0 0.0
    %320 = vmatprep.subr.mxu0 0.0
    %321 = vmatpush1.msra.mxu0 0.0
    %322 = vmatprep.subr.mxu0 0.0
    %323 = vmatpush1.msra.mxu0 0.0
    %324 = vmatprep.subr.mxu0 0.0
    %325 = vmatpush1.msra.mxu0 0.0
    %326 = vmatprep.subr.mxu0 0.0
    %327 = vmatpush1.msra.mxu0 0.0
    %328 = vmatprep.subr.mxu0 0.0
    %329 = vmatpush1.msra.mxu0 0.0
    %330 = vmatprep.subr.mxu0 0.0
    %331 = vmatpush1.msra.mxu0 0.0
    %332 = vmatprep.subr.mxu0 0.0
    %333 = vmatpush1.msra.mxu0 0.0
    %334 = vmatprep.subr.mxu0 0.0
    %335 = vmatpush1.msra.mxu0 0.0
    %336 = vmatprep.subr.mxu0 0.0
    %337 = vmatpush1.msra.mxu0 0.0
    %338 = vmatprep.subr.mxu0 0.0
    %339 = vmatpush1.msra.mxu0 0.0
    %340 = vmatprep.subr.mxu0 0.0
    %341 = vmatpush1.msra.mxu0 0.0
    %342 = vmatprep.mubr.f32.mxu0 0.0
    %343 = vmatmul.mubr.f32.gmra.mrb[0].mxu0 %v112
    %v344 = vpop.f32.mrb[0].mxu0
    %v345 = vadd.f32 0.0, %v344
    %v346 = vpop.f32.mrb[0].mxu0
    %v347 = vadd.f32 0.0, %v346
    %348 = vdwg.mxu0
    %349 = vmatprep.subr.mxu0 0.0
    %350 = vmatpush1.msra.mxu0 %v67
    %351 = vmatprep.subr.mxu0 0.0
    %352 = vmatpush1.msra.mxu0 %v74
    %353 = vmatprep.subr.mxu0 0.0
    %354 = vmatpush1.msra.mxu0 %v81
    %355 = vmatprep.subr.mxu0 0.0
    %356 = vmatpush1.msra.mxu0 %v88
    %357 = vmatprep.subr.mxu0 0.0
    %358 = vmatpush1.msra.mxu0 %v95
    %359 = vmatprep.subr.mxu0 0.0
    %360 = vmatpush1.msra.mxu0 %v102
    %361 = vmatprep.subr.mxu0 0.0
    %362 = vmatpush1.msra.mxu0 %v134
    %363 = vmatprep.subr.mxu0 0.0
    %364 = vmatpush1.msra.mxu0 0.0
    %365 = vmatprep.subr.mxu0 0.0
    %366 = vmatpush1.msra.mxu0 0.0
    %367 = vmatprep.subr.mxu0 0.0
    %368 = vmatpush1.msra.mxu0 0.0
    %369 = vmatprep.subr.mxu0 0.0
    %370 = vmatpush1.msra.mxu0 0.0
    %371 = vmatprep.subr.mxu0 0.0
    %372 = vmatpush1.msra.mxu0 0.0
    %373 = vmatprep.subr.mxu0 0.0
    %374 = vmatpush1.msra.mxu0 0.0
    %375 = vmatprep.subr.mxu0 0.0
    %376 = vmatpush1.msra.mxu0 0.0
    %377 = vmatprep.subr.mxu0 0.0
    %378 = vmatpush1.msra.mxu0 0.0
    %379 = vmatprep.subr.mxu0 0.0
    %380 = vmatpush1.msra.mxu0 0.0
    %381 = vmatprep.subr.mxu0 0.0
    %382 = vmatpush1.msra.mxu0 0.0
    %383 = vmatprep.subr.mxu0 0.0
    %384 = vmatpush1.msra.mxu0 0.0
    %385 = vmatprep.subr.mxu0 0.0
    %386 = vmatpush1.msra.mxu0 0.0
    %387 = vmatprep.subr.mxu0 0.0
    %388 = vmatpush1.msra.mxu0 0.0
    %389 = vmatprep.subr.mxu0 0.0
    %390 = vmatpush1.msra.mxu0 0.0
    %391 = vmatprep.subr.mxu0 0.0
    %392 = vmatpush1.msra.mxu0 0.0
    %393 = vmatprep.subr.mxu0 0.0
    %394 = vmatpush1.msra.mxu0 0.0
    %395 = vmatprep.subr.mxu0 0.0
    %396 = vmatpush1.msra.mxu0 0.0
    %397 = vmatprep.subr.mxu0 0.0
    %398 = vmatpush1.msra.mxu0 0.0
    %399 = vmatprep.subr.mxu0 0.0
    %400 = vmatpush1.msra.mxu0 0.0
    %401 = vmatprep.subr.mxu0 0.0
    %402 = vmatpush1.msra.mxu0 0.0
    %403 = vmatprep.subr.mxu0 0.0
    %404 = vmatpush1.msra.mxu0 0.0
    %405 = vmatprep.subr.mxu0 0.0
    %406 = vmatpush1.msra.mxu0 0.0
    %407 = vmatprep.subr.mxu0 0.0
    %408 = vmatpush1.msra.mxu0 0.0
    %409 = vmatprep.subr.mxu0 0.0
    %410 = vmatpush1.msra.mxu0 0.0
    %411 = vmatprep.subr.mxu0 0.0
    %412 = vmatpush1.msra.mxu0 0.0
    %413 = vmatprep.mubr.f32.mxu0 0.0
    %414 = vmatmul.mubr.f32.gmra.mrb[0].mxu0 %v112
    %v415 = vpop.f32.mrb[0].mxu0
    %v416 = vadd.f32 0.0, %v415
    %v417 = vpop.f32.mrb[0].mxu0
    %418 = vdwg.mxu0
    %vm419 = vcmask 1048128
    %420 = vrot.lane.b32.xlu0 %v203, 72
    %v421 = vpop.permute.xlu0 %420
    %v422 = vsel %vm419, %v421, %v416
    %423 = vrot.lane.b32.xlu0 %v205, 72
    %v424 = vpop.permute.xlu0 %423
    %425 = vrot.lane.b32.xlu0 %v274, 72
    %v426 = vpop.permute.xlu0 %425
    %427 = vrot.lane.b32.xlu0 %v276, 72
    %v428 = vpop.permute.xlu0 %427
    %429 = vrot.lane.b32.xlu0 %v345, 72
    %v430 = vpop.permute.xlu0 %429
    %431 = vrot.lane.b32.xlu0 %v347, 72
    %v432 = vpop.permute.xlu0 %431
    %433 = vrot.lane.b32.xlu0 %v422, 72
    %v434 = vpop.permute.xlu0 %433
    %v435 = vsel %vm419, %v424, %v421
    %v436 = vsel %vm419, %v426, %v424
    %v437 = vsel %vm419, %v428, %v426
    %v438 = vsel %vm419, %v430, %v428
    %v439 = vsel %vm419, %v432, %v430
    %v440 = vsel %vm419, %v434, %v432
    %v441 = vlaneseq
    %v442 = vshrl.u32 %v441, 7
    %v443 = vsub.s32 0, %v442
    %v444 = vrot.slane %v46, %v443
    %v445 = vlaneseq
    %v446 = vshrl.u32 %v445, 7
    %v447 = vsub.s32 0, %v446
    %v448 = vrot.slane %v47, %v447
    %v449 = vlaneseq
    %v450 = vshrl.u32 %v449, 7
    %v451 = vsub.s32 0, %v450
    %v452 = vrot.slane %v48, %v451
    %v453 = vlaneseq
    %v454 = vshrl.u32 %v453, 7
    %v455 = vsub.s32 0, %v454
    %v456 = vrot.slane %v49, %v455
    %v457 = vlaneseq
    %v458 = vshrl.u32 %v457, 7
    %v459 = vsub.s32 0, %v458
    %v460 = vrot.slane %v50, %v459
    %v461 = vlaneseq
    %v462 = vshrl.u32 %v461, 7
    %v463 = vsub.s32 0, %v462
    %v464 = vrot.slane %v51, %v463
    %v465 = vlaneseq
    %v466 = vshrl.u32 %v465, 7
    %v467 = vsub.s32 0, %v466
    %v468 = vrot.slane %v52, %v467
    %476 = vrot.lane.b32.xlu0 %v444, 63
    %v477 = vpop.permute.xlu0 %476
    %478 = vrot.lane.b32.xlu0 %v448, 63
    %v479 = vpop.permute.xlu0 %478
    %480 = vrot.lane.b32.xlu0 %v452, 63
    %v481 = vpop.permute.xlu0 %480
    %482 = vrot.lane.b32.xlu0 %v456, 63
    %v483 = vpop.permute.xlu0 %482
    %484 = vrot.lane.b32.xlu0 %v460, 63
    %v485 = vpop.permute.xlu0 %484
    %486 = vrot.lane.b32.xlu0 %v464, 63
    %v487 = vpop.permute.xlu0 %486
    %488 = vrot.lane.b32.xlu0 %v468, 63
    %v489 = vpop.permute.xlu0 %488
    %vm490 = vcmask 515072
    %v491 = vsel %vm490, %v477, %v479
    %v492 = vsel %vm490, %v479, %v481
    %v493 = vsel %vm490, %v481, %v483
    %v494 = vsel %vm490, %v483, %v485
    %v495 = vsel %vm490, %v485, %v487
    %v496 = vsel %vm490, %v487, %v489
    %v505 = vmul.f32 %v422, %v477
    %v506 = vmul.f32 %v435, %v491
    %v507 = vmul.f32 %v436, %v492
    %v508 = vmul.f32 %v437, %v493
    %v509 = vmul.f32 %v438, %v494
    %v510 = vmul.f32 %v439, %v495
    %v511 = vmul.f32 %v440, %v496
    %v512 = vmul.f32 %v434, %v489
    %v513 = vlaneseq
    %v514 = vshrl.u32 %v513, 7
    %v515 = vsub.s32 1, %v514
    %v516 = vrot.slane %v46, %v515
    %v517 = vlaneseq
    %v518 = vshrl.u32 %v517, 7
    %v519 = vsub.s32 1, %v518
    %v520 = vrot.slane %v47, %v519
    %v521 = vlaneseq
    %v522 = vshrl.u32 %v521, 7
    %v523 = vsub.s32 1, %v522
    %v524 = vrot.slane %v48, %v523
    %v525 = vlaneseq
    %v526 = vshrl.u32 %v525, 7
    %v527 = vsub.s32 1, %v526
    %v528 = vrot.slane %v49, %v527
    %v529 = vlaneseq
    %v530 = vshrl.u32 %v529, 7
    %v531 = vsub.s32 1, %v530
    %v532 = vrot.slane %v50, %v531
    %v533 = vlaneseq
    %v534 = vshrl.u32 %v533, 7
    %v535 = vsub.s32 1, %v534
    %v536 = vrot.slane %v51, %v535
    %v537 = vlaneseq
    %v538 = vshrl.u32 %v537, 7
    %v539 = vsub.s32 1, %v538
    %v540 = vrot.slane %v52, %v539
    %548 = vrot.lane.b32.xlu0 %v516, 64
    %v549 = vpop.permute.xlu0 %548
    %550 = vrot.lane.b32.xlu0 %v520, 64
    %v551 = vpop.permute.xlu0 %550
    %552 = vrot.lane.b32.xlu0 %v524, 64
    %v553 = vpop.permute.xlu0 %552
    %554 = vrot.lane.b32.xlu0 %v528, 64
    %v555 = vpop.permute.xlu0 %554
    %556 = vrot.lane.b32.xlu0 %v532, 64
    %v557 = vpop.permute.xlu0 %556
    %558 = vrot.lane.b32.xlu0 %v536, 64
    %v559 = vpop.permute.xlu0 %558
    %560 = vrot.lane.b32.xlu0 %v540, 64
    %v561 = vpop.permute.xlu0 %560
    %vm562 = vcmask 523264
    %v563 = vsel %vm562, %v549, %v551
    %v564 = vsel %vm562, %v551, %v553
    %v565 = vsel %vm562, %v553, %v555
    %v566 = vsel %vm562, %v555, %v557
    %v567 = vsel %vm562, %v557, %v559
    %v568 = vsel %vm562, %v559, %v561
    %v577 = vmul.f32 %v422, %v549
    %v578 = vmul.f32 %v435, %v563
    %v579 = vmul.f32 %v436, %v564
    %v580 = vmul.f32 %v437, %v565
    %v581 = vmul.f32 %v438, %v566
    %v582 = vmul.f32 %v439, %v567
    %v583 = vmul.f32 %v440, %v568
    %v584 = vmul.f32 %v434, %v561
    %v585 = vlaneseq
    %v586 = vshrl.u32 %v585, 7
    %v587 = vsub.s32 2, %v586
    %v588 = vrot.slane %v46, %v587
    %v589 = vlaneseq
    %v590 = vshrl.u32 %v589, 7
    %v591 = vsub.s32 2, %v590
    %v592 = vrot.slane %v47, %v591
    %v593 = vlaneseq
    %v594 = vshrl.u32 %v593, 7
    %v595 = vsub.s32 2, %v594
    %v596 = vrot.slane %v48, %v595
    %v597 = vlaneseq
    %v598 = vshrl.u32 %v597, 7
    %v599 = vsub.s32 2, %v598
    %v600 = vrot.slane %v49, %v599
    %v601 = vlaneseq
    %v602 = vshrl.u32 %v601, 7
    %v603 = vsub.s32 2, %v602
    %v604 = vrot.slane %v50, %v603
    %v605 = vlaneseq
    %v606 = vshrl.u32 %v605, 7
    %v607 = vsub.s32 2, %v606
    %v608 = vrot.slane %v51, %v607
    %v609 = vlaneseq
    %v610 = vshrl.u32 %v609, 7
    %v611 = vsub.s32 2, %v610
    %v612 = vrot.slane %v52, %v611
    %620 = vrot.lane.b32.xlu0 %v588, 65
    %v621 = vpop.permute.xlu0 %620
    %622 = vrot.lane.b32.xlu0 %v592, 65
    %v623 = vpop.permute.xlu0 %622
    %624 = vrot.lane.b32.xlu0 %v596, 65
    %v625 = vpop.permute.xlu0 %624
    %626 = vrot.lane.b32.xlu0 %v600, 65
    %v627 = vpop.permute.xlu0 %626
    %628 = vrot.lane.b32.xlu0 %v604, 65
    %v629 = vpop.permute.xlu0 %628
    %630 = vrot.lane.b32.xlu0 %v608, 65
    %v631 = vpop.permute.xlu0 %630
    %632 = vrot.lane.b32.xlu0 %v612, 65
    %v633 = vpop.permute.xlu0 %632
    %vm634 = vcmask 531456
    %v635 = vsel %vm634, %v621, %v623
    %v636 = vsel %vm634, %v623, %v625
    %v637 = vsel %vm634, %v625, %v627
    %v638 = vsel %vm634, %v627, %v629
    %v639 = vsel %vm634, %v629, %v631
    %v640 = vsel %vm634, %v631, %v633
    %v649 = vmul.f32 %v422, %v621
    %v650 = vmul.f32 %v435, %v635
    %v651 = vmul.f32 %v436, %v636
    %v652 = vmul.f32 %v437, %v637
    %v653 = vmul.f32 %v438, %v638
    %v654 = vmul.f32 %v439, %v639
    %v655 = vmul.f32 %v440, %v640
    %v656 = vmul.f32 %v434, %v633
    %v657 = vlaneseq
    %v658 = vshrl.u32 %v657, 7
    %v659 = vsub.s32 3, %v658
    %v660 = vrot.slane %v46, %v659
    %v661 = vlaneseq
    %v662 = vshrl.u32 %v661, 7
    %v663 = vsub.s32 3, %v662
    %v664 = vrot.slane %v47, %v663
    %v665 = vlaneseq
    %v666 = vshrl.u32 %v665, 7
    %v667 = vsub.s32 3, %v666
    %v668 = vrot.slane %v48, %v667
    %v669 = vlaneseq
    %v670 = vshrl.u32 %v669, 7
    %v671 = vsub.s32 3, %v670
    %v672 = vrot.slane %v49, %v671
    %v673 = vlaneseq
    %v674 = vshrl.u32 %v673, 7
    %v675 = vsub.s32 3, %v674
    %v676 = vrot.slane %v50, %v675
    %v677 = vlaneseq
    %v678 = vshrl.u32 %v677, 7
    %v679 = vsub.s32 3, %v678
    %v680 = vrot.slane %v51, %v679
    %v681 = vlaneseq
    %v682 = vshrl.u32 %v681, 7
    %v683 = vsub.s32 3, %v682
    %v684 = vrot.slane %v52, %v683
    %692 = vrot.lane.b32.xlu0 %v660, 71
    %v693 = vpop.permute.xlu0 %692
    %694 = vrot.lane.b32.xlu0 %v664, 71
    %v695 = vpop.permute.xlu0 %694
    %696 = vrot.lane.b32.xlu0 %v668, 71
    %v697 = vpop.permute.xlu0 %696
    %698 = vrot.lane.b32.xlu0 %v672, 71
    %v699 = vpop.permute.xlu0 %698
    %700 = vrot.lane.b32.xlu0 %v676, 71
    %v701 = vpop.permute.xlu0 %700
    %702 = vrot.lane.b32.xlu0 %v680, 71
    %v703 = vpop.permute.xlu0 %702
    %704 = vrot.lane.b32.xlu0 %v684, 71
    %v705 = vpop.permute.xlu0 %704
    %vm706 = vcmask 580608
    %v707 = vsel %vm706, %v693, %v695
    %v708 = vsel %vm706, %v695, %v697
    %v709 = vsel %vm706, %v697, %v699
    %v710 = vsel %vm706, %v699, %v701
    %v711 = vsel %vm706, %v701, %v703
    %v712 = vsel %vm706, %v703, %v705
    %v721 = vmul.f32 %v422, %v693
    %v722 = vmul.f32 %v435, %v707
    %v723 = vmul.f32 %v436, %v708
    %v724 = vmul.f32 %v437, %v709
    %v725 = vmul.f32 %v438, %v710
    %v726 = vmul.f32 %v439, %v711
    %v727 = vmul.f32 %v440, %v712
    %v728 = vmul.f32 %v434, %v705
    %v729 = vlaneseq
    %v730 = vshrl.u32 %v729, 7
    %v731 = vsub.s32 5, %v730
    %v732 = vrot.slane %v46, %v731
    %v733 = vlaneseq
    %v734 = vshrl.u32 %v733, 7
    %v735 = vsub.s32 5, %v734
    %v736 = vrot.slane %v47, %v735
    %v737 = vlaneseq
    %v738 = vshrl.u32 %v737, 7
    %v739 = vsub.s32 5, %v738
    %v740 = vrot.slane %v48, %v739
    %v741 = vlaneseq
    %v742 = vshrl.u32 %v741, 7
    %v743 = vsub.s32 5, %v742
    %v744 = vrot.slane %v49, %v743
    %v745 = vlaneseq
    %v746 = vshrl.u32 %v745, 7
    %v747 = vsub.s32 5, %v746
    %v748 = vrot.slane %v50, %v747
    %v749 = vlaneseq
    %v750 = vshrl.u32 %v749, 7
    %v751 = vsub.s32 5, %v750
    %v752 = vrot.slane %v51, %v751
    %v753 = vlaneseq
    %v754 = vshrl.u32 %v753, 7
    %v755 = vsub.s32 5, %v754
    %v756 = vrot.slane %v52, %v755
    %764 = vrot.lane.b32.xlu0 %v732, 1
    %v765 = vpop.permute.xlu0 %764
    %766 = vrot.lane.b32.xlu0 %v736, 1
    %v767 = vpop.permute.xlu0 %766
    %768 = vrot.lane.b32.xlu0 %v740, 1
    %v769 = vpop.permute.xlu0 %768
    %770 = vrot.lane.b32.xlu0 %v744, 1
    %v771 = vpop.permute.xlu0 %770
    %772 = vrot.lane.b32.xlu0 %v748, 1
    %v773 = vpop.permute.xlu0 %772
    %774 = vrot.lane.b32.xlu0 %v752, 1
    %v775 = vpop.permute.xlu0 %774
    %776 = vrot.lane.b32.xlu0 %v756, 1
    %v777 = vpop.permute.xlu0 %776
    %vm778 = vcmask 7168
    %v779 = vsel %vm778, %v765, %v767
    %v780 = vsel %vm778, %v767, %v769
    %v781 = vsel %vm778, %v769, %v771
    %v782 = vsel %vm778, %v771, %v773
    %v783 = vsel %vm778, %v773, %v775
    %v784 = vsel %vm778, %v775, %v777
    %v792 = vmul.f32 %v203, %v765
    %v793 = vmul.f32 %v205, %v779
    %v794 = vmul.f32 %v274, %v780
    %v795 = vmul.f32 %v276, %v781
    %v796 = vmul.f32 %v345, %v782
    %v797 = vmul.f32 %v347, %v783
    %v798 = vmul.f32 %v422, %v784
    %v799 = vlaneseq
    %v800 = vshrl.u32 %v799, 7
    %v801 = vsub.s32 6, %v800
    %v802 = vrot.slane %v46, %v801
    %v803 = vlaneseq
    %v804 = vshrl.u32 %v803, 7
    %v805 = vsub.s32 6, %v804
    %v806 = vrot.slane %v47, %v805
    %v807 = vlaneseq
    %v808 = vshrl.u32 %v807, 7
    %v809 = vsub.s32 6, %v808
    %v810 = vrot.slane %v48, %v809
    %v811 = vlaneseq
    %v812 = vshrl.u32 %v811, 7
    %v813 = vsub.s32 6, %v812
    %v814 = vrot.slane %v49, %v813
    %v815 = vlaneseq
    %v816 = vshrl.u32 %v815, 7
    %v817 = vsub.s32 6, %v816
    %v818 = vrot.slane %v50, %v817
    %v819 = vlaneseq
    %v820 = vshrl.u32 %v819, 7
    %v821 = vsub.s32 6, %v820
    %v822 = vrot.slane %v51, %v821
    %v823 = vlaneseq
    %v824 = vshrl.u32 %v823, 7
    %v825 = vsub.s32 6, %v824
    %v826 = vrot.slane %v52, %v825
    %834 = vrot.lane.b32.xlu0 %v802, 7
    %v835 = vpop.permute.xlu0 %834
    %836 = vrot.lane.b32.xlu0 %v806, 7
    %v837 = vpop.permute.xlu0 %836
    %838 = vrot.lane.b32.xlu0 %v810, 7
    %v839 = vpop.permute.xlu0 %838
    %840 = vrot.lane.b32.xlu0 %v814, 7
    %v841 = vpop.permute.xlu0 %840
    %842 = vrot.lane.b32.xlu0 %v818, 7
    %v843 = vpop.permute.xlu0 %842
    %844 = vrot.lane.b32.xlu0 %v822, 7
    %v845 = vpop.permute.xlu0 %844
    %846 = vrot.lane.b32.xlu0 %v826, 7
    %v847 = vpop.permute.xlu0 %846
    %vm848 = vcmask 56320
    %v849 = vsel %vm848, %v835, %v837
    %v850 = vsel %vm848, %v837, %v839
    %v851 = vsel %vm848, %v839, %v841
    %v852 = vsel %vm848, %v841, %v843
    %v853 = vsel %vm848, %v843, %v845
    %v854 = vsel %vm848, %v845, %v847
    %v862 = vmul.f32 %v203, %v835
    %v863 = vmul.f32 %v205, %v849
    %v864 = vmul.f32 %v274, %v850
    %v865 = vmul.f32 %v276, %v851
    %v866 = vmul.f32 %v345, %v852
    %v867 = vmul.f32 %v347, %v853
    %v868 = vmul.f32 %v422, %v854
    %v869 = vlaneseq
    %v870 = vshrl.u32 %v869, 7
    %v871 = vsub.s32 7, %v870
    %v872 = vrot.slane %v46, %v871
    %v873 = vlaneseq
    %v874 = vshrl.u32 %v873, 7
    %v875 = vsub.s32 7, %v874
    %v876 = vrot.slane %v47, %v875
    %v877 = vlaneseq
    %v878 = vshrl.u32 %v877, 7
    %v879 = vsub.s32 7, %v878
    %v880 = vrot.slane %v48, %v879
    %v881 = vlaneseq
    %v882 = vshrl.u32 %v881, 7
    %v883 = vsub.s32 7, %v882
    %v884 = vrot.slane %v49, %v883
    %v885 = vlaneseq
    %v886 = vshrl.u32 %v885, 7
    %v887 = vsub.s32 7, %v886
    %v888 = vrot.slane %v50, %v887
    %v889 = vlaneseq
    %v890 = vshrl.u32 %v889, 7
    %v891 = vsub.s32 7, %v890
    %v892 = vrot.slane %v51, %v891
    %v893 = vlaneseq
    %v894 = vshrl.u32 %v893, 7
    %v895 = vsub.s32 7, %v894
    %v896 = vrot.slane %v52, %v895
    %904 = vrot.lane.b32.xlu0 %v872, 8
    %v905 = vpop.permute.xlu0 %904
    %906 = vrot.lane.b32.xlu0 %v876, 8
    %v907 = vpop.permute.xlu0 %906
    %908 = vrot.lane.b32.xlu0 %v880, 8
    %v909 = vpop.permute.xlu0 %908
    %910 = vrot.lane.b32.xlu0 %v884, 8
    %v911 = vpop.permute.xlu0 %910
    %912 = vrot.lane.b32.xlu0 %v888, 8
    %v913 = vpop.permute.xlu0 %912
    %914 = vrot.lane.b32.xlu0 %v892, 8
    %v915 = vpop.permute.xlu0 %914
    %916 = vrot.lane.b32.xlu0 %v896, 8
    %v917 = vpop.permute.xlu0 %916
    %vm918 = vcmask 64512
    %v919 = vsel %vm918, %v905, %v907
    %v920 = vsel %vm918, %v907, %v909
    %v921 = vsel %vm918, %v909, %v911
    %v922 = vsel %vm918, %v911, %v913
    %v923 = vsel %vm918, %v913, %v915
    %v924 = vsel %vm918, %v915, %v917
    %v932 = vmul.f32 %v203, %v905
    %v933 = vmul.f32 %v205, %v919
    %v934 = vmul.f32 %v274, %v920
    %v935 = vmul.f32 %v276, %v921
    %v936 = vmul.f32 %v345, %v922
    %v937 = vmul.f32 %v347, %v923
    %v938 = vmul.f32 %v422, %v924
    %v939 = vlaneseq
    %v940 = vshrl.u32 %v939, 7
    %v941 = vsub.s32 0, %v940
    %v942 = vrot.slane %v53, %v941
    %v943 = vlaneseq
    %v944 = vshrl.u32 %v943, 7
    %v945 = vsub.s32 0, %v944
    %v946 = vrot.slane %v54, %v945
    %v947 = vlaneseq
    %v948 = vshrl.u32 %v947, 7
    %v949 = vsub.s32 0, %v948
    %v950 = vrot.slane %v55, %v949
    %v951 = vlaneseq
    %v952 = vshrl.u32 %v951, 7
    %v953 = vsub.s32 0, %v952
    %v954 = vrot.slane %v56, %v953
    %v955 = vlaneseq
    %v956 = vshrl.u32 %v955, 7
    %v957 = vsub.s32 0, %v956
    %v958 = vrot.slane %v57, %v957
    %v959 = vlaneseq
    %v960 = vshrl.u32 %v959, 7
    %v961 = vsub.s32 0, %v960
    %v962 = vrot.slane %v58, %v961
    %v963 = vlaneseq
    %v964 = vshrl.u32 %v963, 7
    %v965 = vsub.s32 0, %v964
    %v966 = vrot.slane %v59, %v965
    %974 = vrot.lane.b32.xlu0 %v942, 9
    %v975 = vpop.permute.xlu0 %974
    %976 = vrot.lane.b32.xlu0 %v946, 9
    %v977 = vpop.permute.xlu0 %976
    %978 = vrot.lane.b32.xlu0 %v950, 9
    %v979 = vpop.permute.xlu0 %978
    %980 = vrot.lane.b32.xlu0 %v954, 9
    %v981 = vpop.permute.xlu0 %980
    %982 = vrot.lane.b32.xlu0 %v958, 9
    %v983 = vpop.permute.xlu0 %982
    %984 = vrot.lane.b32.xlu0 %v962, 9
    %v985 = vpop.permute.xlu0 %984
    %986 = vrot.lane.b32.xlu0 %v966, 9
    %v987 = vpop.permute.xlu0 %986
    %vm988 = vcmask 72704
    %v989 = vsel %vm988, %v975, %v977
    %v990 = vsel %vm988, %v977, %v979
    %v991 = vsel %vm988, %v979, %v981
    %v992 = vsel %vm988, %v981, %v983
    %v993 = vsel %vm988, %v983, %v985
    %v994 = vsel %vm988, %v985, %v987
    %v1002 = vmul.f32 %v203, %v975
    %v1003 = vmul.f32 %v205, %v989
    %v1004 = vmul.f32 %v274, %v990
    %v1005 = vmul.f32 %v276, %v991
    %v1006 = vmul.f32 %v345, %v992
    %v1007 = vmul.f32 %v347, %v993
    %v1008 = vmul.f32 %v422, %v994
    %v1009 = vld [vmem:[%s3] sm:$0xff]
    %v1010 = vld [vmem:[%s3 + $0x8] sm:$0xff]
    %v1011 = vld [vmem:[%s3 + $0x10] sm:$0xff]
    %v1012 = vld [vmem:[%s3 + $0x18] sm:$0xff]
    %v1013 = vld [vmem:[%s3 + $0x20] sm:$0xff]
    %v1014 = vld [vmem:[%s3 + $0x28] sm:$0xff]
    %v1015 = vld [vmem:[%s3 + $0x30] sm:$0xff]
    %v1016 = vld [vmem:[%s3 + $0x38] sm:$0xff]
    %1025 = vrot.lane.b32.xlu0 %v505, 65
    %v1026 = vpop.permute.xlu0 %1025
    %1027 = vrot.lane.b32.xlu0 %v506, 65
    %v1028 = vpop.permute.xlu0 %1027
    %1029 = vrot.lane.b32.xlu0 %v507, 65
    %v1030 = vpop.permute.xlu0 %1029
    %1031 = vrot.lane.b32.xlu0 %v508, 65
    %v1032 = vpop.permute.xlu0 %1031
    %1033 = vrot.lane.b32.xlu0 %v509, 65
    %v1034 = vpop.permute.xlu0 %1033
    %1035 = vrot.lane.b32.xlu0 %v510, 65
    %v1036 = vpop.permute.xlu0 %1035
    %1037 = vrot.lane.b32.xlu0 %v511, 65
    %v1038 = vpop.permute.xlu0 %1037
    %1039 = vrot.lane.b32.xlu0 %v512, 65
    %v1040 = vpop.permute.xlu0 %1039
    %v1041 = vsel %vm634, %v1026, %v1028
    %v1042 = vsel %vm634, %v1028, %v1030
    %v1043 = vsel %vm634, %v1030, %v1032
    %v1044 = vsel %vm634, %v1032, %v1034
    %v1045 = vsel %vm634, %v1034, %v1036
    %v1046 = vsel %vm634, %v1036, %v1038
    %v1047 = vsel %vm634, %v1038, %v1040
    %1055 = vst [vmem:[#allocation2] sm:$0x3] %v1041
    %1056 = vst [vmem:[#allocation2 + $0x8] sm:$0x3] %v1042
    %1057 = vst [vmem:[#allocation2 + $0x10] sm:$0x3] %v1043
    %1058 = vst [vmem:[#allocation2 + $0x18] sm:$0x3] %v1044
    %1059 = vst [vmem:[#allocation2 + $0x20] sm:$0x3] %v1045
    %1060 = vst [vmem:[#allocation2 + $0x28] sm:$0x3] %v1046
    %vm1061 = vcmask 582656
    %1062 = vst.msk [vmem:[#allocation2 + $0x30] sm:$0x3] %vm1061, %v1047
    %v1071 = vrot.slane %v577, 6
    %v1072 = vrot.slane %v578, 6
    %v1073 = vrot.slane %v579, 6
    %v1074 = vrot.slane %v580, 6
    %v1075 = vrot.slane %v581, 6
    %v1076 = vrot.slane %v582, 6
    %v1077 = vrot.slane %v583, 6
    %v1078 = vrot.slane %v584, 6
    %1079 = vrot.lane.b32.xlu0 %v1071, 64
    %v1080 = vpop.permute.xlu0 %1079
    %1081 = vrot.lane.b32.xlu0 %v1072, 64
    %v1082 = vpop.permute.xlu0 %1081
    %1083 = vrot.lane.b32.xlu0 %v1073, 64
    %v1084 = vpop.permute.xlu0 %1083
    %1085 = vrot.lane.b32.xlu0 %v1074, 64
    %v1086 = vpop.permute.xlu0 %1085
    %1087 = vrot.lane.b32.xlu0 %v1075, 64
    %v1088 = vpop.permute.xlu0 %1087
    %1089 = vrot.lane.b32.xlu0 %v1076, 64
    %v1090 = vpop.permute.xlu0 %1089
    %1091 = vrot.lane.b32.xlu0 %v1077, 64
    %v1092 = vpop.permute.xlu0 %1091
    %1093 = vrot.lane.b32.xlu0 %v1078, 64
    %v1094 = vpop.permute.xlu0 %1093
    %v1095 = vsel %vm562, %v1080, %v1082
    %v1096 = vsel %vm562, %v1082, %v1084
    %v1097 = vsel %vm562, %v1084, %v1086
    %v1098 = vsel %vm562, %v1086, %v1088
    %v1099 = vsel %vm562, %v1088, %v1090
    %v1100 = vsel %vm562, %v1090, %v1092
    %v1101 = vsel %vm562, %v1092, %v1094
    %1109 = vst [vmem:[#allocation2] sm:$0xc] %v1095
    %1110 = vst [vmem:[#allocation2 + $0x8] sm:$0xc] %v1096
    %1111 = vst [vmem:[#allocation2 + $0x10] sm:$0xc] %v1097
    %1112 = vst [vmem:[#allocation2 + $0x18] sm:$0xc] %v1098
    %1113 = vst [vmem:[#allocation2 + $0x20] sm:$0xc] %v1099
    %1114 = vst [vmem:[#allocation2 + $0x28] sm:$0xc] %v1100
    %vm1115 = vcmask 584706
    %1116 = vst.msk [vmem:[#allocation2 + $0x30] sm:$0xc] %vm1115, %v1101
    %v1125 = vrot.slane %v649, 4
    %v1126 = vrot.slane %v650, 4
    %v1127 = vrot.slane %v651, 4
    %v1128 = vrot.slane %v652, 4
    %v1129 = vrot.slane %v653, 4
    %v1130 = vrot.slane %v654, 4
    %v1131 = vrot.slane %v655, 4
    %v1132 = vrot.slane %v656, 4
    %1133 = vrot.lane.b32.xlu0 %v1125, 63
    %v1134 = vpop.permute.xlu0 %1133
    %1135 = vrot.lane.b32.xlu0 %v1126, 63
    %v1136 = vpop.permute.xlu0 %1135
    %1137 = vrot.lane.b32.xlu0 %v1127, 63
    %v1138 = vpop.permute.xlu0 %1137
    %1139 = vrot.lane.b32.xlu0 %v1128, 63
    %v1140 = vpop.permute.xlu0 %1139
    %1141 = vrot.lane.b32.xlu0 %v1129, 63
    %v1142 = vpop.permute.xlu0 %1141
    %1143 = vrot.lane.b32.xlu0 %v1130, 63
    %v1144 = vpop.permute.xlu0 %1143
    %1145 = vrot.lane.b32.xlu0 %v1131, 63
    %v1146 = vpop.permute.xlu0 %1145
    %1147 = vrot.lane.b32.xlu0 %v1132, 63
    %v1148 = vpop.permute.xlu0 %1147
    %v1149 = vsel %vm490, %v1134, %v1136
    %v1150 = vsel %vm490, %v1136, %v1138
    %v1151 = vsel %vm490, %v1138, %v1140
    %v1152 = vsel %vm490, %v1140, %v1142
    %v1153 = vsel %vm490, %v1142, %v1144
    %v1154 = vsel %vm490, %v1144, %v1146
    %v1155 = vsel %vm490, %v1146, %v1148
    %1163 = vst [vmem:[#allocation2] sm:$0x30] %v1149
    %1164 = vst [vmem:[#allocation2 + $0x8] sm:$0x30] %v1150
    %1165 = vst [vmem:[#allocation2 + $0x10] sm:$0x30] %v1151
    %1166 = vst [vmem:[#allocation2 + $0x18] sm:$0x30] %v1152
    %1167 = vst [vmem:[#allocation2 + $0x20] sm:$0x30] %v1153
    %1168 = vst [vmem:[#allocation2 + $0x28] sm:$0x30] %v1154
    %vm1169 = vcmask 586756
    %1170 = vst.msk [vmem:[#allocation2 + $0x30] sm:$0x30] %vm1169, %v1155
    %v1179 = vrot.slane %v721, 2
    %v1180 = vrot.slane %v722, 2
    %v1181 = vrot.slane %v723, 2
    %v1182 = vrot.slane %v724, 2
    %v1183 = vrot.slane %v725, 2
    %v1184 = vrot.slane %v726, 2
    %v1185 = vrot.slane %v727, 2
    %v1186 = vrot.slane %v728, 2
    %1187 = vrot.lane.b32.xlu0 %v1179, 57
    %v1188 = vpop.permute.xlu0 %1187
    %1189 = vrot.lane.b32.xlu0 %v1180, 57
    %v1190 = vpop.permute.xlu0 %1189
    %1191 = vrot.lane.b32.xlu0 %v1181, 57
    %v1192 = vpop.permute.xlu0 %1191
    %1193 = vrot.lane.b32.xlu0 %v1182, 57
    %v1194 = vpop.permute.xlu0 %1193
    %1195 = vrot.lane.b32.xlu0 %v1183, 57
    %v1196 = vpop.permute.xlu0 %1195
    %1197 = vrot.lane.b32.xlu0 %v1184, 57
    %v1198 = vpop.permute.xlu0 %1197
    %1199 = vrot.lane.b32.xlu0 %v1185, 57
    %v1200 = vpop.permute.xlu0 %1199
    %1201 = vrot.lane.b32.xlu0 %v1186, 57
    %v1202 = vpop.permute.xlu0 %1201
    %vm1203 = vcmask 465920
    %v1204 = vsel %vm1203, %v1188, %v1190
    %v1205 = vsel %vm1203, %v1190, %v1192
    %v1206 = vsel %vm1203, %v1192, %v1194
    %v1207 = vsel %vm1203, %v1194, %v1196
    %v1208 = vsel %vm1203, %v1196, %v1198
    %v1209 = vsel %vm1203, %v1198, %v1200
    %v1210 = vsel %vm1203, %v1200, %v1202
    %1218 = vst [vmem:[#allocation2] sm:$0xc0] %v1204
    %1219 = vst [vmem:[#allocation2 + $0x8] sm:$0xc0] %v1205
    %1220 = vst [vmem:[#allocation2 + $0x10] sm:$0xc0] %v1206
    %1221 = vst [vmem:[#allocation2 + $0x18] sm:$0xc0] %v1207
    %1222 = vst [vmem:[#allocation2 + $0x20] sm:$0xc0] %v1208
    %1223 = vst [vmem:[#allocation2 + $0x28] sm:$0xc0] %v1209
    %vm1224 = vcmask 588806
    %1225 = vst.msk [vmem:[#allocation2 + $0x30] sm:$0xc0] %vm1224, %v1210
    %1226 = vst [vmem:[#allocation2 + $0x38] sm:$0x3] %v203
    %1227 = vst [vmem:[#allocation2 + $0x40] sm:$0x3] %v205
    %1228 = vst [vmem:[#allocation2 + $0x48] sm:$0x3] %v274
    %1229 = vst [vmem:[#allocation2 + $0x50] sm:$0x3] %v276
    %1230 = vst [vmem:[#allocation2 + $0x58] sm:$0x3] %v345
    %1231 = vst [vmem:[#allocation2 + $0x60] sm:$0x3] %v347
    %1232 = vst.msk [vmem:[#allocation2 + $0x68] sm:$0x3] %vm1061, %v416
    %v1240 = vrot.slane %v792, 6
    %v1241 = vrot.slane %v793, 6
    %v1242 = vrot.slane %v794, 6
    %v1243 = vrot.slane %v795, 6
    %v1244 = vrot.slane %v796, 6
    %v1245 = vrot.slane %v797, 6
    %v1246 = vrot.slane %v798, 6
    %1247 = vrot.lane.b32.xlu0 %v1240, 127
    %v1248 = vpop.permute.xlu0 %1247
    %1249 = vrot.lane.b32.xlu0 %v1241, 127
    %v1250 = vpop.permute.xlu0 %1249
    %1251 = vrot.lane.b32.xlu0 %v1242, 127
    %v1252 = vpop.permute.xlu0 %1251
    %1253 = vrot.lane.b32.xlu0 %v1243, 127
    %v1254 = vpop.permute.xlu0 %1253
    %1255 = vrot.lane.b32.xlu0 %v1244, 127
    %v1256 = vpop.permute.xlu0 %1255
    %1257 = vrot.lane.b32.xlu0 %v1245, 127
    %v1258 = vpop.permute.xlu0 %1257
    %1259 = vrot.lane.b32.xlu0 %v1246, 127
    %v1260 = vpop.permute.xlu0 %1259
    %vm1261 = vcmask 1039360
    %v1262 = vsel %vm1261, %v1248, %v1250
    %v1263 = vsel %vm1261, %v1250, %v1252
    %v1264 = vsel %vm1261, %v1252, %v1254
    %v1265 = vsel %vm1261, %v1254, %v1256
    %v1266 = vsel %vm1261, %v1256, %v1258
    %v1267 = vsel %vm1261, %v1258, %v1260
    %1275 = vst [vmem:[#allocation2 + $0x38] sm:$0xc] %v1262
    %1276 = vst [vmem:[#allocation2 + $0x40] sm:$0xc] %v1263
    %1277 = vst [vmem:[#allocation2 + $0x48] sm:$0xc] %v1264
    %1278 = vst [vmem:[#allocation2 + $0x50] sm:$0xc] %v1265
    %1279 = vst [vmem:[#allocation2 + $0x58] sm:$0xc] %v1266
    %1280 = vst [vmem:[#allocation2 + $0x60] sm:$0xc] %v1267
    %1281 = vst.msk [vmem:[#allocation2 + $0x68] sm:$0xc] %vm1115, %v1260
    %v1289 = vrot.slane %v862, 4
    %v1290 = vrot.slane %v863, 4
    %v1291 = vrot.slane %v864, 4
    %v1292 = vrot.slane %v865, 4
    %v1293 = vrot.slane %v866, 4
    %v1294 = vrot.slane %v867, 4
    %v1295 = vrot.slane %v868, 4
    %1296 = vrot.lane.b32.xlu0 %v1289, 121
    %v1297 = vpop.permute.xlu0 %1296
    %1298 = vrot.lane.b32.xlu0 %v1290, 121
    %v1299 = vpop.permute.xlu0 %1298
    %1300 = vrot.lane.b32.xlu0 %v1291, 121
    %v1301 = vpop.permute.xlu0 %1300
    %1302 = vrot.lane.b32.xlu0 %v1292, 121
    %v1303 = vpop.permute.xlu0 %1302
    %1304 = vrot.lane.b32.xlu0 %v1293, 121
    %v1305 = vpop.permute.xlu0 %1304
    %1306 = vrot.lane.b32.xlu0 %v1294, 121
    %v1307 = vpop.permute.xlu0 %1306
    %1308 = vrot.lane.b32.xlu0 %v1295, 121
    %v1309 = vpop.permute.xlu0 %1308
    %vm1310 = vcmask 990208
    %v1311 = vsel %vm1310, %v1297, %v1299
    %v1312 = vsel %vm1310, %v1299, %v1301
    %v1313 = vsel %vm1310, %v1301, %v1303
    %v1314 = vsel %vm1310, %v1303, %v1305
    %v1315 = vsel %vm1310, %v1305, %v1307
    %v1316 = vsel %vm1310, %v1307, %v1309
    %1324 = vst [vmem:[#allocation2 + $0x38] sm:$0x30] %v1311
    %1325 = vst [vmem:[#allocation2 + $0x40] sm:$0x30] %v1312
    %1326 = vst [vmem:[#allocation2 + $0x48] sm:$0x30] %v1313
    %1327 = vst [vmem:[#allocation2 + $0x50] sm:$0x30] %v1314
    %1328 = vst [vmem:[#allocation2 + $0x58] sm:$0x30] %v1315
    %1329 = vst [vmem:[#allocation2 + $0x60] sm:$0x30] %v1316
    %1330 = vst.msk [vmem:[#allocation2 + $0x68] sm:$0x30] %vm1169, %v1309
    %v1338 = vrot.slane %v932, 2
    %v1339 = vrot.slane %v933, 2
    %v1340 = vrot.slane %v934, 2
    %v1341 = vrot.slane %v935, 2
    %v1342 = vrot.slane %v936, 2
    %v1343 = vrot.slane %v937, 2
    %v1344 = vrot.slane %v938, 2
    %1345 = vrot.lane.b32.xlu0 %v1338, 120
    %v1346 = vpop.permute.xlu0 %1345
    %1347 = vrot.lane.b32.xlu0 %v1339, 120
    %v1348 = vpop.permute.xlu0 %1347
    %1349 = vrot.lane.b32.xlu0 %v1340, 120
    %v1350 = vpop.permute.xlu0 %1349
    %1351 = vrot.lane.b32.xlu0 %v1341, 120
    %v1352 = vpop.permute.xlu0 %1351
    %1353 = vrot.lane.b32.xlu0 %v1342, 120
    %v1354 = vpop.permute.xlu0 %1353
    %1355 = vrot.lane.b32.xlu0 %v1343, 120
    %v1356 = vpop.permute.xlu0 %1355
    %1357 = vrot.lane.b32.xlu0 %v1344, 120
    %v1358 = vpop.permute.xlu0 %1357
    %vm1359 = vcmask 982016
    %v1360 = vsel %vm1359, %v1346, %v1348
    %v1361 = vsel %vm1359, %v1348, %v1350
    %v1362 = vsel %vm1359, %v1350, %v1352
    %v1363 = vsel %vm1359, %v1352, %v1354
    %v1364 = vsel %vm1359, %v1354, %v1356
    %v1365 = vsel %vm1359, %v1356, %v1358
    %1373 = vst [vmem:[#allocation2 + $0x38] sm:$0xc0] %v1360
    %1374 = vst [vmem:[#allocation2 + $0x40] sm:$0xc0] %v1361
    %1375 = vst [vmem:[#allocation2 + $0x48] sm:$0xc0] %v1362
    %1376 = vst [vmem:[#allocation2 + $0x50] sm:$0xc0] %v1363
    %1377 = vst [vmem:[#allocation2 + $0x58] sm:$0xc0] %v1364
    %1378 = vst [vmem:[#allocation2 + $0x60] sm:$0xc0] %v1365
    %1379 = vst.msk [vmem:[#allocation2 + $0x68] sm:$0xc0] %vm1224, %v1358
    %1387 = vrot.lane.b32.xlu0 %v1002, 119
    %v1388 = vpop.permute.xlu0 %1387
    %1389 = vrot.lane.b32.xlu0 %v1003, 119
    %v1390 = vpop.permute.xlu0 %1389
    %1391 = vrot.lane.b32.xlu0 %v1004, 119
    %v1392 = vpop.permute.xlu0 %1391
    %1393 = vrot.lane.b32.xlu0 %v1005, 119
    %v1394 = vpop.permute.xlu0 %1393
    %1395 = vrot.lane.b32.xlu0 %v1006, 119
    %v1396 = vpop.permute.xlu0 %1395
    %1397 = vrot.lane.b32.xlu0 %v1007, 119
    %v1398 = vpop.permute.xlu0 %1397
    %1399 = vrot.lane.b32.xlu0 %v1008, 119
    %v1400 = vpop.permute.xlu0 %1399
    %vm1401 = vcmask 973824
    %v1402 = vsel %vm1401, %v1388, %v1390
    %v1403 = vsel %vm1401, %v1390, %v1392
    %v1404 = vsel %vm1401, %v1392, %v1394
    %v1405 = vsel %vm1401, %v1394, %v1396
    %v1406 = vsel %vm1401, %v1396, %v1398
    %v1407 = vsel %vm1401, %v1398, %v1400
    %1415 = vst [vmem:[#allocation2 + $0x70] sm:$0x3] %v1402
    %1416 = vst [vmem:[#allocation2 + $0x78] sm:$0x3] %v1403
    %1417 = vst [vmem:[#allocation2 + $0x80] sm:$0x3] %v1404
    %1418 = vst [vmem:[#allocation2 + $0x88] sm:$0x3] %v1405
    %1419 = vst [vmem:[#allocation2 + $0x90] sm:$0x3] %v1406
    %1420 = vst [vmem:[#allocation2 + $0x98] sm:$0x3] %v1407
    %1421 = vst.msk [vmem:[#allocation2 + $0xa0] sm:$0x3] %vm1061, %v1400
    %v1422 = vld [vmem:[#allocation2] sm:$0xff]
    %v1423 = vld [vmem:[#allocation2 + $0x8] sm:$0xff]
    %v1424 = vld [vmem:[#allocation2 + $0x10] sm:$0xff]
    %v1425 = vld [vmem:[#allocation2 + $0x18] sm:$0xff]
    %v1426 = vld [vmem:[#allocation2 + $0x20] sm:$0xff]
    %v1427 = vld [vmem:[#allocation2 + $0x28] sm:$0xff]
    %v1428 = vld [vmem:[#allocation2 + $0x30] sm:$0xff]
    %v1429 = vld [vmem:[#allocation2 + $0x38] sm:$0xff]
    %v1430 = vld [vmem:[#allocation2 + $0x40] sm:$0xff]
    %v1431 = vld [vmem:[#allocation2 + $0x48] sm:$0xff]
    %v1432 = vld [vmem:[#allocation2 + $0x50] sm:$0xff]
    %v1433 = vld [vmem:[#allocation2 + $0x58] sm:$0xff]
    %v1434 = vld [vmem:[#allocation2 + $0x60] sm:$0xff]
    %v1435 = vld [vmem:[#allocation2 + $0x68] sm:$0xff]
    %v1436 = vld [vmem:[#allocation2 + $0x70] sm:$0x3]
    %v1437 = vld [vmem:[#allocation2 + $0x78] sm:$0x3]
    %v1438 = vld [vmem:[#allocation2 + $0x80] sm:$0x3]
    %v1439 = vld [vmem:[#allocation2 + $0x88] sm:$0x3]
    %v1440 = vld [vmem:[#allocation2 + $0x90] sm:$0x3]
    %v1441 = vld [vmem:[#allocation2 + $0x98] sm:$0x3]
    %v1442 = vld [vmem:[#allocation2 + $0xa0] sm:$0x3]
    %vm1443 = vcmask 146432
    %v1445 = vsel %vm1443, %v1009, 0
    %v1448 = vsel %vm1443, %v1010, 0
    %v1451 = vsel %vm1443, %v1011, 0
    %v1454 = vsel %vm1443, %v1012, 0
    %v1457 = vsel %vm1443, %v1013, 0
    %v1460 = vsel %vm1443, %v1014, 0
    %v1463 = vsel %vm1443, %v1015, 0
    %v1466 = vsel %vm1443, %v1016, 0
    %v1469 = vsel %vm114, %v1436, 0
    %v1472 = vsel %vm114, %v1437, 0
    %v1475 = vsel %vm114, %v1438, 0
    %v1478 = vsel %vm114, %v1439, 0
    %v1481 = vsel %vm114, %v1440, 0
    %v1484 = vsel %vm114, %v1441, 0
    %v1487 = vsel %vm114, %v1442, 0
    %1489 = vmatprep.subr.mxu0 %v1423
    %1490 = vmatpush1.msra.mxu0 %v1422
    %1491 = vmatprep.subr.mxu0 %v1430
    %1492 = vmatpush1.msra.mxu0 %v1429
    %1493 = vmatprep.subr.mxu0 %v1472
    %1494 = vmatpush1.msra.mxu0 %v1469
    %1495 = vmatprep.subr.mxu0 0.0
    %1496 = vmatpush1.msra.mxu0 0.0
    %1497 = vmatprep.subr.mxu0 0.0
    %1498 = vmatpush1.msra.mxu0 0.0
    %1499 = vmatprep.subr.mxu0 0.0
    %1500 = vmatpush1.msra.mxu0 0.0
    %1501 = vmatprep.subr.mxu0 0.0
    %1502 = vmatpush1.msra.mxu0 0.0
    %1503 = vmatprep.subr.mxu0 0.0
    %1504 = vmatpush1.msra.mxu0 0.0
    %1505 = vmatprep.subr.mxu0 0.0
    %1506 = vmatpush1.msra.mxu0 0.0
    %1507 = vmatprep.subr.mxu0 0.0
    %1508 = vmatpush1.msra.mxu0 0.0
    %1509 = vmatprep.subr.mxu0 0.0
    %1510 = vmatpush1.msra.mxu0 0.0
    %1511 = vmatprep.subr.mxu0 0.0
    %1512 = vmatpush1.msra.mxu0 0.0
    %1513 = vmatprep.subr.mxu0 0.0
    %1514 = vmatpush1.msra.mxu0 0.0
    %1515 = vmatprep.subr.mxu0 0.0
    %1516 = vmatpush1.msra.mxu0 0.0
    %1517 = vmatprep.subr.mxu0 0.0
    %1518 = vmatpush1.msra.mxu0 0.0
    %1519 = vmatprep.subr.mxu0 0.0
    %1520 = vmatpush1.msra.mxu0 0.0
    %1521 = vmatprep.subr.mxu0 0.0
    %1522 = vmatpush1.msra.mxu0 0.0
    %1523 = vmatprep.subr.mxu0 0.0
    %1524 = vmatpush1.msra.mxu0 0.0
    %1525 = vmatprep.subr.mxu0 0.0
    %1526 = vmatpush1.msra.mxu0 0.0
    %1527 = vmatprep.subr.mxu0 0.0
    %1528 = vmatpush1.msra.mxu0 0.0
    %1529 = vmatprep.subr.mxu0 0.0
    %1530 = vmatpush1.msra.mxu0 0.0
    %1531 = vmatprep.subr.mxu0 0.0
    %1532 = vmatpush1.msra.mxu0 0.0
    %1533 = vmatprep.subr.mxu0 0.0
    %1534 = vmatpush1.msra.mxu0 0.0
    %1535 = vmatprep.subr.mxu0 0.0
    %1536 = vmatpush1.msra.mxu0 0.0
    %1537 = vmatprep.subr.mxu0 0.0
    %1538 = vmatpush1.msra.mxu0 0.0
    %1539 = vmatprep.subr.mxu0 0.0
    %1540 = vmatpush1.msra.mxu0 0.0
    %1541 = vmatprep.subr.mxu0 0.0
    %1542 = vmatpush1.msra.mxu0 0.0
    %1543 = vmatprep.subr.mxu0 0.0
    %1544 = vmatpush1.msra.mxu0 0.0
    %1545 = vmatprep.subr.mxu0 0.0
    %1546 = vmatpush1.msra.mxu0 0.0
    %1547 = vmatprep.subr.mxu0 0.0
    %1548 = vmatpush1.msra.mxu0 0.0
    %1549 = vmatprep.subr.mxu0 0.0
    %1550 = vmatpush1.msra.mxu0 0.0
    %1551 = vmatprep.subr.mxu0 0.0
    %1552 = vmatpush1.msra.mxu0 0.0
    %1553 = vmatprep.mubr.f32.mxu0 0.0
    %1554 = vmatmul.mubr.f32.gmra.mrb[0].mxu0 %v1445
    %v1555 = vpop.f32.mrb[0].mxu0
    %v1556 = vadd.f32 0.0, %v1555
    %v1557 = vpop.f32.mrb[0].mxu0
    %v1558 = vadd.f32 0.0, %v1557
    %1559 = vmatprep.mubr.f32.mxu0 0.0
    %1560 = vmatmul.mubr.f32.gmra.mrb[0].mxu0 %v1448
    %v1561 = vpop.f32.mrb[0].mxu0
    %v1562 = vadd.f32 0.0, %v1561
    %v1563 = vpop.f32.mrb[0].mxu0
    %v1564 = vadd.f32 0.0, %v1563
    %1565 = vmatprep.mubr.f32.mxu0 0.0
    %1566 = vmatmul.mubr.f32.gmra.mrb[0].mxu0 %v1451
    %v1567 = vpop.f32.mrb[0].mxu0
    %v1568 = vadd.f32 0.0, %v1567
    %v1569 = vpop.f32.mrb[0].mxu0
    %v1570 = vadd.f32 0.0, %v1569
    %1571 = vmatprep.mubr.f32.mxu0 0.0
    %1572 = vmatmul.mubr.f32.gmra.mrb[0].mxu0 %v1454
    %v1573 = vpop.f32.mrb[0].mxu0
    %v1574 = vadd.f32 0.0, %v1573
    %v1575 = vpop.f32.mrb[0].mxu0
    %v1576 = vadd.f32 0.0, %v1575
    %1577 = vmatprep.mubr.f32.mxu0 0.0
    %1578 = vmatmul.mubr.f32.gmra.mrb[0].mxu0 %v1457
    %v1579 = vpop.f32.mrb[0].mxu0
    %v1580 = vadd.f32 0.0, %v1579
    %v1581 = vpop.f32.mrb[0].mxu0
    %v1582 = vadd.f32 0.0, %v1581
    %1583 = vmatprep.mubr.f32.mxu0 0.0
    %1584 = vmatmul.mubr.f32.gmra.mrb[0].mxu0 %v1460
    %v1585 = vpop.f32.mrb[0].mxu0
    %v1586 = vadd.f32 0.0, %v1585
    %v1587 = vpop.f32.mrb[0].mxu0
    %v1588 = vadd.f32 0.0, %v1587
    %1589 = vmatprep.mubr.f32.mxu0 0.0
    %1590 = vmatmul.mubr.f32.gmra.mrb[0].mxu0 %v1463
    %v1591 = vpop.f32.mrb[0].mxu0
    %v1592 = vadd.f32 0.0, %v1591
    %v1593 = vpop.f32.mrb[0].mxu0
    %v1594 = vadd.f32 0.0, %v1593
    %1595 = vmatprep.mubr.f32.mxu0 0.0
    %1596 = vmatmul.mubr.f32.gmra.mrb[0].mxu0 %v1466
    %v1597 = vpop.f32.mrb[0].mxu0
    %v1598 = vadd.f32 0.0, %v1597
    %v1599 = vpop.f32.mrb[0].mxu0
    %v1600 = vadd.f32 0.0, %v1599
    %1601 = vdwg.mxu0
    %1602 = vmatprep.subr.mxu0 %v1425
    %1603 = vmatpush1.msra.mxu0 %v1424
    %1604 = vmatprep.subr.mxu0 %v1432
    %1605 = vmatpush1.msra.mxu0 %v1431
    %1606 = vmatprep.subr.mxu0 %v1478
    %1607 = vmatpush1.msra.mxu0 %v1475
    %1608 = vmatprep.subr.mxu0 0.0
    %1609 = vmatpush1.msra.mxu0 0.0
    %1610 = vmatprep.subr.mxu0 0.0
    %1611 = vmatpush1.msra.mxu0 0.0
    %1612 = vmatprep.subr.mxu0 0.0
    %1613 = vmatpush1.msra.mxu0 0.0
    %1614 = vmatprep.subr.mxu0 0.0
    %1615 = vmatpush1.msra.mxu0 0.0
    %1616 = vmatprep.subr.mxu0 0.0
    %1617 = vmatpush1.msra.mxu0 0.0
    %1618 = vmatprep.subr.mxu0 0.0
    %1619 = vmatpush1.msra.mxu0 0.0
    %1620 = vmatprep.subr.mxu0 0.0
    %1621 = vmatpush1.msra.mxu0 0.0
    %1622 = vmatprep.subr.mxu0 0.0
    %1623 = vmatpush1.msra.mxu0 0.0
    %1624 = vmatprep.subr.mxu0 0.0
    %1625 = vmatpush1.msra.mxu0 0.0
    %1626 = vmatprep.subr.mxu0 0.0
    %1627 = vmatpush1.msra.mxu0 0.0
    %1628 = vmatprep.subr.mxu0 0.0
    %1629 = vmatpush1.msra.mxu0 0.0
    %1630 = vmatprep.subr.mxu0 0.0
    %1631 = vmatpush1.msra.mxu0 0.0
    %1632 = vmatprep.subr.mxu0 0.0
    %1633 = vmatpush1.msra.mxu0 0.0
    %1634 = vmatprep.subr.mxu0 0.0
    %1635 = vmatpush1.msra.mxu0 0.0
    %1636 = vmatprep.subr.mxu0 0.0
    %1637 = vmatpush1.msra.mxu0 0.0
    %1638 = vmatprep.subr.mxu0 0.0
    %1639 = vmatpush1.msra.mxu0 0.0
    %1640 = vmatprep.subr.mxu0 0.0
    %1641 = vmatpush1.msra.mxu0 0.0
    %1642 = vmatprep.subr.mxu0 0.0
    %1643 = vmatpush1.msra.mxu0 0.0
    %1644 = vmatprep.subr.mxu0 0.0
    %1645 = vmatpush1.msra.mxu0 0.0
    %1646 = vmatprep.subr.mxu0 0.0
    %1647 = vmatpush1.msra.mxu0 0.0
    %1648 = vmatprep.subr.mxu0 0.0
    %1649 = vmatpush1.msra.mxu0 0.0
    %1650 = vmatprep.subr.mxu0 0.0
    %1651 = vmatpush1.msra.mxu0 0.0
    %1652 = vmatprep.subr.mxu0 0.0
    %1653 = vmatpush1.msra.mxu0 0.0
    %1654 = vmatprep.subr.mxu0 0.0
    %1655 = vmatpush1.msra.mxu0 0.0
    %1656 = vmatprep.subr.mxu0 0.0
    %1657 = vmatpush1.msra.mxu0 0.0
    %1658 = vmatprep.subr.mxu0 0.0
    %1659 = vmatpush1.msra.mxu0 0.0
    %1660 = vmatprep.subr.mxu0 0.0
    %1661 = vmatpush1.msra.mxu0 0.0
    %1662 = vmatprep.subr.mxu0 0.0
    %1663 = vmatpush1.msra.mxu0 0.0
    %1664 = vmatprep.subr.mxu0 0.0
    %1665 = vmatpush1.msra.mxu0 0.0
    %1666 = vmatprep.mubr.f32.mxu0 0.0
    %1667 = vmatmul.mubr.f32.gmra.mrb[0].mxu0 %v1445
    %v1668 = vpop.f32.mrb[0].mxu0
    %v1669 = vadd.f32 0.0, %v1668
    %v1670 = vpop.f32.mrb[0].mxu0
    %v1671 = vadd.f32 0.0, %v1670
    %1672 = vmatprep.mubr.f32.mxu0 0.0
    %1673 = vmatmul.mubr.f32.gmra.mrb[0].mxu0 %v1448
    %v1674 = vpop.f32.mrb[0].mxu0
    %v1675 = vadd.f32 0.0, %v1674
    %v1676 = vpop.f32.mrb[0].mxu0
    %v1677 = vadd.f32 0.0, %v1676
    %1678 = vmatprep.mubr.f32.mxu0 0.0
    %1679 = vmatmul.mubr.f32.gmra.mrb[0].mxu0 %v1451
    %v1680 = vpop.f32.mrb[0].mxu0
    %v1681 = vadd.f32 0.0, %v1680
    %v1682 = vpop.f32.mrb[0].mxu0
    %v1683 = vadd.f32 0.0, %v1682
    %1684 = vmatprep.mubr.f32.mxu0 0.0
    %1685 = vmatmul.mubr.f32.gmra.mrb[0].mxu0 %v1454
    %v1686 = vpop.f32.mrb[0].mxu0
    %v1687 = vadd.f32 0.0, %v1686
    %v1688 = vpop.f32.mrb[0].mxu0
    %v1689 = vadd.f32 0.0, %v1688
    %1690 = vmatprep.mubr.f32.mxu0 0.0
    %1691 = vmatmul.mubr.f32.gmra.mrb[0].mxu0 %v1457
    %v1692 = vpop.f32.mrb[0].mxu0
    %v1693 = vadd.f32 0.0, %v1692
    %v1694 = vpop.f32.mrb[0].mxu0
    %v1695 = vadd.f32 0.0, %v1694
    %1696 = vmatprep.mubr.f32.mxu0 0.0
    %1697 = vmatmul.mubr.f32.gmra.mrb[0].mxu0 %v1460
    %v1698 = vpop.f32.mrb[0].mxu0
    %v1699 = vadd.f32 0.0, %v1698
    %v1700 = vpop.f32.mrb[0].mxu0
    %v1701 = vadd.f32 0.0, %v1700
    %1702 = vmatprep.mubr.f32.mxu0 0.0
    %1703 = vmatmul.mubr.f32.gmra.mrb[0].mxu0 %v1463
    %v1704 = vpop.f32.mrb[0].mxu0
    %v1705 = vadd.f32 0.0, %v1704
    %v1706 = vpop.f32.mrb[0].mxu0
    %v1707 = vadd.f32 0.0, %v1706
    %1708 = vmatprep.mubr.f32.mxu0 0.0
    %1709 = vmatmul.mubr.f32.gmra.mrb[0].mxu0 %v1466
    %v1710 = vpop.f32.mrb[0].mxu0
    %v1711 = vadd.f32 0.0, %v1710
    %v1712 = vpop.f32.mrb[0].mxu0
    %v1713 = vadd.f32 0.0, %v1712
    %1714 = vdwg.mxu0
    %1715 = vmatprep.subr.mxu0 %v1427
    %1716 = vmatpush1.msra.mxu0 %v1426
    %1717 = vmatprep.subr.mxu0 %v1434
    %1718 = vmatpush1.msra.mxu0 %v1433
    %1719 = vmatprep.subr.mxu0 %v1484
    %1720 = vmatpush1.msra.mxu0 %v1481
    %1721 = vmatprep.subr.mxu0 0.0
    %1722 = vmatpush1.msra.mxu0 0.0
    %1723 = vmatprep.subr.mxu0 0.0
    %1724 = vmatpush1.msra.mxu0 0.0
    %1725 = vmatprep.subr.mxu0 0.0
    %1726 = vmatpush1.msra.mxu0 0.0
    %1727 = vmatprep.subr.mxu0 0.0
    %1728 = vmatpush1.msra.mxu0 0.0
    %1729 = vmatprep.subr.mxu0 0.0
    %1730 = vmatpush1.msra.mxu0 0.0
    %1731 = vmatprep.subr.mxu0 0.0
    %1732 = vmatpush1.msra.mxu0 0.0
    %1733 = vmatprep.subr.mxu0 0.0
    %1734 = vmatpush1.msra.mxu0 0.0
    %1735 = vmatprep.subr.mxu0 0.0
    %1736 = vmatpush1.msra.mxu0 0.0
    %1737 = vmatprep.subr.mxu0 0.0
    %1738 = vmatpush1.msra.mxu0 0.0
    %1739 = vmatprep.subr.mxu0 0.0
    %1740 = vmatpush1.msra.mxu0 0.0
    %1741 = vmatprep.subr.mxu0 0.0
    %1742 = vmatpush1.msra.mxu0 0.0
    %1743 = vmatprep.subr.mxu0 0.0
    %1744 = vmatpush1.msra.mxu0 0.0
    %1745 = vmatprep.subr.mxu0 0.0
    %1746 = vmatpush1.msra.mxu0 0.0
    %1747 = vmatprep.subr.mxu0 0.0
    %1748 = vmatpush1.msra.mxu0 0.0
    %1749 = vmatprep.subr.mxu0 0.0
    %1750 = vmatpush1.msra.mxu0 0.0
    %1751 = vmatprep.subr.mxu0 0.0
    %1752 = vmatpush1.msra.mxu0 0.0
    %1753 = vmatprep.subr.mxu0 0.0
    %1754 = vmatpush1.msra.mxu0 0.0
    %1755 = vmatprep.subr.mxu0 0.0
    %1756 = vmatpush1.msra.mxu0 0.0
    %1757 = vmatprep.subr.mxu0 0.0
    %1758 = vmatpush1.msra.mxu0 0.0
    %1759 = vmatprep.subr.mxu0 0.0
    %1760 = vmatpush1.msra.mxu0 0.0
    %1761 = vmatprep.subr.mxu0 0.0
    %1762 = vmatpush1.msra.mxu0 0.0
    %1763 = vmatprep.subr.mxu0 0.0
    %1764 = vmatpush1.msra.mxu0 0.0
    %1765 = vmatprep.subr.mxu0 0.0
    %1766 = vmatpush1.msra.mxu0 0.0
    %1767 = vmatprep.subr.mxu0 0.0
    %1768 = vmatpush1.msra.mxu0 0.0
    %1769 = vmatprep.subr.mxu0 0.0
    %1770 = vmatpush1.msra.mxu0 0.0
    %1771 = vmatprep.subr.mxu0 0.0
    %1772 = vmatpush1.msra.mxu0 0.0
    %1773 = vmatprep.subr.mxu0 0.0
    %1774 = vmatpush1.msra.mxu0 0.0
    %1775 = vmatprep.subr.mxu0 0.0
    %1776 = vmatpush1.msra.mxu0 0.0
    %1777 = vmatprep.subr.mxu0 0.0
    %1778 = vmatpush1.msra.mxu0 0.0
    %1779 = vmatprep.mubr.f32.mxu0 0.0
    %1780 = vmatmul.mubr.f32.gmra.mrb[0].mxu0 %v1445
    %v1781 = vpop.f32.mrb[0].mxu0
    %v1782 = vadd.f32 0.0, %v1781
    %v1783 = vpop.f32.mrb[0].mxu0
    %v1784 = vadd.f32 0.0, %v1783
    %1785 = vmatprep.mubr.f32.mxu0 0.0
    %1786 = vmatmul.mubr.f32.gmra.mrb[0].mxu0 %v1448
    %v1787 = vpop.f32.mrb[0].mxu0
    %v1788 = vadd.f32 0.0, %v1787
    %v1789 = vpop.f32.mrb[0].mxu0
    %v1790 = vadd.f32 0.0, %v1789
    %1791 = vmatprep.mubr.f32.mxu0 0.0
    %1792 = vmatmul.mubr.f32.gmra.mrb[0].mxu0 %v1451
    %v1793 = vpop.f32.mrb[0].mxu0
    %v1794 = vadd.f32 0.0, %v1793
    %v1795 = vpop.f32.mrb[0].mxu0
    %v1796 = vadd.f32 0.0, %v1795
    %1797 = vmatprep.mubr.f32.mxu0 0.0
    %1798 = vmatmul.mubr.f32.gmra.mrb[0].mxu0 %v1454
    %v1799 = vpop.f32.mrb[0].mxu0
    %v1800 = vadd.f32 0.0, %v1799
    %v1801 = vpop.f32.mrb[0].mxu0
    %v1802 = vadd.f32 0.0, %v1801
    %1803 = vmatprep.mubr.f32.mxu0 0.0
    %1804 = vmatmul.mubr.f32.gmra.mrb[0].mxu0 %v1457
    %v1805 = vpop.f32.mrb[0].mxu0
    %v1806 = vadd.f32 0.0, %v1805
    %v1807 = vpop.f32.mrb[0].mxu0
    %v1808 = vadd.f32 0.0, %v1807
    %1809 = vmatprep.mubr.f32.mxu0 0.0
    %1810 = vmatmul.mubr.f32.gmra.mrb[0].mxu0 %v1460
    %v1811 = vpop.f32.mrb[0].mxu0
    %v1812 = vadd.f32 0.0, %v1811
    %v1813 = vpop.f32.mrb[0].mxu0
    %v1814 = vadd.f32 0.0, %v1813
    %1815 = vmatprep.mubr.f32.mxu0 0.0
    %1816 = vmatmul.mubr.f32.gmra.mrb[0].mxu0 %v1463
    %v1817 = vpop.f32.mrb[0].mxu0
    %v1818 = vadd.f32 0.0, %v1817
    %v1819 = vpop.f32.mrb[0].mxu0
    %v1820 = vadd.f32 0.0, %v1819
    %1821 = vmatprep.mubr.f32.mxu0 0.0
    %1822 = vmatmul.mubr.f32.gmra.mrb[0].mxu0 %v1466
    %v1823 = vpop.f32.mrb[0].mxu0
    %v1824 = vadd.f32 0.0, %v1823
    %v1825 = vpop.f32.mrb[0].mxu0
    %v1826 = vadd.f32 0.0, %v1825
    %1827 = vdwg.mxu0
    %1828 = vmatprep.subr.mxu0 0.0
    %1829 = vmatpush1.msra.mxu0 %v1428
    %1830 = vmatprep.subr.mxu0 0.0
    %1831 = vmatpush1.msra.mxu0 %v1435
    %1832 = vmatprep.subr.mxu0 0.0
    %1833 = vmatpush1.msra.mxu0 %v1487
    %1834 = vmatprep.subr.mxu0 0.0
    %1835 = vmatpush1.msra.mxu0 0.0
    %1836 = vmatprep.subr.mxu0 0.0
    %1837 = vmatpush1.msra.mxu0 0.0
    %1838 = vmatprep.subr.mxu0 0.0
    %1839 = vmatpush1.msra.mxu0 0.0
    %1840 = vmatprep.subr.mxu0 0.0
    %1841 = vmatpush1.msra.mxu0 0.0
    %1842 = vmatprep.subr.mxu0 0.0
    %1843 = vmatpush1.msra.mxu0 0.0
    %1844 = vmatprep.subr.mxu0 0.0
    %1845 = vmatpush1.msra.mxu0 0.0
    %1846 = vmatprep.subr.mxu0 0.0
    %1847 = vmatpush1.msra.mxu0 0.0
    %1848 = vmatprep.subr.mxu0 0.0
    %1849 = vmatpush1.msra.mxu0 0.0
    %1850 = vmatprep.subr.mxu0 0.0
    %1851 = vmatpush1.msra.mxu0 0.0
    %1852 = vmatprep.subr.mxu0 0.0
    %1853 = vmatpush1.msra.mxu0 0.0
    %1854 = vmatprep.subr.mxu0 0.0
    %1855 = vmatpush1.msra.mxu0 0.0
    %1856 = vmatprep.subr.mxu0 0.0
    %1857 = vmatpush1.msra.mxu0 0.0
    %1858 = vmatprep.subr.mxu0 0.0
    %1859 = vmatpush1.msra.mxu0 0.0
    %1860 = vmatprep.subr.mxu0 0.0
    %1861 = vmatpush1.msra.mxu0 0.0
    %1862 = vmatprep.subr.mxu0 0.0
    %1863 = vmatpush1.msra.mxu0 0.0
    %1864 = vmatprep.subr.mxu0 0.0
    %1865 = vmatpush1.msra.mxu0 0.0
    %1866 = vmatprep.subr.mxu0 0.0
    %1867 = vmatpush1.msra.mxu0 0.0
    %1868 = vmatprep.subr.mxu0 0.0
    %1869 = vmatpush1.msra.mxu0 0.0
    %1870 = vmatprep.subr.mxu0 0.0
    %1871 = vmatpush1.msra.mxu0 0.0
    %1872 = vmatprep.subr.mxu0 0.0
    %1873 = vmatpush1.msra.mxu0 0.0
    %1874 = vmatprep.subr.mxu0 0.0
    %1875 = vmatpush1.msra.mxu0 0.0
    %1876 = vmatprep.subr.mxu0 0.0
    %1877 = vmatpush1.msra.mxu0 0.0
    %1878 = vmatprep.subr.mxu0 0.0
    %1879 = vmatpush1.msra.mxu0 0.0
    %1880 = vmatprep.subr.mxu0 0.0
    %1881 = vmatpush1.msra.mxu0 0.0
    %1882 = vmatprep.subr.mxu0 0.0
    %1883 = vmatpush1.msra.mxu0 0.0
    %1884 = vmatprep.subr.mxu0 0.0
    %1885 = vmatpush1.msra.mxu0 0.0
    %1886 = vmatprep.subr.mxu0 0.0
    %1887 = vmatpush1.msra.mxu0 0.0
    %1888 = vmatprep.subr.mxu0 0.0
    %1889 = vmatpush1.msra.mxu0 0.0
    %1890 = vmatprep.subr.mxu0 0.0
    %1891 = vmatpush1.msra.mxu0 0.0
    %1892 = vmatprep.mubr.f32.mxu0 0.0
    %1893 = vmatmul.mubr.f32.gmra.mrb[0].mxu0 %v1445
    %v1894 = vpop.f32.mrb[0].mxu0
    %v1895 = vadd.f32 0.0, %v1894
    %v1896 = vpop.f32.mrb[0].mxu0
    %1897 = vmatprep.mubr.f32.mxu0 0.0
    %1898 = vmatmul.mubr.f32.gmra.mrb[0].mxu0 %v1448
    %v1899 = vpop.f32.mrb[0].mxu0
    %v1900 = vadd.f32 0.0, %v1899
    %v1901 = vpop.f32.mrb[0].mxu0
    %1902 = vmatprep.mubr.f32.mxu0 0.0
    %1903 = vmatmul.mubr.f32.gmra.mrb[0].mxu0 %v1451
    %v1904 = vpop.f32.mrb[0].mxu0
    %v1905 = vadd.f32 0.0, %v1904
    %v1906 = vpop.f32.mrb[0].mxu0
    %1907 = vmatprep.mubr.f32.mxu0 0.0
    %1908 = vmatmul.mubr.f32.gmra.mrb[0].mxu0 %v1454
    %v1909 = vpop.f32.mrb[0].mxu0
    %v1910 = vadd.f32 0.0, %v1909
    %v1911 = vpop.f32.mrb[0].mxu0
    %1912 = vmatprep.mubr.f32.mxu0 0.0
    %1913 = vmatmul.mubr.f32.gmra.mrb[0].mxu0 %v1457
    %v1914 = vpop.f32.mrb[0].mxu0
    %v1915 = vadd.f32 0.0, %v1914
    %v1916 = vpop.f32.mrb[0].mxu0
    %1917 = vmatprep.mubr.f32.mxu0 0.0
    %1918 = vmatmul.mubr.f32.gmra.mrb[0].mxu0 %v1460
    %v1919 = vpop.f32.mrb[0].mxu0
    %v1920 = vadd.f32 0.0, %v1919
    %v1921 = vpop.f32.mrb[0].mxu0
    %1922 = vmatprep.mubr.f32.mxu0 0.0
    %1923 = vmatmul.mubr.f32.gmra.mrb[0].mxu0 %v1463
    %v1924 = vpop.f32.mrb[0].mxu0
    %v1925 = vadd.f32 0.0, %v1924
    %v1926 = vpop.f32.mrb[0].mxu0
    %1927 = vmatprep.mubr.f32.mxu0 0.0
    %1928 = vmatmul.mubr.f32.gmra.mrb[0].mxu0 %v1466
    %v1929 = vpop.f32.mrb[0].mxu0
    %v1930 = vadd.f32 0.0, %v1929
    %v1931 = vpop.f32.mrb[0].mxu0
    %1932 = vdwg.mxu0
    %v1933 = vrot.slane %v505, 2
    %v1934 = vrot.slane %v506, 2
    %v1935 = vrot.slane %v507, 2
    %v1936 = vrot.slane %v508, 2
    %v1937 = vrot.slane %v509, 2
    %v1938 = vrot.slane %v510, 2
    %v1939 = vrot.slane %v511, 2
    %v1940 = vrot.slane %v512, 2
    %1941 = vrot.lane.b32.xlu0 %v1933, 65
    %v1942 = vpop.permute.xlu0 %1941
    %1943 = vrot.lane.b32.xlu0 %v1934, 65
    %v1944 = vpop.permute.xlu0 %1943
    %1945 = vrot.lane.b32.xlu0 %v1935, 65
    %v1946 = vpop.permute.xlu0 %1945
    %1947 = vrot.lane.b32.xlu0 %v1936, 65
    %v1948 = vpop.permute.xlu0 %1947
    %1949 = vrot.lane.b32.xlu0 %v1937, 65
    %v1950 = vpop.permute.xlu0 %1949
    %1951 = vrot.lane.b32.xlu0 %v1938, 65
    %v1952 = vpop.permute.xlu0 %1951
    %1953 = vrot.lane.b32.xlu0 %v1939, 65
    %v1954 = vpop.permute.xlu0 %1953
    %1955 = vrot.lane.b32.xlu0 %v1940, 65
    %v1956 = vpop.permute.xlu0 %1955
    %v1957 = vsel %vm634, %v1942, %v1944
    %v1958 = vsel %vm634, %v1944, %v1946
    %v1959 = vsel %vm634, %v1946, %v1948
    %v1960 = vsel %vm634, %v1948, %v1950
    %v1961 = vsel %vm634, %v1950, %v1952
    %v1962 = vsel %vm634, %v1952, %v1954
    %v1963 = vsel %vm634, %v1954, %v1956
    %1971 = vst [vmem:[#allocation2] sm:$0x3] %v1957
    %1972 = vst [vmem:[#allocation2 + $0x8] sm:$0x3] %v1958
    %1973 = vst [vmem:[#allocation2 + $0x10] sm:$0x3] %v1959
    %1974 = vst [vmem:[#allocation2 + $0x18] sm:$0x3] %v1960
    %1975 = vst [vmem:[#allocation2 + $0x20] sm:$0x3] %v1961
    %1976 = vst [vmem:[#allocation2 + $0x28] sm:$0x3] %v1962
    %1977 = vst.msk [vmem:[#allocation2 + $0x30] sm:$0x3] %vm1061, %v1963
    %1978 = vrot.lane.b32.xlu0 %v577, 64
    %v1979 = vpop.permute.xlu0 %1978
    %1980 = vrot.lane.b32.xlu0 %v578, 64
    %v1981 = vpop.permute.xlu0 %1980
    %1982 = vrot.lane.b32.xlu0 %v579, 64
    %v1983 = vpop.permute.xlu0 %1982
    %1984 = vrot.lane.b32.xlu0 %v580, 64
    %v1985 = vpop.permute.xlu0 %1984
    %1986 = vrot.lane.b32.xlu0 %v581, 64
    %v1987 = vpop.permute.xlu0 %1986
    %1988 = vrot.lane.b32.xlu0 %v582, 64
    %v1989 = vpop.permute.xlu0 %1988
    %1990 = vrot.lane.b32.xlu0 %v583, 64
    %v1991 = vpop.permute.xlu0 %1990
    %1992 = vrot.lane.b32.xlu0 %v584, 64
    %v1993 = vpop.permute.xlu0 %1992
    %v1994 = vsel %vm562, %v1979, %v1981
    %v1995 = vsel %vm562, %v1981, %v1983
    %v1996 = vsel %vm562, %v1983, %v1985
    %v1997 = vsel %vm562, %v1985, %v1987
    %v1998 = vsel %vm562, %v1987, %v1989
    %v1999 = vsel %vm562, %v1989, %v1991
    %v2000 = vsel %vm562, %v1991, %v1993
    %2008 = vst [vmem:[#allocation2] sm:$0xc] %v1994
    %2009 = vst [vmem:[#allocation2 + $0x8] sm:$0xc] %v1995
    %2010 = vst [vmem:[#allocation2 + $0x10] sm:$0xc] %v1996
    %2011 = vst [vmem:[#allocation2 + $0x18] sm:$0xc] %v1997
    %2012 = vst [vmem:[#allocation2 + $0x20] sm:$0xc] %v1998
    %2013 = vst [vmem:[#allocation2 + $0x28] sm:$0xc] %v1999
    %2014 = vst.msk [vmem:[#allocation2 + $0x30] sm:$0xc] %vm1115, %v2000
    %v2015 = vrot.slane %v649, 6
    %v2016 = vrot.slane %v650, 6
    %v2017 = vrot.slane %v651, 6
    %v2018 = vrot.slane %v652, 6
    %v2019 = vrot.slane %v653, 6
    %v2020 = vrot.slane %v654, 6
    %v2021 = vrot.slane %v655, 6
    %v2022 = vrot.slane %v656, 6
    %2023 = vrot.lane.b32.xlu0 %v2015, 63
    %v2024 = vpop.permute.xlu0 %2023
    %2025 = vrot.lane.b32.xlu0 %v2016, 63
    %v2026 = vpop.permute.xlu0 %2025
    %2027 = vrot.lane.b32.xlu0 %v2017, 63
    %v2028 = vpop.permute.xlu0 %2027
    %2029 = vrot.lane.b32.xlu0 %v2018, 63
    %v2030 = vpop.permute.xlu0 %2029
    %2031 = vrot.lane.b32.xlu0 %v2019, 63
    %v2032 = vpop.permute.xlu0 %2031
    %2033 = vrot.lane.b32.xlu0 %v2020, 63
    %v2034 = vpop.permute.xlu0 %2033
    %2035 = vrot.lane.b32.xlu0 %v2021, 63
    %v2036 = vpop.permute.xlu0 %2035
    %2037 = vrot.lane.b32.xlu0 %v2022, 63
    %v2038 = vpop.permute.xlu0 %2037
    %v2039 = vsel %vm490, %v2024, %v2026
    %v2040 = vsel %vm490, %v2026, %v2028
    %v2041 = vsel %vm490, %v2028, %v2030
    %v2042 = vsel %vm490, %v2030, %v2032
    %v2043 = vsel %vm490, %v2032, %v2034
    %v2044 = vsel %vm490, %v2034, %v2036
    %v2045 = vsel %vm490, %v2036, %v2038
    %2053 = vst [vmem:[#allocation2] sm:$0x30] %v2039
    %2054 = vst [vmem:[#allocation2 + $0x8] sm:$0x30] %v2040
    %2055 = vst [vmem:[#allocation2 + $0x10] sm:$0x30] %v2041
    %2056 = vst [vmem:[#allocation2 + $0x18] sm:$0x30] %v2042
    %2057 = vst [vmem:[#allocation2 + $0x20] sm:$0x30] %v2043
    %2058 = vst [vmem:[#allocation2 + $0x28] sm:$0x30] %v2044
    %2059 = vst.msk [vmem:[#allocation2 + $0x30] sm:$0x30] %vm1169, %v2045
    %v2060 = vrot.slane %v721, 4
    %v2061 = vrot.slane %v722, 4
    %v2062 = vrot.slane %v723, 4
    %v2063 = vrot.slane %v724, 4
    %v2064 = vrot.slane %v725, 4
    %v2065 = vrot.slane %v726, 4
    %v2066 = vrot.slane %v727, 4
    %v2067 = vrot.slane %v728, 4
    %2068 = vrot.lane.b32.xlu0 %v2060, 57
    %v2069 = vpop.permute.xlu0 %2068
    %2070 = vrot.lane.b32.xlu0 %v2061, 57
    %v2071 = vpop.permute.xlu0 %2070
    %2072 = vrot.lane.b32.xlu0 %v2062, 57
    %v2073 = vpop.permute.xlu0 %2072
    %2074 = vrot.lane.b32.xlu0 %v2063, 57
    %v2075 = vpop.permute.xlu0 %2074
    %2076 = vrot.lane.b32.xlu0 %v2064, 57
    %v2077 = vpop.permute.xlu0 %2076
    %2078 = vrot.lane.b32.xlu0 %v2065, 57
    %v2079 = vpop.permute.xlu0 %2078
    %2080 = vrot.lane.b32.xlu0 %v2066, 57
    %v2081 = vpop.permute.xlu0 %2080
    %2082 = vrot.lane.b32.xlu0 %v2067, 57
    %v2083 = vpop.permute.xlu0 %2082
    %v2084 = vsel %vm1203, %v2069, %v2071
    %v2085 = vsel %vm1203, %v2071, %v2073
    %v2086 = vsel %vm1203, %v2073, %v2075
    %v2087 = vsel %vm1203, %v2075, %v2077
    %v2088 = vsel %vm1203, %v2077, %v2079
    %v2089 = vsel %vm1203, %v2079, %v2081
    %v2090 = vsel %vm1203, %v2081, %v2083
    %2098 = vst [vmem:[#allocation2] sm:$0xc0] %v2084
    %2099 = vst [vmem:[#allocation2 + $0x8] sm:$0xc0] %v2085
    %2100 = vst [vmem:[#allocation2 + $0x10] sm:$0xc0] %v2086
    %2101 = vst [vmem:[#allocation2 + $0x18] sm:$0xc0] %v2087
    %2102 = vst [vmem:[#allocation2 + $0x20] sm:$0xc0] %v2088
    %2103 = vst [vmem:[#allocation2 + $0x28] sm:$0xc0] %v2089
    %2104 = vst.msk [vmem:[#allocation2 + $0x30] sm:$0xc0] %vm1224, %v2090
    %v2112 = vrot.slane %v203, 2
    %v2113 = vrot.slane %v205, 2
    %v2114 = vrot.slane %v274, 2
    %v2115 = vrot.slane %v276, 2
    %v2116 = vrot.slane %v345, 2
    %v2117 = vrot.slane %v347, 2
    %v2118 = vrot.slane %v416, 2
    %2126 = vst [vmem:[#allocation2 + $0x38] sm:$0x3] %v2112
    %2127 = vst [vmem:[#allocation2 + $0x40] sm:$0x3] %v2113
    %2128 = vst [vmem:[#allocation2 + $0x48] sm:$0x3] %v2114
    %2129 = vst [vmem:[#allocation2 + $0x50] sm:$0x3] %v2115
    %2130 = vst [vmem:[#allocation2 + $0x58] sm:$0x3] %v2116
    %2131 = vst [vmem:[#allocation2 + $0x60] sm:$0x3] %v2117
    %2132 = vst.msk [vmem:[#allocation2 + $0x68] sm:$0x3] %vm1061, %v2118
    %2133 = vrot.lane.b32.xlu0 %v792, 127
    %v2134 = vpop.permute.xlu0 %2133
    %2135 = vrot.lane.b32.xlu0 %v793, 127
    %v2136 = vpop.permute.xlu0 %2135
    %2137 = vrot.lane.b32.xlu0 %v794, 127
    %v2138 = vpop.permute.xlu0 %2137
    %2139 = vrot.lane.b32.xlu0 %v795, 127
    %v2140 = vpop.permute.xlu0 %2139
    %2141 = vrot.lane.b32.xlu0 %v796, 127
    %v2142 = vpop.permute.xlu0 %2141
    %2143 = vrot.lane.b32.xlu0 %v797, 127
    %v2144 = vpop.permute.xlu0 %2143
    %2145 = vrot.lane.b32.xlu0 %v798, 127
    %v2146 = vpop.permute.xlu0 %2145
    %v2147 = vsel %vm1261, %v2134, %v2136
    %v2148 = vsel %vm1261, %v2136, %v2138
    %v2149 = vsel %vm1261, %v2138, %v2140
    %v2150 = vsel %vm1261, %v2140, %v2142
    %v2151 = vsel %vm1261, %v2142, %v2144
    %v2152 = vsel %vm1261, %v2144, %v2146
    %2160 = vst [vmem:[#allocation2 + $0x38] sm:$0xc] %v2147
    %2161 = vst [vmem:[#allocation2 + $0x40] sm:$0xc] %v2148
    %2162 = vst [vmem:[#allocation2 + $0x48] sm:$0xc] %v2149
    %2163 = vst [vmem:[#allocation2 + $0x50] sm:$0xc] %v2150
    %2164 = vst [vmem:[#allocation2 + $0x58] sm:$0xc] %v2151
    %2165 = vst [vmem:[#allocation2 + $0x60] sm:$0xc] %v2152
    %2166 = vst.msk [vmem:[#allocation2 + $0x68] sm:$0xc] %vm1115, %v2146
    %v2167 = vrot.slane %v862, 6
    %v2168 = vrot.slane %v863, 6
    %v2169 = vrot.slane %v864, 6
    %v2170 = vrot.slane %v865, 6
    %v2171 = vrot.slane %v866, 6
    %v2172 = vrot.slane %v867, 6
    %v2173 = vrot.slane %v868, 6
    %2174 = vrot.lane.b32.xlu0 %v2167, 121
    %v2175 = vpop.permute.xlu0 %2174
    %2176 = vrot.lane.b32.xlu0 %v2168, 121
    %v2177 = vpop.permute.xlu0 %2176
    %2178 = vrot.lane.b32.xlu0 %v2169, 121
    %v2179 = vpop.permute.xlu0 %2178
    %2180 = vrot.lane.b32.xlu0 %v2170, 121
    %v2181 = vpop.permute.xlu0 %2180
    %2182 = vrot.lane.b32.xlu0 %v2171, 121
    %v2183 = vpop.permute.xlu0 %2182
    %2184 = vrot.lane.b32.xlu0 %v2172, 121
    %v2185 = vpop.permute.xlu0 %2184
    %2186 = vrot.lane.b32.xlu0 %v2173, 121
    %v2187 = vpop.permute.xlu0 %2186
    %v2188 = vsel %vm1310, %v2175, %v2177
    %v2189 = vsel %vm1310, %v2177, %v2179
    %v2190 = vsel %vm1310, %v2179, %v2181
    %v2191 = vsel %vm1310, %v2181, %v2183
    %v2192 = vsel %vm1310, %v2183, %v2185
    %v2193 = vsel %vm1310, %v2185, %v2187
    %2201 = vst [vmem:[#allocation2 + $0x38] sm:$0x30] %v2188
    %2202 = vst [vmem:[#allocation2 + $0x40] sm:$0x30] %v2189
    %2203 = vst [vmem:[#allocation2 + $0x48] sm:$0x30] %v2190
    %2204 = vst [vmem:[#allocation2 + $0x50] sm:$0x30] %v2191
    %2205 = vst [vmem:[#allocation2 + $0x58] sm:$0x30] %v2192
    %2206 = vst [vmem:[#allocation2 + $0x60] sm:$0x30] %v2193
    %2207 = vst.msk [vmem:[#allocation2 + $0x68] sm:$0x30] %vm1169, %v2187
    %v2208 = vrot.slane %v932, 4
    %v2209 = vrot.slane %v933, 4
    %v2210 = vrot.slane %v934, 4
    %v2211 = vrot.slane %v935, 4
    %v2212 = vrot.slane %v936, 4
    %v2213 = vrot.slane %v937, 4
    %v2214 = vrot.slane %v938, 4
    %2215 = vrot.lane.b32.xlu0 %v2208, 120
    %v2216 = vpop.permute.xlu0 %2215
    %2217 = vrot.lane.b32.xlu0 %v2209, 120
    %v2218 = vpop.permute.xlu0 %2217
    %2219 = vrot.lane.b32.xlu0 %v2210, 120
    %v2220 = vpop.permute.xlu0 %2219
    %2221 = vrot.lane.b32.xlu0 %v2211, 120
    %v2222 = vpop.permute.xlu0 %2221
    %2223 = vrot.lane.b32.xlu0 %v2212, 120
    %v2224 = vpop.permute.xlu0 %2223
    %2225 = vrot.lane.b32.xlu0 %v2213, 120
    %v2226 = vpop.permute.xlu0 %2225
    %2227 = vrot.lane.b32.xlu0 %v2214, 120
    %v2228 = vpop.permute.xlu0 %2227
    %v2229 = vsel %vm1359, %v2216, %v2218
    %v2230 = vsel %vm1359, %v2218, %v2220
    %v2231 = vsel %vm1359, %v2220, %v2222
    %v2232 = vsel %vm1359, %v2222, %v2224
    %v2233 = vsel %vm1359, %v2224, %v2226
    %v2234 = vsel %vm1359, %v2226, %v2228
    %2242 = vst [vmem:[#allocation2 + $0x38] sm:$0xc0] %v2229
    %2243 = vst [vmem:[#allocation2 + $0x40] sm:$0xc0] %v2230
    %2244 = vst [vmem:[#allocation2 + $0x48] sm:$0xc0] %v2231
    %2245 = vst [vmem:[#allocation2 + $0x50] sm:$0xc0] %v2232
    %2246 = vst [vmem:[#allocation2 + $0x58] sm:$0xc0] %v2233
    %2247 = vst [vmem:[#allocation2 + $0x60] sm:$0xc0] %v2234
    %2248 = vst.msk [vmem:[#allocation2 + $0x68] sm:$0xc0] %vm1224, %v2228
    %v2249 = vrot.slane %v1002, 2
    %v2250 = vrot.slane %v1003, 2
    %v2251 = vrot.slane %v1004, 2
    %v2252 = vrot.slane %v1005, 2
    %v2253 = vrot.slane %v1006, 2
    %v2254 = vrot.slane %v1007, 2
    %v2255 = vrot.slane %v1008, 2
    %2256 = vrot.lane.b32.xlu0 %v2249, 119
    %v2257 = vpop.permute.xlu0 %2256
    %2258 = vrot.lane.b32.xlu0 %v2250, 119
    %v2259 = vpop.permute.xlu0 %2258
    %2260 = vrot.lane.b32.xlu0 %v2251, 119
    %v2261 = vpop.permute.xlu0 %2260
    %2262 = vrot.lane.b32.xlu0 %v2252, 119
    %v2263 = vpop.permute.xlu0 %2262
    %2264 = vrot.lane.b32.xlu0 %v2253, 119
    %v2265 = vpop.permute.xlu0 %2264
    %2266 = vrot.lane.b32.xlu0 %v2254, 119
    %v2267 = vpop.permute.xlu0 %2266
    %2268 = vrot.lane.b32.xlu0 %v2255, 119
    %v2269 = vpop.permute.xlu0 %2268
    %v2270 = vsel %vm1401, %v2257, %v2259
    %v2271 = vsel %vm1401, %v2259, %v2261
    %v2272 = vsel %vm1401, %v2261, %v2263
    %v2273 = vsel %vm1401, %v2263, %v2265
    %v2274 = vsel %vm1401, %v2265, %v2267
    %v2275 = vsel %vm1401, %v2267, %v2269
    %2283 = vst [vmem:[#allocation2 + $0x70] sm:$0x3] %v2270
    %2284 = vst [vmem:[#allocation2 + $0x78] sm:$0x3] %v2271
    %2285 = vst [vmem:[#allocation2 + $0x80] sm:$0x3] %v2272
    %2286 = vst [vmem:[#allocation2 + $0x88] sm:$0x3] %v2273
    %2287 = vst [vmem:[#allocation2 + $0x90] sm:$0x3] %v2274
    %2288 = vst [vmem:[#allocation2 + $0x98] sm:$0x3] %v2275
    %2289 = vst.msk [vmem:[#allocation2 + $0xa0] sm:$0x3] %vm1061, %v2269
    %v2290 = vld [vmem:[#allocation2] sm:$0xff]
    %v2291 = vld [vmem:[#allocation2 + $0x8] sm:$0xff]
    %v2292 = vld [vmem:[#allocation2 + $0x10] sm:$0xff]
    %v2293 = vld [vmem:[#allocation2 + $0x18] sm:$0xff]
    %v2294 = vld [vmem:[#allocation2 + $0x20] sm:$0xff]
    %v2295 = vld [vmem:[#allocation2 + $0x28] sm:$0xff]
    %v2296 = vld [vmem:[#allocation2 + $0x30] sm:$0xff]
    %v2297 = vld [vmem:[#allocation2 + $0x38] sm:$0xff]
    %v2298 = vld [vmem:[#allocation2 + $0x40] sm:$0xff]
    %v2299 = vld [vmem:[#allocation2 + $0x48] sm:$0xff]
    %v2300 = vld [vmem:[#allocation2 + $0x50] sm:$0xff]
    %v2301 = vld [vmem:[#allocation2 + $0x58] sm:$0xff]
    %v2302 = vld [vmem:[#allocation2 + $0x60] sm:$0xff]
    %v2303 = vld [vmem:[#allocation2 + $0x68] sm:$0xff]
    %v2304 = vld [vmem:[#allocation2 + $0x70] sm:$0x3]
    %v2305 = vld [vmem:[#allocation2 + $0x78] sm:$0x3]
    %v2306 = vld [vmem:[#allocation2 + $0x80] sm:$0x3]
    %v2307 = vld [vmem:[#allocation2 + $0x88] sm:$0x3]
    %v2308 = vld [vmem:[#allocation2 + $0x90] sm:$0x3]
    %v2309 = vld [vmem:[#allocation2 + $0x98] sm:$0x3]
    %v2310 = vld [vmem:[#allocation2 + $0xa0] sm:$0x3]
    %v2312 = vsel %vm114, %v2304, 0
    %v2315 = vsel %vm114, %v2305, 0
    %v2318 = vsel %vm114, %v2306, 0
    %v2321 = vsel %vm114, %v2307, 0
    %v2324 = vsel %vm114, %v2308, 0
    %v2327 = vsel %vm114, %v2309, 0
    %v2330 = vsel %vm114, %v2310, 0
    %2332 = vmatprep.subr.mxu0 %v2291
    %2333 = vmatpush1.msra.mxu0 %v2290
    %2334 = vmatprep.subr.mxu0 %v2298
    %2335 = vmatpush1.msra.mxu0 %v2297
    %2336 = vmatprep.subr.mxu0 %v2315
    %2337 = vmatpush1.msra.mxu0 %v2312
    %2338 = vmatprep.subr.mxu0 0.0
    %2339 = vmatpush1.msra.mxu0 0.0
    %2340 = vmatprep.subr.mxu0 0.0
    %2341 = vmatpush1.msra.mxu0 0.0
    %2342 = vmatprep.subr.mxu0 0.0
    %2343 = vmatpush1.msra.mxu0 0.0
    %2344 = vmatprep.subr.mxu0 0.0
    %2345 = vmatpush1.msra.mxu0 0.0
    %2346 = vmatprep.subr.mxu0 0.0
    %2347 = vmatpush1.msra.mxu0 0.0
    %2348 = vmatprep.subr.mxu0 0.0
    %2349 = vmatpush1.msra.mxu0 0.0
    %2350 = vmatprep.subr.mxu0 0.0
    %2351 = vmatpush1.msra.mxu0 0.0
    %2352 = vmatprep.subr.mxu0 0.0
    %2353 = vmatpush1.msra.mxu0 0.0
    %2354 = vmatprep.subr.mxu0 0.0
    %2355 = vmatpush1.msra.mxu0 0.0
    %2356 = vmatprep.subr.mxu0 0.0
    %2357 = vmatpush1.msra.mxu0 0.0
    %2358 = vmatprep.subr.mxu0 0.0
    %2359 = vmatpush1.msra.mxu0 0.0
    %2360 = vmatprep.subr.mxu0 0.0
    %2361 = vmatpush1.msra.mxu0 0.0
    %2362 = vmatprep.subr.mxu0 0.0
    %2363 = vmatpush1.msra.mxu0 0.0
    %2364 = vmatprep.subr.mxu0 0.0
    %2365 = vmatpush1.msra.mxu0 0.0
    %2366 = vmatprep.subr.mxu0 0.0
    %2367 = vmatpush1.msra.mxu0 0.0
    %2368 = vmatprep.subr.mxu0 0.0
    %2369 = vmatpush1.msra.mxu0 0.0
    %2370 = vmatprep.subr.mxu0 0.0
    %2371 = vmatpush1.msra.mxu0 0.0
    %2372 = vmatprep.subr.mxu0 0.0
    %2373 = vmatpush1.msra.mxu0 0.0
    %2374 = vmatprep.subr.mxu0 0.0
    %2375 = vmatpush1.msra.mxu0 0.0
    %2376 = vmatprep.subr.mxu0 0.0
    %2377 = vmatpush1.msra.mxu0 0.0
    %2378 = vmatprep.subr.mxu0 0.0
    %2379 = vmatpush1.msra.mxu0 0.0
    %2380 = vmatprep.subr.mxu0 0.0
    %2381 = vmatpush1.msra.mxu0 0.0
    %2382 = vmatprep.subr.mxu0 0.0
    %2383 = vmatpush1.msra.mxu0 0.0
    %2384 = vmatprep.subr.mxu0 0.0
    %2385 = vmatpush1.msra.mxu0 0.0
    %2386 = vmatprep.subr.mxu0 0.0
    %2387 = vmatpush1.msra.mxu0 0.0
    %2388 = vmatprep.subr.mxu0 0.0
    %2389 = vmatpush1.msra.mxu0 0.0
    %2390 = vmatprep.subr.mxu0 0.0
    %2391 = vmatpush1.msra.mxu0 0.0
    %2392 = vmatprep.subr.mxu0 0.0
    %2393 = vmatpush1.msra.mxu0 0.0
    %2394 = vmatprep.subr.mxu0 0.0
    %2395 = vmatpush1.msra.mxu0 0.0
    %2396 = vmatprep.mubr.f32.mxu0 0.0
    %2397 = vmatmul.mubr.f32.gmra.mrb[0].mxu0 %v1445
    %v2398 = vpop.f32.mrb[0].mxu0
    %v2399 = vadd.f32 0.0, %v2398
    %v2400 = vpop.f32.mrb[0].mxu0
    %v2401 = vadd.f32 0.0, %v2400
    %2402 = vmatprep.mubr.f32.mxu0 0.0
    %2403 = vmatmul.mubr.f32.gmra.mrb[0].mxu0 %v1448
    %v2404 = vpop.f32.mrb[0].mxu0
    %v2405 = vadd.f32 0.0, %v2404
    %v2406 = vpop.f32.mrb[0].mxu0
    %v2407 = vadd.f32 0.0, %v2406
    %2408 = vmatprep.mubr.f32.mxu0 0.0
    %2409 = vmatmul.mubr.f32.gmra.mrb[0].mxu0 %v1451
    %v2410 = vpop.f32.mrb[0].mxu0
    %v2411 = vadd.f32 0.0, %v2410
    %v2412 = vpop.f32.mrb[0].mxu0
    %v2413 = vadd.f32 0.0, %v2412
    %2414 = vmatprep.mubr.f32.mxu0 0.0
    %2415 = vmatmul.mubr.f32.gmra.mrb[0].mxu0 %v1454
    %v2416 = vpop.f32.mrb[0].mxu0
    %v2417 = vadd.f32 0.0, %v2416
    %v2418 = vpop.f32.mrb[0].mxu0
    %v2419 = vadd.f32 0.0, %v2418
    %2420 = vmatprep.mubr.f32.mxu0 0.0
    %2421 = vmatmul.mubr.f32.gmra.mrb[0].mxu0 %v1457
    %v2422 = vpop.f32.mrb[0].mxu0
    %v2423 = vadd.f32 0.0, %v2422
    %v2424 = vpop.f32.mrb[0].mxu0
    %v2425 = vadd.f32 0.0, %v2424
    %2426 = vmatprep.mubr.f32.mxu0 0.0
    %2427 = vmatmul.mubr.f32.gmra.mrb[0].mxu0 %v1460
    %v2428 = vpop.f32.mrb[0].mxu0
    %v2429 = vadd.f32 0.0, %v2428
    %v2430 = vpop.f32.mrb[0].mxu0
    %v2431 = vadd.f32 0.0, %v2430
    %2432 = vmatprep.mubr.f32.mxu0 0.0
    %2433 = vmatmul.mubr.f32.gmra.mrb[0].mxu0 %v1463
    %v2434 = vpop.f32.mrb[0].mxu0
    %v2435 = vadd.f32 0.0, %v2434
    %v2436 = vpop.f32.mrb[0].mxu0
    %v2437 = vadd.f32 0.0, %v2436
    %2438 = vmatprep.mubr.f32.mxu0 0.0
    %2439 = vmatmul.mubr.f32.gmra.mrb[0].mxu0 %v1466
    %v2440 = vpop.f32.mrb[0].mxu0
    %v2441 = vadd.f32 0.0, %v2440
    %v2442 = vpop.f32.mrb[0].mxu0
    %v2443 = vadd.f32 0.0, %v2442
    %2444 = vdwg.mxu0
    %2445 = vmatprep.subr.mxu0 %v2293
    %2446 = vmatpush1.msra.mxu0 %v2292
    %2447 = vmatprep.subr.mxu0 %v2300
    %2448 = vmatpush1.msra.mxu0 %v2299
    %2449 = vmatprep.subr.mxu0 %v2321
    %2450 = vmatpush1.msra.mxu0 %v2318
    %2451 = vmatprep.subr.mxu0 0.0
    %2452 = vmatpush1.msra.mxu0 0.0
    %2453 = vmatprep.subr.mxu0 0.0
    %2454 = vmatpush1.msra.mxu0 0.0
    %2455 = vmatprep.subr.mxu0 0.0
    %2456 = vmatpush1.msra.mxu0 0.0
    %2457 = vmatprep.subr.mxu0 0.0
    %2458 = vmatpush1.msra.mxu0 0.0
    %2459 = vmatprep.subr.mxu0 0.0
    %2460 = vmatpush1.msra.mxu0 0.0
    %2461 = vmatprep.subr.mxu0 0.0
    %2462 = vmatpush1.msra.mxu0 0.0
    %2463 = vmatprep.subr.mxu0 0.0
    %2464 = vmatpush1.msra.mxu0 0.0
    %2465 = vmatprep.subr.mxu0 0.0
    %2466 = vmatpush1.msra.mxu0 0.0
    %2467 = vmatprep.subr.mxu0 0.0
    %2468 = vmatpush1.msra.mxu0 0.0
    %2469 = vmatprep.subr.mxu0 0.0
    %2470 = vmatpush1.msra.mxu0 0.0
    %2471 = vmatprep.subr.mxu0 0.0
    %2472 = vmatpush1.msra.mxu0 0.0
    %2473 = vmatprep.subr.mxu0 0.0
    %2474 = vmatpush1.msra.mxu0 0.0
    %2475 = vmatprep.subr.mxu0 0.0
    %2476 = vmatpush1.msra.mxu0 0.0
    %2477 = vmatprep.subr.mxu0 0.0
    %2478 = vmatpush1.msra.mxu0 0.0
    %2479 = vmatprep.subr.mxu0 0.0
    %2480 = vmatpush1.msra.mxu0 0.0
    %2481 = vmatprep.subr.mxu0 0.0
    %2482 = vmatpush1.msra.mxu0 0.0
    %2483 = vmatprep.subr.mxu0 0.0
    %2484 = vmatpush1.msra.mxu0 0.0
    %2485 = vmatprep.subr.mxu0 0.0
    %2486 = vmatpush1.msra.mxu0 0.0
    %2487 = vmatprep.subr.mxu0 0.0
    %2488 = vmatpush1.msra.mxu0 0.0
    %2489 = vmatprep.subr.mxu0 0.0
    %2490 = vmatpush1.msra.mxu0 0.0
    %2491 = vmatprep.subr.mxu0 0.0
    %2492 = vmatpush1.msra.mxu0 0.0
    %2493 = vmatprep.subr.mxu0 0.0
    %2494 = vmatpush1.msra.mxu0 0.0
    %2495 = vmatprep.subr.mxu0 0.0
    %2496 = vmatpush1.msra.mxu0 0.0
    %2497 = vmatprep.subr.mxu0 0.0
    %2498 = vmatpush1.msra.mxu0 0.0
    %2499 = vmatprep.subr.mxu0 0.0
    %2500 = vmatpush1.msra.mxu0 0.0
    %2501 = vmatprep.subr.mxu0 0.0
    %2502 = vmatpush1.msra.mxu0 0.0
    %2503 = vmatprep.subr.mxu0 0.0
    %2504 = vmatpush1.msra.mxu0 0.0
    %2505 = vmatprep.subr.mxu0 0.0
    %2506 = vmatpush1.msra.mxu0 0.0
    %2507 = vmatprep.subr.mxu0 0.0
    %2508 = vmatpush1.msra.mxu0 0.0
    %2509 = vmatprep.mubr.f32.mxu0 0.0
    %2510 = vmatmul.mubr.f32.gmra.mrb[0].mxu0 %v1445
    %v2511 = vpop.f32.mrb[0].mxu0
    %v2512 = vadd.f32 0.0, %v2511
    %v2513 = vpop.f32.mrb[0].mxu0
    %v2514 = vadd.f32 0.0, %v2513
    %2515 = vmatprep.mubr.f32.mxu0 0.0
    %2516 = vmatmul.mubr.f32.gmra.mrb[0].mxu0 %v1448
    %v2517 = vpop.f32.mrb[0].mxu0
    %v2518 = vadd.f32 0.0, %v2517
    %v2519 = vpop.f32.mrb[0].mxu0
    %v2520 = vadd.f32 0.0, %v2519
    %2521 = vmatprep.mubr.f32.mxu0 0.0
    %2522 = vmatmul.mubr.f32.gmra.mrb[0].mxu0 %v1451
    %v2523 = vpop.f32.mrb[0].mxu0
    %v2524 = vadd.f32 0.0, %v2523
    %v2525 = vpop.f32.mrb[0].mxu0
    %v2526 = vadd.f32 0.0, %v2525
    %2527 = vmatprep.mubr.f32.mxu0 0.0
    %2528 = vmatmul.mubr.f32.gmra.mrb[0].mxu0 %v1454
    %v2529 = vpop.f32.mrb[0].mxu0
    %v2530 = vadd.f32 0.0, %v2529
    %v2531 = vpop.f32.mrb[0].mxu0
    %v2532 = vadd.f32 0.0, %v2531
    %2533 = vmatprep.mubr.f32.mxu0 0.0
    %2534 = vmatmul.mubr.f32.gmra.mrb[0].mxu0 %v1457
    %v2535 = vpop.f32.mrb[0].mxu0
    %v2536 = vadd.f32 0.0, %v2535
    %v2537 = vpop.f32.mrb[0].mxu0
    %v2538 = vadd.f32 0.0, %v2537
    %2539 = vmatprep.mubr.f32.mxu0 0.0
    %2540 = vmatmul.mubr.f32.gmra.mrb[0].mxu0 %v1460
    %v2541 = vpop.f32.mrb[0].mxu0
    %v2542 = vadd.f32 0.0, %v2541
    %v2543 = vpop.f32.mrb[0].mxu0
    %v2544 = vadd.f32 0.0, %v2543
    %2545 = vmatprep.mubr.f32.mxu0 0.0
    %2546 = vmatmul.mubr.f32.gmra.mrb[0].mxu0 %v1463
    %v2547 = vpop.f32.mrb[0].mxu0
    %v2548 = vadd.f32 0.0, %v2547
    %v2549 = vpop.f32.mrb[0].mxu0
    %v2550 = vadd.f32 0.0, %v2549
    %2551 = vmatprep.mubr.f32.mxu0 0.0
    %2552 = vmatmul.mubr.f32.gmra.mrb[0].mxu0 %v1466
    %v2553 = vpop.f32.mrb[0].mxu0
    %v2554 = vadd.f32 0.0, %v2553
    %v2555 = vpop.f32.mrb[0].mxu0
    %v2556 = vadd.f32 0.0, %v2555
    %2557 = vdwg.mxu0
    %2558 = vmatprep.subr.mxu0 %v2295
    %2559 = vmatpush1.msra.mxu0 %v2294
    %2560 = vmatprep.subr.mxu0 %v2302
    %2561 = vmatpush1.msra.mxu0 %v2301
    %2562 = vmatprep.subr.mxu0 %v2327
    %2563 = vmatpush1.msra.mxu0 %v2324
    %2564 = vmatprep.subr.mxu0 0.0
    %2565 = vmatpush1.msra.mxu0 0.0
    %2566 = vmatprep.subr.mxu0 0.0
    %2567 = vmatpush1.msra.mxu0 0.0
    %2568 = vmatprep.subr.mxu0 0.0
    %2569 = vmatpush1.msra.mxu0 0.0
    %2570 = vmatprep.subr.mxu0 0.0
    %2571 = vmatpush1.msra.mxu0 0.0
    %2572 = vmatprep.subr.mxu0 0.0
    %2573 = vmatpush1.msra.mxu0 0.0
    %2574 = vmatprep.subr.mxu0 0.0
    %2575 = vmatpush1.msra.mxu0 0.0
    %2576 = vmatprep.subr.mxu0 0.0
    %2577 = vmatpush1.msra.mxu0 0.0
    %2578 = vmatprep.subr.mxu0 0.0
    %2579 = vmatpush1.msra.mxu0 0.0
    %2580 = vmatprep.subr.mxu0 0.0
    %2581 = vmatpush1.msra.mxu0 0.0
    %2582 = vmatprep.subr.mxu0 0.0
    %2583 = vmatpush1.msra.mxu0 0.0
    %2584 = vmatprep.subr.mxu0 0.0
    %2585 = vmatpush1.msra.mxu0 0.0
    %2586 = vmatprep.subr.mxu0 0.0
    %2587 = vmatpush1.msra.mxu0 0.0
    %2588 = vmatprep.subr.mxu0 0.0
    %2589 = vmatpush1.msra.mxu0 0.0
    %2590 = vmatprep.subr.mxu0 0.0
    %2591 = vmatpush1.msra.mxu0 0.0
    %2592 = vmatprep.subr.mxu0 0.0
    %2593 = vmatpush1.msra.mxu0 0.0
    %2594 = vmatprep.subr.mxu0 0.0
    %2595 = vmatpush1.msra.mxu0 0.0
    %2596 = vmatprep.subr.mxu0 0.0
    %2597 = vmatpush1.msra.mxu0 0.0
    %2598 = vmatprep.subr.mxu0 0.0
    %2599 = vmatpush1.msra.mxu0 0.0
    %2600 = vmatprep.subr.mxu0 0.0
    %2601 = vmatpush1.msra.mxu0 0.0
    %2602 = vmatprep.subr.mxu0 0.0
    %2603 = vmatpush1.msra.mxu0 0.0
    %2604 = vmatprep.subr.mxu0 0.0
    %2605 = vmatpush1.msra.mxu0 0.0
    %2606 = vmatprep.subr.mxu0 0.0
    %2607 = vmatpush1.msra.mxu0 0.0
    %2608 = vmatprep.subr.mxu0 0.0
    %2609 = vmatpush1.msra.mxu0 0.0
    %2610 = vmatprep.subr.mxu0 0.0
    %2611 = vmatpush1.msra.mxu0 0.0
    %2612 = vmatprep.subr.mxu0 0.0
    %2613 = vmatpush1.msra.mxu0 0.0
    %2614 = vmatprep.subr.mxu0 0.0
    %2615 = vmatpush1.msra.mxu0 0.0
    %2616 = vmatprep.subr.mxu0 0.0
    %2617 = vmatpush1.msra.mxu0 0.0
    %2618 = vmatprep.subr.mxu0 0.0
    %2619 = vmatpush1.msra.mxu0 0.0
    %2620 = vmatprep.subr.mxu0 0.0
    %2621 = vmatpush1.msra.mxu0 0.0
    %2622 = vmatprep.mubr.f32.mxu0 0.0
    %2623 = vmatmul.mubr.f32.gmra.mrb[0].mxu0 %v1445
    %v2624 = vpop.f32.mrb[0].mxu0
    %v2625 = vadd.f32 0.0, %v2624
    %v2626 = vpop.f32.mrb[0].mxu0
    %v2627 = vadd.f32 0.0, %v2626
    %2628 = vmatprep.mubr.f32.mxu0 0.0
    %2629 = vmatmul.mubr.f32.gmra.mrb[0].mxu0 %v1448
    %v2630 = vpop.f32.mrb[0].mxu0
    %v2631 = vadd.f32 0.0, %v2630
    %v2632 = vpop.f32.mrb[0].mxu0
    %v2633 = vadd.f32 0.0, %v2632
    %2634 = vmatprep.mubr.f32.mxu0 0.0
    %2635 = vmatmul.mubr.f32.gmra.mrb[0].mxu0 %v1451
    %v2636 = vpop.f32.mrb[0].mxu0
    %v2637 = vadd.f32 0.0, %v2636
    %v2638 = vpop.f32.mrb[0].mxu0
    %v2639 = vadd.f32 0.0, %v2638
    %2640 = vmatprep.mubr.f32.mxu0 0.0
    %2641 = vmatmul.mubr.f32.gmra.mrb[0].mxu0 %v1454
    %v2642 = vpop.f32.mrb[0].mxu0
    %v2643 = vadd.f32 0.0, %v2642
    %v2644 = vpop.f32.mrb[0].mxu0
    %v2645 = vadd.f32 0.0, %v2644
    %2646 = vmatprep.mubr.f32.mxu0 0.0
    %2647 = vmatmul.mubr.f32.gmra.mrb[0].mxu0 %v1457
    %v2648 = vpop.f32.mrb[0].mxu0
    %v2649 = vadd.f32 0.0, %v2648
    %v2650 = vpop.f32.mrb[0].mxu0
    %v2651 = vadd.f32 0.0, %v2650
    %2652 = vmatprep.mubr.f32.mxu0 0.0
    %2653 = vmatmul.mubr.f32.gmra.mrb[0].mxu0 %v1460
    %v2654 = vpop.f32.mrb[0].mxu0
    %v2655 = vadd.f32 0.0, %v2654
    %v2656 = vpop.f32.mrb[0].mxu0
    %v2657 = vadd.f32 0.0, %v2656
    %2658 = vmatprep.mubr.f32.mxu0 0.0
    %2659 = vmatmul.mubr.f32.gmra.mrb[0].mxu0 %v1463
    %v2660 = vpop.f32.mrb[0].mxu0
    %v2661 = vadd.f32 0.0, %v2660
    %v2662 = vpop.f32.mrb[0].mxu0
    %v2663 = vadd.f32 0.0, %v2662
    %2664 = vmatprep.mubr.f32.mxu0 0.0
    %2665 = vmatmul.mubr.f32.gmra.mrb[0].mxu0 %v1466
    %v2666 = vpop.f32.mrb[0].mxu0
    %v2667 = vadd.f32 0.0, %v2666
    %v2668 = vpop.f32.mrb[0].mxu0
    %v2669 = vadd.f32 0.0, %v2668
    %2670 = vdwg.mxu0
    %2671 = vmatprep.subr.mxu0 0.0
    %2672 = vmatpush1.msra.mxu0 %v2296
    %2673 = vmatprep.subr.mxu0 0.0
    %2674 = vmatpush1.msra.mxu0 %v2303
    %2675 = vmatprep.subr.mxu0 0.0
    %2676 = vmatpush1.msra.mxu0 %v2330
    %2677 = vmatprep.subr.mxu0 0.0
    %2678 = vmatpush1.msra.mxu0 0.0
    %2679 = vmatprep.subr.mxu0 0.0
    %2680 = vmatpush1.msra.mxu0 0.0
    %2681 = vmatprep.subr.mxu0 0.0
    %2682 = vmatpush1.msra.mxu0 0.0
    %2683 = vmatprep.subr.mxu0 0.0
    %2684 = vmatpush1.msra.mxu0 0.0
    %2685 = vmatprep.subr.mxu0 0.0
    %2686 = vmatpush1.msra.mxu0 0.0
    %2687 = vmatprep.subr.mxu0 0.0
    %2688 = vmatpush1.msra.mxu0 0.0
    %2689 = vmatprep.subr.mxu0 0.0
    %2690 = vmatpush1.msra.mxu0 0.0
    %2691 = vmatprep.subr.mxu0 0.0
    %2692 = vmatpush1.msra.mxu0 0.0
    %2693 = vmatprep.subr.mxu0 0.0
    %2694 = vmatpush1.msra.mxu0 0.0
    %2695 = vmatprep.subr.mxu0 0.0
    %2696 = vmatpush1.msra.mxu0 0.0
    %2697 = vmatprep.subr.mxu0 0.0
    %2698 = vmatpush1.msra.mxu0 0.0
    %2699 = vmatprep.subr.mxu0 0.0
    %2700 = vmatpush1.msra.mxu0 0.0
    %2701 = vmatprep.subr.mxu0 0.0
    %2702 = vmatpush1.msra.mxu0 0.0
    %2703 = vmatprep.subr.mxu0 0.0
    %2704 = vmatpush1.msra.mxu0 0.0
    %2705 = vmatprep.subr.mxu0 0.0
    %2706 = vmatpush1.msra.mxu0 0.0
    %2707 = vmatprep.subr.mxu0 0.0
    %2708 = vmatpush1.msra.mxu0 0.0
    %2709 = vmatprep.subr.mxu0 0.0
    %2710 = vmatpush1.msra.mxu0 0.0
    %2711 = vmatprep.subr.mxu0 0.0
    %2712 = vmatpush1.msra.mxu0 0.0
    %2713 = vmatprep.subr.mxu0 0.0
    %2714 = vmatpush1.msra.mxu0 0.0
    %2715 = vmatprep.subr.mxu0 0.0
    %2716 = vmatpush1.msra.mxu0 0.0
    %2717 = vmatprep.subr.mxu0 0.0
    %2718 = vmatpush1.msra.mxu0 0.0
    %2719 = vmatprep.subr.mxu0 0.0
    %2720 = vmatpush1.msra.mxu0 0.0
    %2721 = vmatprep.subr.mxu0 0.0
    %2722 = vmatpush1.msra.mxu0 0.0
    %2723 = vmatprep.subr.mxu0 0.0
    %2724 = vmatpush1.msra.mxu0 0.0
    %2725 = vmatprep.subr.mxu0 0.0
    %2726 = vmatpush1.msra.mxu0 0.0
    %2727 = vmatprep.subr.mxu0 0.0
    %2728 = vmatpush1.msra.mxu0 0.0
    %2729 = vmatprep.subr.mxu0 0.0
    %2730 = vmatpush1.msra.mxu0 0.0
    %2731 = vmatprep.subr.mxu0 0.0
    %2732 = vmatpush1.msra.mxu0 0.0
    %2733 = vmatprep.subr.mxu0 0.0
    %2734 = vmatpush1.msra.mxu0 0.0
    %2735 = vmatprep.mubr.f32.mxu0 0.0
    %2736 = vmatmul.mubr.f32.gmra.mrb[0].mxu0 %v1445
    %v2737 = vpop.f32.mrb[0].mxu0
    %v2738 = vadd.f32 0.0, %v2737
    %v2739 = vpop.f32.mrb[0].mxu0
    %2740 = vmatprep.mubr.f32.mxu0 0.0
    %2741 = vmatmul.mubr.f32.gmra.mrb[0].mxu0 %v1448
    %v2742 = vpop.f32.mrb[0].mxu0
    %v2743 = vadd.f32 0.0, %v2742
    %v2744 = vpop.f32.mrb[0].mxu0
    %2745 = vmatprep.mubr.f32.mxu0 0.0
    %2746 = vmatmul.mubr.f32.gmra.mrb[0].mxu0 %v1451
    %v2747 = vpop.f32.mrb[0].mxu0
    %v2748 = vadd.f32 0.0, %v2747
    %v2749 = vpop.f32.mrb[0].mxu0
    %2750 = vmatprep.mubr.f32.mxu0 0.0
    %2751 = vmatmul.mubr.f32.gmra.mrb[0].mxu0 %v1454
    %v2752 = vpop.f32.mrb[0].mxu0
    %v2753 = vadd.f32 0.0, %v2752
    %v2754 = vpop.f32.mrb[0].mxu0
    %2755 = vmatprep.mubr.f32.mxu0 0.0
    %2756 = vmatmul.mubr.f32.gmra.mrb[0].mxu0 %v1457
    %v2757 = vpop.f32.mrb[0].mxu0
    %v2758 = vadd.f32 0.0, %v2757
    %v2759 = vpop.f32.mrb[0].mxu0
    %2760 = vmatprep.mubr.f32.mxu0 0.0
    %2761 = vmatmul.mubr.f32.gmra.mrb[0].mxu0 %v1460
    %v2762 = vpop.f32.mrb[0].mxu0
    %v2763 = vadd.f32 0.0, %v2762
    %v2764 = vpop.f32.mrb[0].mxu0
    %2765 = vmatprep.mubr.f32.mxu0 0.0
    %2766 = vmatmul.mubr.f32.gmra.mrb[0].mxu0 %v1463
    %v2767 = vpop.f32.mrb[0].mxu0
    %v2768 = vadd.f32 0.0, %v2767
    %v2769 = vpop.f32.mrb[0].mxu0
    %2770 = vmatprep.mubr.f32.mxu0 0.0
    %2771 = vmatmul.mubr.f32.gmra.mrb[0].mxu0 %v1466
    %v2772 = vpop.f32.mrb[0].mxu0
    %v2773 = vadd.f32 0.0, %v2772
    %v2774 = vpop.f32.mrb[0].mxu0
    %2775 = vdwg.mxu0
    %v2776 = vadd.f32 %v1556, %v1558
    %v2777 = vadd.f32 %v2776, %v1669
    %v2778 = vadd.f32 %v2777, %v1671
    %v2779 = vadd.f32 %v2778, %v1782
    %v2780 = vadd.f32 %v2779, %v1784
    %vm2781 = vcmask 588800
    %v2782 = vsel %vm2781, %v1895, 0.0
    %v2783 = vadd.f32 %v2780, %v2782
    %2784 = vadd.xlane.f32.xlu0 %v2783
    %v2785 = vpop.xlane.xlu0 %2784
    %v2786 = vadd.f32 %v1562, %v1564
    %v2787 = vadd.f32 %v2786, %v1675
    %v2788 = vadd.f32 %v2787, %v1677
    %v2789 = vadd.f32 %v2788, %v1788
    %v2790 = vadd.f32 %v2789, %v1790
    %v2791 = vsel %vm2781, %v1900, 0.0
    %v2792 = vadd.f32 %v2790, %v2791
    %2793 = vadd.xlane.f32.xlu0 %v2792
    %v2794 = vpop.xlane.xlu0 %2793
    %v2795 = vadd.f32 %v1568, %v1570
    %v2796 = vadd.f32 %v2795, %v1681
    %v2797 = vadd.f32 %v2796, %v1683
    %v2798 = vadd.f32 %v2797, %v1794
    %v2799 = vadd.f32 %v2798, %v1796
    %v2800 = vsel %vm2781, %v1905, 0.0
    %v2801 = vadd.f32 %v2799, %v2800
    %2802 = vadd.xlane.f32.xlu0 %v2801
    %v2803 = vpop.xlane.xlu0 %2802
    %v2804 = vadd.f32 %v1574, %v1576
    %v2805 = vadd.f32 %v2804, %v1687
    %v2806 = vadd.f32 %v2805, %v1689
    %v2807 = vadd.f32 %v2806, %v1800
    %v2808 = vadd.f32 %v2807, %v1802
    %v2809 = vsel %vm2781, %v1910, 0.0
    %v2810 = vadd.f32 %v2808, %v2809
    %2811 = vadd.xlane.f32.xlu0 %v2810
    %v2812 = vpop.xlane.xlu0 %2811
    %v2813 = vadd.f32 %v1580, %v1582
    %v2814 = vadd.f32 %v2813, %v1693
    %v2815 = vadd.f32 %v2814, %v1695
    %v2816 = vadd.f32 %v2815, %v1806
    %v2817 = vadd.f32 %v2816, %v1808
    %v2818 = vsel %vm2781, %v1915, 0.0
    %v2819 = vadd.f32 %v2817, %v2818
    %2820 = vadd.xlane.f32.xlu0 %v2819
    %v2821 = vpop.xlane.xlu0 %2820
    %v2822 = vadd.f32 %v1586, %v1588
    %v2823 = vadd.f32 %v2822, %v1699
    %v2824 = vadd.f32 %v2823, %v1701
    %v2825 = vadd.f32 %v2824, %v1812
    %v2826 = vadd.f32 %v2825, %v1814
    %v2827 = vsel %vm2781, %v1920, 0.0
    %v2828 = vadd.f32 %v2826, %v2827
    %2829 = vadd.xlane.f32.xlu0 %v2828
    %v2830 = vpop.xlane.xlu0 %2829
    %v2831 = vadd.f32 %v1592, %v1594
    %v2832 = vadd.f32 %v2831, %v1705
    %v2833 = vadd.f32 %v2832, %v1707
    %v2834 = vadd.f32 %v2833, %v1818
    %v2835 = vadd.f32 %v2834, %v1820
    %v2836 = vsel %vm2781, %v1925, 0.0
    %v2837 = vadd.f32 %v2835, %v2836
    %2838 = vadd.xlane.f32.xlu0 %v2837
    %v2839 = vpop.xlane.xlu0 %2838
    %v2840 = vadd.f32 %v1598, %v1600
    %v2841 = vadd.f32 %v2840, %v1711
    %v2842 = vadd.f32 %v2841, %v1713
    %v2843 = vadd.f32 %v2842, %v1824
    %v2844 = vadd.f32 %v2843, %v1826
    %v2845 = vsel %vm2781, %v1930, 0.0
    %v2846 = vadd.f32 %v2844, %v2845
    %2847 = vadd.xlane.f32.xlu0 %v2846
    %v2848 = vpop.xlane.xlu0 %2847
    %v2849 = vadd.f32 %v2399, %v2401
    %v2850 = vadd.f32 %v2849, %v2512
    %v2851 = vadd.f32 %v2850, %v2514
    %v2852 = vadd.f32 %v2851, %v2625
    %v2853 = vadd.f32 %v2852, %v2627
    %v2854 = vsel %vm2781, %v2738, 0.0
    %v2855 = vadd.f32 %v2853, %v2854
    %2856 = vadd.xlane.f32.xlu0 %v2855
    %v2857 = vpop.xlane.xlu0 %2856
    %v2858 = vadd.f32 %v2405, %v2407
    %v2859 = vadd.f32 %v2858, %v2518
    %v2860 = vadd.f32 %v2859, %v2520
    %v2861 = vadd.f32 %v2860, %v2631
    %v2862 = vadd.f32 %v2861, %v2633
    %v2863 = vsel %vm2781, %v2743, 0.0
    %v2864 = vadd.f32 %v2862, %v2863
    %2865 = vadd.xlane.f32.xlu0 %v2864
    %v2866 = vpop.xlane.xlu0 %2865
    %v2867 = vadd.f32 %v2411, %v2413
    %v2868 = vadd.f32 %v2867, %v2524
    %v2869 = vadd.f32 %v2868, %v2526
    %v2870 = vadd.f32 %v2869, %v2637
    %v2871 = vadd.f32 %v2870, %v2639
    %v2872 = vsel %vm2781, %v2748, 0.0
    %v2873 = vadd.f32 %v2871, %v2872
    %2874 = vadd.xlane.f32.xlu0 %v2873
    %v2875 = vpop.xlane.xlu0 %2874
    %v2876 = vadd.f32 %v2417, %v2419
    %v2877 = vadd.f32 %v2876, %v2530
    %v2878 = vadd.f32 %v2877, %v2532
    %v2879 = vadd.f32 %v2878, %v2643
    %v2880 = vadd.f32 %v2879, %v2645
    %v2881 = vsel %vm2781, %v2753, 0.0
    %v2882 = vadd.f32 %v2880, %v2881
    %2883 = vadd.xlane.f32.xlu0 %v2882
    %v2884 = vpop.xlane.xlu0 %2883
    %v2885 = vadd.f32 %v2423, %v2425
    %v2886 = vadd.f32 %v2885, %v2536
    %v2887 = vadd.f32 %v2886, %v2538
    %v2888 = vadd.f32 %v2887, %v2649
    %v2889 = vadd.f32 %v2888, %v2651
    %v2890 = vsel %vm2781, %v2758, 0.0
    %v2891 = vadd.f32 %v2889, %v2890
    %2892 = vadd.xlane.f32.xlu0 %v2891
    %v2893 = vpop.xlane.xlu0 %2892
    %v2894 = vadd.f32 %v2429, %v2431
    %v2895 = vadd.f32 %v2894, %v2542
    %v2896 = vadd.f32 %v2895, %v2544
    %v2897 = vadd.f32 %v2896, %v2655
    %v2898 = vadd.f32 %v2897, %v2657
    %v2899 = vsel %vm2781, %v2763, 0.0
    %v2900 = vadd.f32 %v2898, %v2899
    %2901 = vadd.xlane.f32.xlu0 %v2900
    %v2902 = vpop.xlane.xlu0 %2901
    %v2903 = vadd.f32 %v2435, %v2437
    %v2904 = vadd.f32 %v2903, %v2548
    %v2905 = vadd.f32 %v2904, %v2550
    %v2906 = vadd.f32 %v2905, %v2661
    %v2907 = vadd.f32 %v2906, %v2663
    %v2908 = vsel %vm2781, %v2768, 0.0
    %v2909 = vadd.f32 %v2907, %v2908
    %2910 = vadd.xlane.f32.xlu0 %v2909
    %v2911 = vpop.xlane.xlu0 %2910
    %v2912 = vadd.f32 %v2441, %v2443
    %v2913 = vadd.f32 %v2912, %v2554
    %v2914 = vadd.f32 %v2913, %v2556
    %v2915 = vadd.f32 %v2914, %v2667
    %v2916 = vadd.f32 %v2915, %v2669
    %v2917 = vsel %vm2781, %v2773, 0.0
    %v2918 = vadd.f32 %v2916, %v2917
    %2919 = vadd.xlane.f32.xlu0 %v2918
    %v2920 = vpop.xlane.xlu0 %2919
    %v2921 = vadd.f32 %v2785, %v2857
    %v2922 = vadd.f32 %v2794, %v2866
    %v2923 = vadd.f32 %v2803, %v2875
    %v2924 = vadd.f32 %v2812, %v2884
    %v2925 = vadd.f32 %v2821, %v2893
    %v2926 = vadd.f32 %v2830, %v2902
    %v2927 = vadd.f32 %v2839, %v2911
    %v2928 = vadd.f32 %v2848, %v2920
    %v2929 = vmul.f32 %v2921, 0.0005952381
    %v2930 = vmul.f32 %v2922, 0.0005952381
    %v2931 = vmul.f32 %v2923, 0.0005952381
    %v2932 = vmul.f32 %v2924, 0.0005952381
    %v2933 = vmul.f32 %v2925, 0.0005952381
    %v2934 = vmul.f32 %v2926, 0.0005952381
    %v2935 = vmul.f32 %v2927, 0.0005952381
    %v2936 = vmul.f32 %v2928, 0.0005952381
    %v2937 = vsub.f32 %v1556, %v2929
    %v2938 = vsub.f32 %v1558, %v2929
    %v2939 = vsub.f32 %v1669, %v2929
    %v2940 = vsub.f32 %v1671, %v2929
    %v2941 = vsub.f32 %v1782, %v2929
    %v2942 = vsub.f32 %v1784, %v2929
    %v2943 = vsub.f32 %v1895, %v2929
    %v2944 = vsub.f32 %v1562, %v2930
    %v2945 = vsub.f32 %v1564, %v2930
    %v2946 = vsub.f32 %v1675, %v2930
    %v2947 = vsub.f32 %v1677, %v2930
    %v2948 = vsub.f32 %v1788, %v2930
    %v2949 = vsub.f32 %v1790, %v2930
    %v2950 = vsub.f32 %v1900, %v2930
    %v2951 = vsub.f32 %v1568, %v2931
    %v2952 = vsub.f32 %v1570, %v2931
    %v2953 = vsub.f32 %v1681, %v2931
    %v2954 = vsub.f32 %v1683, %v2931
    %v2955 = vsub.f32 %v1794, %v2931
    %v2956 = vsub.f32 %v1796, %v2931
    %v2957 = vsub.f32 %v1905, %v2931
    %v2958 = vsub.f32 %v1574, %v2932
    %v2959 = vsub.f32 %v1576, %v2932
    %v2960 = vsub.f32 %v1687, %v2932
    %v2961 = vsub.f32 %v1689, %v2932
    %v2962 = vsub.f32 %v1800, %v2932
    %v2963 = vsub.f32 %v1802, %v2932
    %v2964 = vsub.f32 %v1910, %v2932
    %v2965 = vsub.f32 %v1580, %v2933
    %v2966 = vsub.f32 %v1582, %v2933
    %v2967 = vsub.f32 %v1693, %v2933
    %v2968 = vsub.f32 %v1695, %v2933
    %v2969 = vsub.f32 %v1806, %v2933
    %v2970 = vsub.f32 %v1808, %v2933
    %v2971 = vsub.f32 %v1915, %v2933
    %v2972 = vsub.f32 %v1586, %v2934
    %v2973 = vsub.f32 %v1588, %v2934
    %v2974 = vsub.f32 %v1699, %v2934
    %v2975 = vsub.f32 %v1701, %v2934
    %v2976 = vsub.f32 %v1812, %v2934
    %v2977 = vsub.f32 %v1814, %v2934
    %v2978 = vsub.f32 %v1920, %v2934
    %v2979 = vsub.f32 %v1592, %v2935
    %v2980 = vsub.f32 %v1594, %v2935
    %v2981 = vsub.f32 %v1705, %v2935
    %v2982 = vsub.f32 %v1707, %v2935
    %v2983 = vsub.f32 %v1818, %v2935
    %v2984 = vsub.f32 %v1820, %v2935
    %v2985 = vsub.f32 %v1925, %v2935
    %v2986 = vsub.f32 %v1598, %v2936
    %v2987 = vsub.f32 %v1600, %v2936
    %v2988 = vsub.f32 %v1711, %v2936
    %v2989 = vsub.f32 %v1713, %v2936
    %v2990 = vsub.f32 %v1824, %v2936
    %v2991 = vsub.f32 %v1826, %v2936
    %v2992 = vsub.f32 %v1930, %v2936
    %v2993 = vsub.f32 %v2399, %v2929
    %v2994 = vsub.f32 %v2401, %v2929
    %v2995 = vsub.f32 %v2512, %v2929
    %v2996 = vsub.f32 %v2514, %v2929
    %v2997 = vsub.f32 %v2625, %v2929
    %v2998 = vsub.f32 %v2627, %v2929
    %v2999 = vsub.f32 %v2738, %v2929
    %v3000 = vsub.f32 %v2405, %v2930
    %v3001 = vsub.f32 %v2407, %v2930
    %v3002 = vsub.f32 %v2518, %v2930
    %v3003 = vsub.f32 %v2520, %v2930
    %v3004 = vsub.f32 %v2631, %v2930
    %v3005 = vsub.f32 %v2633, %v2930
    %v3006 = vsub.f32 %v2743, %v2930
    %v3007 = vsub.f32 %v2411, %v2931
    %v3008 = vsub.f32 %v2413, %v2931
    %v3009 = vsub.f32 %v2524, %v2931
    %v3010 = vsub.f32 %v2526, %v2931
    %v3011 = vsub.f32 %v2637, %v2931
    %v3012 = vsub.f32 %v2639, %v2931
    %v3013 = vsub.f32 %v2748, %v2931
    %v3014 = vsub.f32 %v2417, %v2932
    %v3015 = vsub.f32 %v2419, %v2932
    %v3016 = vsub.f32 %v2530, %v2932
    %v3017 = vsub.f32 %v2532, %v2932
    %v3018 = vsub.f32 %v2643, %v2932
    %v3019 = vsub.f32 %v2645, %v2932
    %v3020 = vsub.f32 %v2753, %v2932
    %v3021 = vsub.f32 %v2423, %v2933
    %v3022 = vsub.f32 %v2425, %v2933
    %v3023 = vsub.f32 %v2536, %v2933
    %v3024 = vsub.f32 %v2538, %v2933
    %v3025 = vsub.f32 %v2649, %v2933
    %v3026 = vsub.f32 %v2651, %v2933
    %v3027 = vsub.f32 %v2758, %v2933
    %v3028 = vsub.f32 %v2429, %v2934
    %v3029 = vsub.f32 %v2431, %v2934
    %v3030 = vsub.f32 %v2542, %v2934
    %v3031 = vsub.f32 %v2544, %v2934
    %v3032 = vsub.f32 %v2655, %v2934
    %v3033 = vsub.f32 %v2657, %v2934
    %v3034 = vsub.f32 %v2763, %v2934
    %v3035 = vsub.f32 %v2435, %v2935
    %v3036 = vsub.f32 %v2437, %v2935
    %v3037 = vsub.f32 %v2548, %v2935
    %v3038 = vsub.f32 %v2550, %v2935
    %v3039 = vsub.f32 %v2661, %v2935
    %v3040 = vsub.f32 %v2663, %v2935
    %v3041 = vsub.f32 %v2768, %v2935
    %v3042 = vsub.f32 %v2441, %v2936
    %v3043 = vsub.f32 %v2443, %v2936
    %v3044 = vsub.f32 %v2554, %v2936
    %v3045 = vsub.f32 %v2556, %v2936
    %v3046 = vsub.f32 %v2667, %v2936
    %v3047 = vsub.f32 %v2669, %v2936
    %v3048 = vsub.f32 %v2773, %v2936
    %v3049 = vmul.f32 %v2937, %v2937
    %v3050 = vmul.f32 %v2938, %v2938
    %v3051 = vmul.f32 %v2939, %v2939
    %v3052 = vmul.f32 %v2940, %v2940
    %v3053 = vmul.f32 %v2941, %v2941
    %v3054 = vmul.f32 %v2942, %v2942
    %v3055 = vmul.f32 %v2943, %v2943
    %v3056 = vmul.f32 %v2944, %v2944
    %v3057 = vmul.f32 %v2945, %v2945
    %v3058 = vmul.f32 %v2946, %v2946
    %v3059 = vmul.f32 %v2947, %v2947
    %v3060 = vmul.f32 %v2948, %v2948
    %v3061 = vmul.f32 %v2949, %v2949
    %v3062 = vmul.f32 %v2950, %v2950
    %v3063 = vmul.f32 %v2951, %v2951
    %v3064 = vmul.f32 %v2952, %v2952
    %v3065 = vmul.f32 %v2953, %v2953
    %v3066 = vmul.f32 %v2954, %v2954
    %v3067 = vmul.f32 %v2955, %v2955
    %v3068 = vmul.f32 %v2956, %v2956
    %v3069 = vmul.f32 %v2957, %v2957
    %v3070 = vmul.f32 %v2958, %v2958
    %v3071 = vmul.f32 %v2959, %v2959
    %v3072 = vmul.f32 %v2960, %v2960
    %v3073 = vmul.f32 %v2961, %v2961
    %v3074 = vmul.f32 %v2962, %v2962
    %v3075 = vmul.f32 %v2963, %v2963
    %v3076 = vmul.f32 %v2964, %v2964
    %v3077 = vmul.f32 %v2965, %v2965
    %v3078 = vmul.f32 %v2966, %v2966
    %v3079 = vmul.f32 %v2967, %v2967
    %v3080 = vmul.f32 %v2968, %v2968
    %v3081 = vmul.f32 %v2969, %v2969
    %v3082 = vmul.f32 %v2970, %v2970
    %v3083 = vmul.f32 %v2971, %v2971
    %v3084 = vmul.f32 %v2972, %v2972
    %v3085 = vmul.f32 %v2973, %v2973
    %v3086 = vmul.f32 %v2974, %v2974
    %v3087 = vmul.f32 %v2975, %v2975
    %v3088 = vmul.f32 %v2976, %v2976
    %v3089 = vmul.f32 %v2977, %v2977
    %v3090 = vmul.f32 %v2978, %v2978
    %v3091 = vmul.f32 %v2979, %v2979
    %v3092 = vmul.f32 %v2980, %v2980
    %v3093 = vmul.f32 %v2981, %v2981
    %v3094 = vmul.f32 %v2982, %v2982
    %v3095 = vmul.f32 %v2983, %v2983
    %v3096 = vmul.f32 %v2984, %v2984
    %v3097 = vmul.f32 %v2985, %v2985
    %v3098 = vmul.f32 %v2986, %v2986
    %v3099 = vmul.f32 %v2987, %v2987
    %v3100 = vmul.f32 %v2988, %v2988
    %v3101 = vmul.f32 %v2989, %v2989
    %v3102 = vmul.f32 %v2990, %v2990
    %v3103 = vmul.f32 %v2991, %v2991
    %v3104 = vmul.f32 %v2992, %v2992
    %v3105 = vadd.f32 %v3049, %v3050
    %v3106 = vadd.f32 %v3105, %v3051
    %v3107 = vadd.f32 %v3106, %v3052
    %v3108 = vadd.f32 %v3107, %v3053
    %v3109 = vadd.f32 %v3108, %v3054
    %v3110 = vsel %vm2781, %v3055, 0.0
    %v3111 = vadd.f32 %v3109, %v3110
    %3112 = vadd.xlane.f32.xlu0 %v3111
    %v3113 = vpop.xlane.xlu0 %3112
    %v3114 = vadd.f32 %v3056, %v3057
    %v3115 = vadd.f32 %v3114, %v3058
    %v3116 = vadd.f32 %v3115, %v3059
    %v3117 = vadd.f32 %v3116, %v3060
    %v3118 = vadd.f32 %v3117, %v3061
    %v3119 = vsel %vm2781, %v3062, 0.0
    %v3120 = vadd.f32 %v3118, %v3119
    %3121 = vadd.xlane.f32.xlu0 %v3120
    %v3122 = vpop.xlane.xlu0 %3121
    %v3123 = vadd.f32 %v3063, %v3064
    %v3124 = vadd.f32 %v3123, %v3065
    %v3125 = vadd.f32 %v3124, %v3066
    %v3126 = vadd.f32 %v3125, %v3067
    %v3127 = vadd.f32 %v3126, %v3068
    %v3128 = vsel %vm2781, %v3069, 0.0
    %v3129 = vadd.f32 %v3127, %v3128
    %3130 = vadd.xlane.f32.xlu0 %v3129
    %v3131 = vpop.xlane.xlu0 %3130
    %v3132 = vadd.f32 %v3070, %v3071
    %v3133 = vadd.f32 %v3132, %v3072
    %v3134 = vadd.f32 %v3133, %v3073
    %v3135 = vadd.f32 %v3134, %v3074
    %v3136 = vadd.f32 %v3135, %v3075
    %v3137 = vsel %vm2781, %v3076, 0.0
    %v3138 = vadd.f32 %v3136, %v3137
    %3139 = vadd.xlane.f32.xlu0 %v3138
    %v3140 = vpop.xlane.xlu0 %3139
    %v3141 = vadd.f32 %v3077, %v3078
    %v3142 = vadd.f32 %v3141, %v3079
    %v3143 = vadd.f32 %v3142, %v3080
    %v3144 = vadd.f32 %v3143, %v3081
    %v3145 = vadd.f32 %v3144, %v3082
    %v3146 = vsel %vm2781, %v3083, 0.0
    %v3147 = vadd.f32 %v3145, %v3146
    %3148 = vadd.xlane.f32.xlu0 %v3147
    %v3149 = vpop.xlane.xlu0 %3148
    %v3150 = vadd.f32 %v3084, %v3085
    %v3151 = vadd.f32 %v3150, %v3086
    %v3152 = vadd.f32 %v3151, %v3087
    %v3153 = vadd.f32 %v3152, %v3088
    %v3154 = vadd.f32 %v3153, %v3089
    %v3155 = vsel %vm2781, %v3090, 0.0
    %v3156 = vadd.f32 %v3154, %v3155
    %3157 = vadd.xlane.f32.xlu0 %v3156
    %v3158 = vpop.xlane.xlu0 %3157
    %v3159 = vadd.f32 %v3091, %v3092
    %v3160 = vadd.f32 %v3159, %v3093
    %v3161 = vadd.f32 %v3160, %v3094
    %v3162 = vadd.f32 %v3161, %v3095
    %v3163 = vadd.f32 %v3162, %v3096
    %v3164 = vsel %vm2781, %v3097, 0.0
    %v3165 = vadd.f32 %v3163, %v3164
    %3166 = vadd.xlane.f32.xlu0 %v3165
    %v3167 = vpop.xlane.xlu0 %3166
    %v3168 = vadd.f32 %v3098, %v3099
    %v3169 = vadd.f32 %v3168, %v3100
    %v3170 = vadd.f32 %v3169, %v3101
    %v3171 = vadd.f32 %v3170, %v3102
    %v3172 = vadd.f32 %v3171, %v3103
    %v3173 = vsel %vm2781, %v3104, 0.0
    %v3174 = vadd.f32 %v3172, %v3173
    %3175 = vadd.xlane.f32.xlu0 %v3174
    %v3176 = vpop.xlane.xlu0 %3175
    %v3177 = vmul.f32 %v2993, %v2993
    %v3178 = vmul.f32 %v2994, %v2994
    %v3179 = vmul.f32 %v2995, %v2995
    %v3180 = vmul.f32 %v2996, %v2996
    %v3181 = vmul.f32 %v2997, %v2997
    %v3182 = vmul.f32 %v2998, %v2998
    %v3183 = vmul.f32 %v2999, %v2999
    %v3184 = vmul.f32 %v3000, %v3000
    %v3185 = vmul.f32 %v3001, %v3001
    %v3186 = vmul.f32 %v3002, %v3002
    %v3187 = vmul.f32 %v3003, %v3003
    %v3188 = vmul.f32 %v3004, %v3004
    %v3189 = vmul.f32 %v3005, %v3005
    %v3190 = vmul.f32 %v3006, %v3006
    %v3191 = vmul.f32 %v3007, %v3007
    %v3192 = vmul.f32 %v3008, %v3008
    %v3193 = vmul.f32 %v3009, %v3009
    %v3194 = vmul.f32 %v3010, %v3010
    %v3195 = vmul.f32 %v3011, %v3011
    %v3196 = vmul.f32 %v3012, %v3012
    %v3197 = vmul.f32 %v3013, %v3013
    %v3198 = vmul.f32 %v3014, %v3014
    %v3199 = vmul.f32 %v3015, %v3015
    %v3200 = vmul.f32 %v3016, %v3016
    %v3201 = vmul.f32 %v3017, %v3017
    %v3202 = vmul.f32 %v3018, %v3018
    %v3203 = vmul.f32 %v3019, %v3019
    %v3204 = vmul.f32 %v3020, %v3020
    %v3205 = vmul.f32 %v3021, %v3021
    %v3206 = vmul.f32 %v3022, %v3022
    %v3207 = vmul.f32 %v3023, %v3023
    %v3208 = vmul.f32 %v3024, %v3024
    %v3209 = vmul.f32 %v3025, %v3025
    %v3210 = vmul.f32 %v3026, %v3026
    %v3211 = vmul.f32 %v3027, %v3027
    %v3212 = vmul.f32 %v3028, %v3028
    %v3213 = vmul.f32 %v3029, %v3029
    %v3214 = vmul.f32 %v3030, %v3030
    %v3215 = vmul.f32 %v3031, %v3031
    %v3216 = vmul.f32 %v3032, %v3032
    %v3217 = vmul.f32 %v3033, %v3033
    %v3218 = vmul.f32 %v3034, %v3034
    %v3219 = vmul.f32 %v3035, %v3035
    %v3220 = vmul.f32 %v3036, %v3036
    %v3221 = vmul.f32 %v3037, %v3037
    %v3222 = vmul.f32 %v3038, %v3038
    %v3223 = vmul.f32 %v3039, %v3039
    %v3224 = vmul.f32 %v3040, %v3040
    %v3225 = vmul.f32 %v3041, %v3041
    %v3226 = vmul.f32 %v3042, %v3042
    %v3227 = vmul.f32 %v3043, %v3043
    %v3228 = vmul.f32 %v3044, %v3044
    %v3229 = vmul.f32 %v3045, %v3045
    %v3230 = vmul.f32 %v3046, %v3046
    %v3231 = vmul.f32 %v3047, %v3047
    %v3232 = vmul.f32 %v3048, %v3048
    %v3233 = vadd.f32 %v3177, %v3178
    %v3234 = vadd.f32 %v3233, %v3179
    %v3235 = vadd.f32 %v3234, %v3180
    %v3236 = vadd.f32 %v3235, %v3181
    %v3237 = vadd.f32 %v3236, %v3182
    %v3238 = vsel %vm2781, %v3183, 0.0
    %v3239 = vadd.f32 %v3237, %v3238
    %3240 = vadd.xlane.f32.xlu0 %v3239
    %v3241 = vpop.xlane.xlu0 %3240
    %v3242 = vadd.f32 %v3184, %v3185
    %v3243 = vadd.f32 %v3242, %v3186
    %v3244 = vadd.f32 %v3243, %v3187
    %v3245 = vadd.f32 %v3244, %v3188
    %v3246 = vadd.f32 %v3245, %v3189
    %v3247 = vsel %vm2781, %v3190, 0.0
    %v3248 = vadd.f32 %v3246, %v3247
    %3249 = vadd.xlane.f32.xlu0 %v3248
    %v3250 = vpop.xlane.xlu0 %3249
    %v3251 = vadd.f32 %v3191, %v3192
    %v3252 = vadd.f32 %v3251, %v3193
    %v3253 = vadd.f32 %v3252, %v3194
    %v3254 = vadd.f32 %v3253, %v3195
    %v3255 = vadd.f32 %v3254, %v3196
    %v3256 = vsel %vm2781, %v3197, 0.0
    %v3257 = vadd.f32 %v3255, %v3256
    %3258 = vadd.xlane.f32.xlu0 %v3257
    %v3259 = vpop.xlane.xlu0 %3258
    %v3260 = vadd.f32 %v3198, %v3199
    %v3261 = vadd.f32 %v3260, %v3200
    %v3262 = vadd.f32 %v3261, %v3201
    %v3263 = vadd.f32 %v3262, %v3202
    %v3264 = vadd.f32 %v3263, %v3203
    %v3265 = vsel %vm2781, %v3204, 0.0
    %v3266 = vadd.f32 %v3264, %v3265
    %3267 = vadd.xlane.f32.xlu0 %v3266
    %v3268 = vpop.xlane.xlu0 %3267
    %v3269 = vadd.f32 %v3205, %v3206
    %v3270 = vadd.f32 %v3269, %v3207
    %v3271 = vadd.f32 %v3270, %v3208
    %v3272 = vadd.f32 %v3271, %v3209
    %v3273 = vadd.f32 %v3272, %v3210
    %v3274 = vsel %vm2781, %v3211, 0.0
    %v3275 = vadd.f32 %v3273, %v3274
    %3276 = vadd.xlane.f32.xlu0 %v3275
    %v3277 = vpop.xlane.xlu0 %3276
    %v3278 = vadd.f32 %v3212, %v3213
    %v3279 = vadd.f32 %v3278, %v3214
    %v3280 = vadd.f32 %v3279, %v3215
    %v3281 = vadd.f32 %v3280, %v3216
    %v3282 = vadd.f32 %v3281, %v3217
    %v3283 = vsel %vm2781, %v3218, 0.0
    %v3284 = vadd.f32 %v3282, %v3283
    %3285 = vadd.xlane.f32.xlu0 %v3284
    %v3286 = vpop.xlane.xlu0 %3285
    %v3287 = vadd.f32 %v3219, %v3220
    %v3288 = vadd.f32 %v3287, %v3221
    %v3289 = vadd.f32 %v3288, %v3222
    %v3290 = vadd.f32 %v3289, %v3223
    %v3291 = vadd.f32 %v3290, %v3224
    %v3292 = vsel %vm2781, %v3225, 0.0
    %v3293 = vadd.f32 %v3291, %v3292
    %3294 = vadd.xlane.f32.xlu0 %v3293
    %v3295 = vpop.xlane.xlu0 %3294
    %v3296 = vadd.f32 %v3226, %v3227
    %v3297 = vadd.f32 %v3296, %v3228
    %v3298 = vadd.f32 %v3297, %v3229
    %v3299 = vadd.f32 %v3298, %v3230
    %v3300 = vadd.f32 %v3299, %v3231
    %v3301 = vsel %vm2781, %v3232, 0.0
    %v3302 = vadd.f32 %v3300, %v3301
    %3303 = vadd.xlane.f32.xlu0 %v3302
    %v3304 = vpop.xlane.xlu0 %3303
    %v3305 = vadd.f32 %v3113, %v3241
    %v3306 = vadd.f32 %v3122, %v3250
    %v3307 = vadd.f32 %v3131, %v3259
    %v3308 = vadd.f32 %v3140, %v3268
    %v3309 = vadd.f32 %v3149, %v3277
    %v3310 = vadd.f32 %v3158, %v3286
    %v3311 = vadd.f32 %v3167, %v3295
    %v3312 = vadd.f32 %v3176, %v3304
    %v3313 = vmul.f32 %v3305, 0.0005952381
    %v3314 = vmul.f32 %v3306, 0.0005952381
    %v3315 = vmul.f32 %v3307, 0.0005952381
    %v3316 = vmul.f32 %v3308, 0.0005952381
    %v3317 = vmul.f32 %v3309, 0.0005952381
    %v3318 = vmul.f32 %v3310, 0.0005952381
    %v3319 = vmul.f32 %v3311, 0.0005952381
    %v3320 = vmul.f32 %v3312, 0.0005952381
    %v3321 = vld [vmem:[%s4] sm:$0xff]
    %v3322 = vld [vmem:[%s4 + $0x8] sm:$0xff]
    %v3323 = vld [vmem:[%s4 + $0x10] sm:$0xff]
    %v3324 = vld [vmem:[%s4 + $0x18] sm:$0xff]
    %v3325 = vld [vmem:[%s4 + $0x20] sm:$0xff]
    %v3326 = vld [vmem:[%s4 + $0x28] sm:$0xff]
    %v3327 = vld [vmem:[%s4 + $0x30] sm:$0xff]
    %v3328 = vld [vmem:[%s4 + $0x38] sm:$0xff]
    %v3329 = vadd.f32 %v3313, 1e-05
    %v3330 = vadd.f32 %v3314, 1e-05
    %v3331 = vadd.f32 %v3315, 1e-05
    %v3332 = vadd.f32 %v3316, 1e-05
    %v3333 = vadd.f32 %v3317, 1e-05
    %v3334 = vadd.f32 %v3318, 1e-05
    %v3335 = vadd.f32 %v3319, 1e-05
    %v3336 = vadd.f32 %v3320, 1e-05
    %v3337 = vrsqrt.pop %v3329
    %v3338 = vrsqrt.pop %v3330
    %v3339 = vrsqrt.pop %v3331
    %v3340 = vrsqrt.pop %v3332
    %v3341 = vrsqrt.pop %v3333
    %v3342 = vrsqrt.pop %v3334
    %v3343 = vrsqrt.pop %v3335
    %v3344 = vrsqrt.pop %v3336
    %v3345 = vmul.f32 %v3321, %v3337
    %v3346 = vmul.f32 %v3322, %v3338
    %v3347 = vmul.f32 %v3323, %v3339
    %v3348 = vmul.f32 %v3324, %v3340
    %v3349 = vmul.f32 %v3325, %v3341
    %v3350 = vmul.f32 %v3326, %v3342
    %v3351 = vmul.f32 %v3327, %v3343
    %v3352 = vmul.f32 %v3328, %v3344
    %v3353 = vld [vmem:[%s5] sm:$0xff]
    %v3354 = vld [vmem:[%s5 + $0x8] sm:$0xff]
    %v3355 = vld [vmem:[%s5 + $0x10] sm:$0xff]
    %v3356 = vld [vmem:[%s5 + $0x18] sm:$0xff]
    %v3357 = vld [vmem:[%s5 + $0x20] sm:$0xff]
    %v3358 = vld [vmem:[%s5 + $0x28] sm:$0xff]
    %v3359 = vld [vmem:[%s5 + $0x30] sm:$0xff]
    %v3360 = vld [vmem:[%s5 + $0x38] sm:$0xff]
    %v3361 = vld [vmem:[%s6] sm:$0xff]
    %v3362 = vld [vmem:[%s6 + $0x8] sm:$0x1]
    %v3363 = vld [vmem:[#allocation3] sm:$0x1]
    %3365 = vset.pattern.permute.xlu0 0
    %3366 = vperm.xlu0 %3365, %v3345
    %v3367 = vpop.permute.xlu0 %3366
    %3370 = vset.pattern.permute.xlu0 0
    %3371 = vperm.xlu0 %3370, %v3346
    %v3372 = vpop.permute.xlu0 %3371
    %3375 = vset.pattern.permute.xlu0 0
    %3376 = vperm.xlu0 %3375, %v3347
    %v3377 = vpop.permute.xlu0 %3376
    %3380 = vset.pattern.permute.xlu0 0
    %3381 = vperm.xlu0 %3380, %v3348
    %v3382 = vpop.permute.xlu0 %3381
    %3385 = vset.pattern.permute.xlu0 0
    %3386 = vperm.xlu0 %3385, %v3349
    %v3387 = vpop.permute.xlu0 %3386
    %3390 = vset.pattern.permute.xlu0 0
    %3391 = vperm.xlu0 %3390, %v3350
    %v3392 = vpop.permute.xlu0 %3391
    %3395 = vset.pattern.permute.xlu0 0
    %3396 = vperm.xlu0 %3395, %v3351
    %v3397 = vpop.permute.xlu0 %3396
    %3400 = vset.pattern.permute.xlu0 0
    %3401 = vperm.xlu0 %3400, %v3352
    %v3402 = vpop.permute.xlu0 %3401
    %v3404 = vmul.f32 %v2937, %v3367
    %v3405 = vmul.f32 %v2938, %v3367
    %v3406 = vmul.f32 %v2939, %v3367
    %v3407 = vmul.f32 %v2940, %v3367
    %v3408 = vmul.f32 %v2941, %v3367
    %v3409 = vmul.f32 %v2942, %v3367
    %v3410 = vmul.f32 %v2943, %v3367
    %v3411 = vmul.f32 %v2944, %v3372
    %v3412 = vmul.f32 %v2945, %v3372
    %v3413 = vmul.f32 %v2946, %v3372
    %v3414 = vmul.f32 %v2947, %v3372
    %v3415 = vmul.f32 %v2948, %v3372
    %v3416 = vmul.f32 %v2949, %v3372
    %v3417 = vmul.f32 %v2950, %v3372
    %v3418 = vmul.f32 %v2951, %v3377
    %v3419 = vmul.f32 %v2952, %v3377
    %v3420 = vmul.f32 %v2953, %v3377
    %v3421 = vmul.f32 %v2954, %v3377
    %v3422 = vmul.f32 %v2955, %v3377
    %v3423 = vmul.f32 %v2956, %v3377
    %v3424 = vmul.f32 %v2957, %v3377
    %v3425 = vmul.f32 %v2958, %v3382
    %v3426 = vmul.f32 %v2959, %v3382
    %v3427 = vmul.f32 %v2960, %v3382
    %v3428 = vmul.f32 %v2961, %v3382
    %v3429 = vmul.f32 %v2962, %v3382
    %v3430 = vmul.f32 %v2963, %v3382
    %v3431 = vmul.f32 %v2964, %v3382
    %v3432 = vmul.f32 %v2965, %v3387
    %v3433 = vmul.f32 %v2966, %v3387
    %v3434 = vmul.f32 %v2967, %v3387
    %v3435 = vmul.f32 %v2968, %v3387
    %v3436 = vmul.f32 %v2969, %v3387
    %v3437 = vmul.f32 %v2970, %v3387
    %v3438 = vmul.f32 %v2971, %v3387
    %v3439 = vmul.f32 %v2972, %v3392
    %v3440 = vmul.f32 %v2973, %v3392
    %v3441 = vmul.f32 %v2974, %v3392
    %v3442 = vmul.f32 %v2975, %v3392
    %v3443 = vmul.f32 %v2976, %v3392
    %v3444 = vmul.f32 %v2977, %v3392
    %v3445 = vmul.f32 %v2978, %v3392
    %v3446 = vmul.f32 %v2979, %v3397
    %v3447 = vmul.f32 %v2980, %v3397
    %v3448 = vmul.f32 %v2981, %v3397
    %v3449 = vmul.f32 %v2982, %v3397
    %v3450 = vmul.f32 %v2983, %v3397
    %v3451 = vmul.f32 %v2984, %v3397
    %v3452 = vmul.f32 %v2985, %v3397
    %v3453 = vmul.f32 %v2986, %v3402
    %v3454 = vmul.f32 %v2987, %v3402
    %v3455 = vmul.f32 %v2988, %v3402
    %v3456 = vmul.f32 %v2989, %v3402
    %v3457 = vmul.f32 %v2990, %v3402
    %v3458 = vmul.f32 %v2991, %v3402
    %v3459 = vmul.f32 %v2992, %v3402
    %3461 = vset.pattern.permute.xlu0 0
    %3462 = vperm.xlu0 %3461, %v3353
    %v3463 = vpop.permute.xlu0 %3462
    %3466 = vset.pattern.permute.xlu0 0
    %3467 = vperm.xlu0 %3466, %v3354
    %v3468 = vpop.permute.xlu0 %3467
    %3471 = vset.pattern.permute.xlu0 0
    %3472 = vperm.xlu0 %3471, %v3355
    %v3473 = vpop.permute.xlu0 %3472
    %3476 = vset.pattern.permute.xlu0 0
    %3477 = vperm.xlu0 %3476, %v3356
    %v3478 = vpop.permute.xlu0 %3477
    %3481 = vset.pattern.permute.xlu0 0
    %3482 = vperm.xlu0 %3481, %v3357
    %v3483 = vpop.permute.xlu0 %3482
    %3486 = vset.pattern.permute.xlu0 0
    %3487 = vperm.xlu0 %3486, %v3358
    %v3488 = vpop.permute.xlu0 %3487
    %3491 = vset.pattern.permute.xlu0 0
    %3492 = vperm.xlu0 %3491, %v3359
    %v3493 = vpop.permute.xlu0 %3492
    %3496 = vset.pattern.permute.xlu0 0
    %3497 = vperm.xlu0 %3496, %v3360
    %v3498 = vpop.permute.xlu0 %3497
    %v3500 = vadd.f32 %v3404, %v3463
    %v3501 = vadd.f32 %v3405, %v3463
    %v3502 = vadd.f32 %v3406, %v3463
    %v3503 = vadd.f32 %v3407, %v3463
    %v3504 = vadd.f32 %v3408, %v3463
    %v3505 = vadd.f32 %v3409, %v3463
    %v3506 = vadd.f32 %v3410, %v3463
    %v3507 = vadd.f32 %v3411, %v3468
    %v3508 = vadd.f32 %v3412, %v3468
    %v3509 = vadd.f32 %v3413, %v3468
    %v3510 = vadd.f32 %v3414, %v3468
    %v3511 = vadd.f32 %v3415, %v3468
    %v3512 = vadd.f32 %v3416, %v3468
    %v3513 = vadd.f32 %v3417, %v3468
    %v3514 = vadd.f32 %v3418, %v3473
    %v3515 = vadd.f32 %v3419, %v3473
    %v3516 = vadd.f32 %v3420, %v3473
    %v3517 = vadd.f32 %v3421, %v3473
    %v3518 = vadd.f32 %v3422, %v3473
    %v3519 = vadd.f32 %v3423, %v3473
    %v3520 = vadd.f32 %v3424, %v3473
    %v3521 = vadd.f32 %v3425, %v3478
    %v3522 = vadd.f32 %v3426, %v3478
    %v3523 = vadd.f32 %v3427, %v3478
    %v3524 = vadd.f32 %v3428, %v3478
    %v3525 = vadd.f32 %v3429, %v3478
    %v3526 = vadd.f32 %v3430, %v3478
    %v3527 = vadd.f32 %v3431, %v3478
    %v3528 = vadd.f32 %v3432, %v3483
    %v3529 = vadd.f32 %v3433, %v3483
    %v3530 = vadd.f32 %v3434, %v3483
    %v3531 = vadd.f32 %v3435, %v3483
    %v3532 = vadd.f32 %v3436, %v3483
    %v3533 = vadd.f32 %v3437, %v3483
    %v3534 = vadd.f32 %v3438, %v3483
    %v3535 = vadd.f32 %v3439, %v3488
    %v3536 = vadd.f32 %v3440, %v3488
    %v3537 = vadd.f32 %v3441, %v3488
    %v3538 = vadd.f32 %v3442, %v3488
    %v3539 = vadd.f32 %v3443, %v3488
    %v3540 = vadd.f32 %v3444, %v3488
    %v3541 = vadd.f32 %v3445, %v3488
    %v3542 = vadd.f32 %v3446, %v3493
    %v3543 = vadd.f32 %v3447, %v3493
    %v3544 = vadd.f32 %v3448, %v3493
    %v3545 = vadd.f32 %v3449, %v3493
    %v3546 = vadd.f32 %v3450, %v3493
    %v3547 = vadd.f32 %v3451, %v3493
    %v3548 = vadd.f32 %v3452, %v3493
    %v3549 = vadd.f32 %v3453, %v3498
    %v3550 = vadd.f32 %v3454, %v3498
    %v3551 = vadd.f32 %v3455, %v3498
    %v3552 = vadd.f32 %v3456, %v3498
    %v3553 = vadd.f32 %v3457, %v3498
    %v3554 = vadd.f32 %v3458, %v3498
    %v3555 = vadd.f32 %v3459, %v3498
    %v3556 = vmax.f32 %v3500, 0.0
    %v3557 = vmax.f32 %v3501, 0.0
    %v3558 = vmax.f32 %v3502, 0.0
    %v3559 = vmax.f32 %v3503, 0.0
    %v3560 = vmax.f32 %v3504, 0.0
    %v3561 = vmax.f32 %v3505, 0.0
    %v3562 = vmax.f32 %v3506, 0.0
    %v3563 = vmax.f32 %v3507, 0.0
    %v3564 = vmax.f32 %v3508, 0.0
    %v3565 = vmax.f32 %v3509, 0.0
    %v3566 = vmax.f32 %v3510, 0.0
    %v3567 = vmax.f32 %v3511, 0.0
    %v3568 = vmax.f32 %v3512, 0.0
    %v3569 = vmax.f32 %v3513, 0.0
    %v3570 = vmax.f32 %v3514, 0.0
    %v3571 = vmax.f32 %v3515, 0.0
    %v3572 = vmax.f32 %v3516, 0.0
    %v3573 = vmax.f32 %v3517, 0.0
    %v3574 = vmax.f32 %v3518, 0.0
    %v3575 = vmax.f32 %v3519, 0.0
    %v3576 = vmax.f32 %v3520, 0.0
    %v3577 = vmax.f32 %v3521, 0.0
    %v3578 = vmax.f32 %v3522, 0.0
    %v3579 = vmax.f32 %v3523, 0.0
    %v3580 = vmax.f32 %v3524, 0.0
    %v3581 = vmax.f32 %v3525, 0.0
    %v3582 = vmax.f32 %v3526, 0.0
    %v3583 = vmax.f32 %v3527, 0.0
    %v3584 = vmax.f32 %v3528, 0.0
    %v3585 = vmax.f32 %v3529, 0.0
    %v3586 = vmax.f32 %v3530, 0.0
    %v3587 = vmax.f32 %v3531, 0.0
    %v3588 = vmax.f32 %v3532, 0.0
    %v3589 = vmax.f32 %v3533, 0.0
    %v3590 = vmax.f32 %v3534, 0.0
    %v3591 = vmax.f32 %v3535, 0.0
    %v3592 = vmax.f32 %v3536, 0.0
    %v3593 = vmax.f32 %v3537, 0.0
    %v3594 = vmax.f32 %v3538, 0.0
    %v3595 = vmax.f32 %v3539, 0.0
    %v3596 = vmax.f32 %v3540, 0.0
    %v3597 = vmax.f32 %v3541, 0.0
    %v3598 = vmax.f32 %v3542, 0.0
    %v3599 = vmax.f32 %v3543, 0.0
    %v3600 = vmax.f32 %v3544, 0.0
    %v3601 = vmax.f32 %v3545, 0.0
    %v3602 = vmax.f32 %v3546, 0.0
    %v3603 = vmax.f32 %v3547, 0.0
    %v3604 = vmax.f32 %v3548, 0.0
    %v3605 = vmax.f32 %v3549, 0.0
    %v3606 = vmax.f32 %v3550, 0.0
    %v3607 = vmax.f32 %v3551, 0.0
    %v3608 = vmax.f32 %v3552, 0.0
    %v3609 = vmax.f32 %v3553, 0.0
    %v3610 = vmax.f32 %v3554, 0.0
    %v3611 = vmax.f32 %v3555, 0.0
    %v3613 = vsel %vm562, %v3361, 0
    %v3616 = vsel %vm562, %v3362, 0
    %3618 = vmatprep.subr.mxu0 %v3557
    %3619 = vmatpush1.msra.mxu0 %v3556
    %3620 = vmatprep.subr.mxu0 %v3564
    %3621 = vmatpush1.msra.mxu0 %v3563
    %3622 = vmatprep.subr.mxu0 %v3571
    %3623 = vmatpush1.msra.mxu0 %v3570
    %3624 = vmatprep.subr.mxu0 %v3578
    %3625 = vmatpush1.msra.mxu0 %v3577
    %3626 = vmatprep.subr.mxu0 %v3585
    %3627 = vmatpush1.msra.mxu0 %v3584
    %3628 = vmatprep.subr.mxu0 %v3592
    %3629 = vmatpush1.msra.mxu0 %v3591
    %3630 = vmatprep.subr.mxu0 %v3599
    %3631 = vmatpush1.msra.mxu0 %v3598
    %3632 = vmatprep.subr.mxu0 %v3606
    %3633 = vmatpush1.msra.mxu0 %v3605
    %3634 = vmatprep.subr.mxu0 0.0
    %3635 = vmatpush1.msra.mxu0 0.0
    %3636 = vmatprep.subr.mxu0 0.0
    %3637 = vmatpush1.msra.mxu0 0.0
    %3638 = vmatprep.subr.mxu0 0.0
    %3639 = vmatpush1.msra.mxu0 0.0
    %3640 = vmatprep.subr.mxu0 0.0
    %3641 = vmatpush1.msra.mxu0 0.0
    %3642 = vmatprep.subr.mxu0 0.0
    %3643 = vmatpush1.msra.mxu0 0.0
    %3644 = vmatprep.subr.mxu0 0.0
    %3645 = vmatpush1.msra.mxu0 0.0
    %3646 = vmatprep.subr.mxu0 0.0
    %3647 = vmatpush1.msra.mxu0 0.0
    %3648 = vmatprep.subr.mxu0 0.0
    %3649 = vmatpush1.msra.mxu0 0.0
    %3650 = vmatprep.subr.mxu0 0.0
    %3651 = vmatpush1.msra.mxu0 0.0
    %3652 = vmatprep.subr.mxu0 0.0
    %3653 = vmatpush1.msra.mxu0 0.0
    %3654 = vmatprep.subr.mxu0 0.0
    %3655 = vmatpush1.msra.mxu0 0.0
    %3656 = vmatprep.subr.mxu0 0.0
    %3657 = vmatpush1.msra.mxu0 0.0
    %3658 = vmatprep.subr.mxu0 0.0
    %3659 = vmatpush1.msra.mxu0 0.0
    %3660 = vmatprep.subr.mxu0 0.0
    %3661 = vmatpush1.msra.mxu0 0.0
    %3662 = vmatprep.subr.mxu0 0.0
    %3663 = vmatpush1.msra.mxu0 0.0
    %3664 = vmatprep.subr.mxu0 0.0
    %3665 = vmatpush1.msra.mxu0 0.0
    %3666 = vmatprep.subr.mxu0 0.0
    %3667 = vmatpush1.msra.mxu0 0.0
    %3668 = vmatprep.subr.mxu0 0.0
    %3669 = vmatpush1.msra.mxu0 0.0
    %3670 = vmatprep.subr.mxu0 0.0
    %3671 = vmatpush1.msra.mxu0 0.0
    %3672 = vmatprep.subr.mxu0 0.0
    %3673 = vmatpush1.msra.mxu0 0.0
    %3674 = vmatprep.subr.mxu0 0.0
    %3675 = vmatpush1.msra.mxu0 0.0
    %3676 = vmatprep.subr.mxu0 0.0
    %3677 = vmatpush1.msra.mxu0 0.0
    %3678 = vmatprep.subr.mxu0 0.0
    %3679 = vmatpush1.msra.mxu0 0.0
    %3680 = vmatprep.subr.mxu0 0.0
    %3681 = vmatpush1.msra.mxu0 0.0
    %3682 = vmatprep.mubr.f32.mxu0 0.0
    %3683 = vmatmul.mubr.f32.gmra.mrb[0].mxu0 %v3613
    %v3684 = vpop.f32.mrb[0].mxu0
    %v3685 = vadd.f32 0.0, %v3684
    %v3686 = vpop.f32.mrb[0].mxu0
    %v3687 = vadd.f32 0.0, %v3686
    %3688 = vmatprep.mubr.f32.mxu0 0.0
    %3689 = vmatmul.mubr.f32.gmra.mrb[0].mxu0 %v3616
    %v3690 = vpop.f32.mrb[0].mxu0
    %v3691 = vadd.f32 0.0, %v3690
    %v3692 = vpop.f32.mrb[0].mxu0
    %v3693 = vadd.f32 0.0, %v3692
    %3694 = vdwg.mxu0
    %3695 = vmatprep.subr.mxu0 %v3559
    %3696 = vmatpush1.msra.mxu0 %v3558
    %3697 = vmatprep.subr.mxu0 %v3566
    %3698 = vmatpush1.msra.mxu0 %v3565
    %3699 = vmatprep.subr.mxu0 %v3573
    %3700 = vmatpush1.msra.mxu0 %v3572
    %3701 = vmatprep.subr.mxu0 %v3580
    %3702 = vmatpush1.msra.mxu0 %v3579
    %3703 = vmatprep.subr.mxu0 %v3587
    %3704 = vmatpush1.msra.mxu0 %v3586
    %3705 = vmatprep.subr.mxu0 %v3594
    %3706 = vmatpush1.msra.mxu0 %v3593
    %3707 = vmatprep.subr.mxu0 %v3601
    %3708 = vmatpush1.msra.mxu0 %v3600
    %3709 = vmatprep.subr.mxu0 %v3608
    %3710 = vmatpush1.msra.mxu0 %v3607
    %3711 = vmatprep.subr.mxu0 0.0
    %3712 = vmatpush1.msra.mxu0 0.0
    %3713 = vmatprep.subr.mxu0 0.0
    %3714 = vmatpush1.msra.mxu0 0.0
    %3715 = vmatprep.subr.mxu0 0.0
    %3716 = vmatpush1.msra.mxu0 0.0
    %3717 = vmatprep.subr.mxu0 0.0
    %3718 = vmatpush1.msra.mxu0 0.0
    %3719 = vmatprep.subr.mxu0 0.0
    %3720 = vmatpush1.msra.mxu0 0.0
    %3721 = vmatprep.subr.mxu0 0.0
    %3722 = vmatpush1.msra.mxu0 0.0
    %3723 = vmatprep.subr.mxu0 0.0
    %3724 = vmatpush1.msra.mxu0 0.0
    %3725 = vmatprep.subr.mxu0 0.0
    %3726 = vmatpush1.msra.mxu0 0.0
    %3727 = vmatprep.subr.mxu0 0.0
    %3728 = vmatpush1.msra.mxu0 0.0
    %3729 = vmatprep.subr.mxu0 0.0
    %3730 = vmatpush1.msra.mxu0 0.0
    %3731 = vmatprep.subr.mxu0 0.0
    %3732 = vmatpush1.msra.mxu0 0.0
    %3733 = vmatprep.subr.mxu0 0.0
    %3734 = vmatpush1.msra.mxu0 0.0
    %3735 = vmatprep.subr.mxu0 0.0
    %3736 = vmatpush1.msra.mxu0 0.0
    %3737 = vmatprep.subr.mxu0 0.0
    %3738 = vmatpush1.msra.mxu0 0.0
    %3739 = vmatprep.subr.mxu0 0.0
    %3740 = vmatpush1.msra.mxu0 0.0
    %3741 = vmatprep.subr.mxu0 0.0
    %3742 = vmatpush1.msra.mxu0 0.0
    %3743 = vmatprep.subr.mxu0 0.0
    %3744 = vmatpush1.msra.mxu0 0.0
    %3745 = vmatprep.subr.mxu0 0.0
    %3746 = vmatpush1.msra.mxu0 0.0
    %3747 = vmatprep.subr.mxu0 0.0
    %3748 = vmatpush1.msra.mxu0 0.0
    %3749 = vmatprep.subr.mxu0 0.0
    %3750 = vmatpush1.msra.mxu0 0.0
    %3751 = vmatprep.subr.mxu0 0.0
    %3752 = vmatpush1.msra.mxu0 0.0
    %3753 = vmatprep.subr.mxu0 0.0
    %3754 = vmatpush1.msra.mxu0 0.0
    %3755 = vmatprep.subr.mxu0 0.0
    %3756 = vmatpush1.msra.mxu0 0.0
    %3757 = vmatprep.subr.mxu0 0.0
    %3758 = vmatpush1.msra.mxu0 0.0
    %3759 = vmatprep.mubr.f32.mxu0 0.0
    %3760 = vmatmul.mubr.f32.gmra.mrb[0].mxu0 %v3613
    %v3761 = vpop.f32.mrb[0].mxu0
    %v3762 = vadd.f32 0.0, %v3761
    %v3763 = vpop.f32.mrb[0].mxu0
    %v3764 = vadd.f32 0.0, %v3763
    %3765 = vmatprep.mubr.f32.mxu0 0.0
    %3766 = vmatmul.mubr.f32.gmra.mrb[0].mxu0 %v3616
    %v3767 = vpop.f32.mrb[0].mxu0
    %v3768 = vadd.f32 0.0, %v3767
    %v3769 = vpop.f32.mrb[0].mxu0
    %v3770 = vadd.f32 0.0, %v3769
    %3771 = vdwg.mxu0
    %3772 = vmatprep.subr.mxu0 %v3561
    %3773 = vmatpush1.msra.mxu0 %v3560
    %3774 = vmatprep.subr.mxu0 %v3568
    %3775 = vmatpush1.msra.mxu0 %v3567
    %3776 = vmatprep.subr.mxu0 %v3575
    %3777 = vmatpush1.msra.mxu0 %v3574
    %3778 = vmatprep.subr.mxu0 %v3582
    %3779 = vmatpush1.msra.mxu0 %v3581
    %3780 = vmatprep.subr.mxu0 %v3589
    %3781 = vmatpush1.msra.mxu0 %v3588
    %3782 = vmatprep.subr.mxu0 %v3596
    %3783 = vmatpush1.msra.mxu0 %v3595
    %3784 = vmatprep.subr.mxu0 %v3603
    %3785 = vmatpush1.msra.mxu0 %v3602
    %3786 = vmatprep.subr.mxu0 %v3610
    %3787 = vmatpush1.msra.mxu0 %v3609
    %3788 = vmatprep.subr.mxu0 0.0
    %3789 = vmatpush1.msra.mxu0 0.0
    %3790 = vmatprep.subr.mxu0 0.0
    %3791 = vmatpush1.msra.mxu0 0.0
    %3792 = vmatprep.subr.mxu0 0.0
    %3793 = vmatpush1.msra.mxu0 0.0
    %3794 = vmatprep.subr.mxu0 0.0
    %3795 = vmatpush1.msra.mxu0 0.0
    %3796 = vmatprep.subr.mxu0 0.0
    %3797 = vmatpush1.msra.mxu0 0.0
    %3798 = vmatprep.subr.mxu0 0.0
    %3799 = vmatpush1.msra.mxu0 0.0
    %3800 = vmatprep.subr.mxu0 0.0
    %3801 = vmatpush1.msra.mxu0 0.0
    %3802 = vmatprep.subr.mxu0 0.0
    %3803 = vmatpush1.msra.mxu0 0.0
    %3804 = vmatprep.subr.mxu0 0.0
    %3805 = vmatpush1.msra.mxu0 0.0
    %3806 = vmatprep.subr.mxu0 0.0
    %3807 = vmatpush1.msra.mxu0 0.0
    %3808 = vmatprep.subr.mxu0 0.0
    %3809 = vmatpush1.msra.mxu0 0.0
    %3810 = vmatprep.subr.mxu0 0.0
    %3811 = vmatpush1.msra.mxu0 0.0
    %3812 = vmatprep.subr.mxu0 0.0
    %3813 = vmatpush1.msra.mxu0 0.0
    %3814 = vmatprep.subr.mxu0 0.0
    %3815 = vmatpush1.msra.mxu0 0.0
    %3816 = vmatprep.subr.mxu0 0.0
    %3817 = vmatpush1.msra.mxu0 0.0
    %3818 = vmatprep.subr.mxu0 0.0
    %3819 = vmatpush1.msra.mxu0 0.0
    %3820 = vmatprep.subr.mxu0 0.0
    %3821 = vmatpush1.msra.mxu0 0.0
    %3822 = vmatprep.subr.mxu0 0.0
    %3823 = vmatpush1.msra.mxu0 0.0
    %3824 = vmatprep.subr.mxu0 0.0
    %3825 = vmatpush1.msra.mxu0 0.0
    %3826 = vmatprep.subr.mxu0 0.0
    %3827 = vmatpush1.msra.mxu0 0.0
    %3828 = vmatprep.subr.mxu0 0.0
    %3829 = vmatpush1.msra.mxu0 0.0
    %3830 = vmatprep.subr.mxu0 0.0
    %3831 = vmatpush1.msra.mxu0 0.0
    %3832 = vmatprep.subr.mxu0 0.0
    %3833 = vmatpush1.msra.mxu0 0.0
    %3834 = vmatprep.subr.mxu0 0.0
    %3835 = vmatpush1.msra.mxu0 0.0
    %3836 = vmatprep.mubr.f32.mxu0 0.0
    %3837 = vmatmul.mubr.f32.gmra.mrb[0].mxu0 %v3613
    %v3838 = vpop.f32.mrb[0].mxu0
    %v3839 = vadd.f32 0.0, %v3838
    %v3840 = vpop.f32.mrb[0].mxu0
    %v3841 = vadd.f32 0.0, %v3840
    %3842 = vmatprep.mubr.f32.mxu0 0.0
    %3843 = vmatmul.mubr.f32.gmra.mrb[0].mxu0 %v3616
    %v3844 = vpop.f32.mrb[0].mxu0
    %v3845 = vadd.f32 0.0, %v3844
    %v3846 = vpop.f32.mrb[0].mxu0
    %v3847 = vadd.f32 0.0, %v3846
    %3848 = vdwg.mxu0
    %3849 = vmatprep.subr.mxu0 0.0
    %3850 = vmatpush1.msra.mxu0 %v3562
    %3851 = vmatprep.subr.mxu0 0.0
    %3852 = vmatpush1.msra.mxu0 %v3569
    %3853 = vmatprep.subr.mxu0 0.0
    %3854 = vmatpush1.msra.mxu0 %v3576
    %3855 = vmatprep.subr.mxu0 0.0
    %3856 = vmatpush1.msra.mxu0 %v3583
    %3857 = vmatprep.subr.mxu0 0.0
    %3858 = vmatpush1.msra.mxu0 %v3590
    %3859 = vmatprep.subr.mxu0 0.0
    %3860 = vmatpush1.msra.mxu0 %v3597
    %3861 = vmatprep.subr.mxu0 0.0
    %3862 = vmatpush1.msra.mxu0 %v3604
    %3863 = vmatprep.subr.mxu0 0.0
    %3864 = vmatpush1.msra.mxu0 %v3611
    %3865 = vmatprep.subr.mxu0 0.0
    %3866 = vmatpush1.msra.mxu0 0.0
    %3867 = vmatprep.subr.mxu0 0.0
    %3868 = vmatpush1.msra.mxu0 0.0
    %3869 = vmatprep.subr.mxu0 0.0
    %3870 = vmatpush1.msra.mxu0 0.0
    %3871 = vmatprep.subr.mxu0 0.0
    %3872 = vmatpush1.msra.mxu0 0.0
    %3873 = vmatprep.subr.mxu0 0.0
    %3874 = vmatpush1.msra.mxu0 0.0
    %3875 = vmatprep.subr.mxu0 0.0
    %3876 = vmatpush1.msra.mxu0 0.0
    %3877 = vmatprep.subr.mxu0 0.0
    %3878 = vmatpush1.msra.mxu0 0.0
    %3879 = vmatprep.subr.mxu0 0.0
    %3880 = vmatpush1.msra.mxu0 0.0
    %3881 = vmatprep.subr.mxu0 0.0
    %3882 = vmatpush1.msra.mxu0 0.0
    %3883 = vmatprep.subr.mxu0 0.0
    %3884 = vmatpush1.msra.mxu0 0.0
    %3885 = vmatprep.subr.mxu0 0.0
    %3886 = vmatpush1.msra.mxu0 0.0
    %3887 = vmatprep.subr.mxu0 0.0
    %3888 = vmatpush1.msra.mxu0 0.0
    %3889 = vmatprep.subr.mxu0 0.0
    %3890 = vmatpush1.msra.mxu0 0.0
    %3891 = vmatprep.subr.mxu0 0.0
    %3892 = vmatpush1.msra.mxu0 0.0
    %3893 = vmatprep.subr.mxu0 0.0
    %3894 = vmatpush1.msra.mxu0 0.0
    %3895 = vmatprep.subr.mxu0 0.0
    %3896 = vmatpush1.msra.mxu0 0.0
    %3897 = vmatprep.subr.mxu0 0.0
    %3898 = vmatpush1.msra.mxu0 0.0
    %3899 = vmatprep.subr.mxu0 0.0
    %3900 = vmatpush1.msra.mxu0 0.0
    %3901 = vmatprep.subr.mxu0 0.0
    %3902 = vmatpush1.msra.mxu0 0.0
    %3903 = vmatprep.subr.mxu0 0.0
    %3904 = vmatpush1.msra.mxu0 0.0
    %3905 = vmatprep.subr.mxu0 0.0
    %3906 = vmatpush1.msra.mxu0 0.0
    %3907 = vmatprep.subr.mxu0 0.0
    %3908 = vmatpush1.msra.mxu0 0.0
    %3909 = vmatprep.subr.mxu0 0.0
    %3910 = vmatpush1.msra.mxu0 0.0
    %3911 = vmatprep.subr.mxu0 0.0
    %3912 = vmatpush1.msra.mxu0 0.0
    %3913 = vmatprep.mubr.f32.mxu0 0.0
    %3914 = vmatmul.mubr.f32.gmra.mrb[0].mxu0 %v3613
    %v3915 = vpop.f32.mrb[0].mxu0
    %v3916 = vadd.f32 0.0, %v3915
    %v3917 = vpop.f32.mrb[0].mxu0
    %3918 = vmatprep.mubr.f32.mxu0 0.0
    %3919 = vmatmul.mubr.f32.gmra.mrb[0].mxu0 %v3616
    %v3920 = vpop.f32.mrb[0].mxu0
    %v3921 = vadd.f32 0.0, %v3920
    %v3922 = vpop.f32.mrb[0].mxu0
    %3923 = vdwg.mxu0
    %3924 = vrot.lane.b32.xlu0 %v3685, 72
    %v3925 = vpop.permute.xlu0 %3924
    %v3926 = vsel %vm419, %v3925, %v3916
    %3927 = vrot.lane.b32.xlu0 %v3687, 72
    %v3928 = vpop.permute.xlu0 %3927
    %3929 = vrot.lane.b32.xlu0 %v3762, 72
    %v3930 = vpop.permute.xlu0 %3929
    %3931 = vrot.lane.b32.xlu0 %v3764, 72
    %v3932 = vpop.permute.xlu0 %3931
    %3933 = vrot.lane.b32.xlu0 %v3839, 72
    %v3934 = vpop.permute.xlu0 %3933
    %3935 = vrot.lane.b32.xlu0 %v3841, 72
    %v3936 = vpop.permute.xlu0 %3935
    %3937 = vrot.lane.b32.xlu0 %v3926, 72
    %v3938 = vpop.permute.xlu0 %3937
    %v3939 = vsel %vm419, %v3928, %v3925
    %v3940 = vsel %vm419, %v3930, %v3928
    %v3941 = vsel %vm419, %v3932, %v3930
    %v3942 = vsel %vm419, %v3934, %v3932
    %v3943 = vsel %vm419, %v3936, %v3934
    %v3944 = vsel %vm419, %v3938, %v3936
    %3952 = vrot.lane.b32.xlu0 %v46, 63
    %v3953 = vpop.permute.xlu0 %3952
    %3954 = vrot.lane.b32.xlu0 %v47, 63
    %v3955 = vpop.permute.xlu0 %3954
    %3956 = vrot.lane.b32.xlu0 %v48, 63
    %v3957 = vpop.permute.xlu0 %3956
    %3958 = vrot.lane.b32.xlu0 %v49, 63
    %v3959 = vpop.permute.xlu0 %3958
    %3960 = vrot.lane.b32.xlu0 %v50, 63
    %v3961 = vpop.permute.xlu0 %3960
    %3962 = vrot.lane.b32.xlu0 %v51, 63
    %v3963 = vpop.permute.xlu0 %3962
    %3964 = vrot.lane.b32.xlu0 %v52, 63
    %v3965 = vpop.permute.xlu0 %3964
    %v3966 = vsel %vm490, %v3953, %v3955
    %v3967 = vsel %vm490, %v3955, %v3957
    %v3968 = vsel %vm490, %v3957, %v3959
    %v3969 = vsel %vm490, %v3959, %v3961
    %v3970 = vsel %vm490, %v3961, %v3963
    %v3971 = vsel %vm490, %v3963, %v3965
    %v3980 = vmul.f32 %v3926, %v3953
    %v3981 = vmul.f32 %v3939, %v3966
    %v3982 = vmul.f32 %v3940, %v3967
    %v3983 = vmul.f32 %v3941, %v3968
    %v3984 = vmul.f32 %v3942, %v3969
    %v3985 = vmul.f32 %v3943, %v3970
    %v3986 = vmul.f32 %v3944, %v3971
    %v3987 = vmul.f32 %v3938, %v3965
    %v3996 = vrot.slane %v3980, 4
    %v3997 = vrot.slane %v3981, 4
    %v3998 = vrot.slane %v3982, 4
    %v3999 = vrot.slane %v3983, 4
    %v4000 = vrot.slane %v3984, 4
    %v4001 = vrot.slane %v3985, 4
    %v4002 = vrot.slane %v3986, 4
    %v4003 = vrot.slane %v3987, 4
    %4004 = vrot.lane.b32.xlu0 %v3996, 65
    %v4005 = vpop.permute.xlu0 %4004
    %4006 = vrot.lane.b32.xlu0 %v3997, 65
    %v4007 = vpop.permute.xlu0 %4006
    %4008 = vrot.lane.b32.xlu0 %v3998, 65
    %v4009 = vpop.permute.xlu0 %4008
    %4010 = vrot.lane.b32.xlu0 %v3999, 65
    %v4011 = vpop.permute.xlu0 %4010
    %4012 = vrot.lane.b32.xlu0 %v4000, 65
    %v4013 = vpop.permute.xlu0 %4012
    %4014 = vrot.lane.b32.xlu0 %v4001, 65
    %v4015 = vpop.permute.xlu0 %4014
    %4016 = vrot.lane.b32.xlu0 %v4002, 65
    %v4017 = vpop.permute.xlu0 %4016
    %4018 = vrot.lane.b32.xlu0 %v4003, 65
    %v4019 = vpop.permute.xlu0 %4018
    %v4020 = vsel %vm634, %v4005, %v4007
    %v4021 = vsel %vm634, %v4007, %v4009
    %v4022 = vsel %vm634, %v4009, %v4011
    %v4023 = vsel %vm634, %v4011, %v4013
    %v4024 = vsel %vm634, %v4013, %v4015
    %v4025 = vsel %vm634, %v4015, %v4017
    %v4026 = vsel %vm634, %v4017, %v4019
    %v4034 = vadd.f32 %v3685, %v4020
    %v4035 = vadd.f32 %v3687, %v4021
    %v4036 = vadd.f32 %v3762, %v4022
    %v4037 = vadd.f32 %v3764, %v4023
    %v4038 = vadd.f32 %v3839, %v4024
    %v4039 = vadd.f32 %v3841, %v4025
    %v4040 = vadd.f32 %v3916, %v4026
    %v4048 = vrot.slane %v3685, 1
    %v4049 = vrot.slane %v3687, 1
    %v4050 = vrot.slane %v3762, 1
    %v4051 = vrot.slane %v3764, 1
    %v4052 = vrot.slane %v3839, 1
    %v4053 = vrot.slane %v3841, 1
    %v4054 = vrot.slane %v3916, 1
    %4062 = vrot.lane.b32.xlu0 %v4048, 72
    %v4063 = vpop.permute.xlu0 %4062
    %v4064 = vsel %vm419, %v4063, %v4054
    %4065 = vrot.lane.b32.xlu0 %v4049, 72
    %v4066 = vpop.permute.xlu0 %4065
    %4067 = vrot.lane.b32.xlu0 %v4050, 72
    %v4068 = vpop.permute.xlu0 %4067
    %4069 = vrot.lane.b32.xlu0 %v4051, 72
    %v4070 = vpop.permute.xlu0 %4069
    %4071 = vrot.lane.b32.xlu0 %v4052, 72
    %v4072 = vpop.permute.xlu0 %4071
    %4073 = vrot.lane.b32.xlu0 %v4053, 72
    %v4074 = vpop.permute.xlu0 %4073
    %4075 = vrot.lane.b32.xlu0 %v4064, 72
    %v4076 = vpop.permute.xlu0 %4075
    %v4077 = vsel %vm419, %v4066, %v4063
    %v4078 = vsel %vm419, %v4068, %v4066
    %v4079 = vsel %vm419, %v4070, %v4068
    %v4080 = vsel %vm419, %v4072, %v4070
    %v4081 = vsel %vm419, %v4074, %v4072
    %v4082 = vsel %vm419, %v4076, %v4074
    %v4083 = vrot.slane %v46, 1
    %v4084 = vrot.slane %v47, 1
    %v4085 = vrot.slane %v48, 1
    %v4086 = vrot.slane %v49, 1
    %v4087 = vrot.slane %v50, 1
    %v4088 = vrot.slane %v51, 1
    %v4089 = vrot.slane %v52, 1
    %4090 = vrot.lane.b32.xlu0 %v4083, 64
    %v4091 = vpop.permute.xlu0 %4090
    %4092 = vrot.lane.b32.xlu0 %v4084, 64
    %v4093 = vpop.permute.xlu0 %4092
    %4094 = vrot.lane.b32.xlu0 %v4085, 64
    %v4095 = vpop.permute.xlu0 %4094
    %4096 = vrot.lane.b32.xlu0 %v4086, 64
    %v4097 = vpop.permute.xlu0 %4096
    %4098 = vrot.lane.b32.xlu0 %v4087, 64
    %v4099 = vpop.permute.xlu0 %4098
    %4100 = vrot.lane.b32.xlu0 %v4088, 64
    %v4101 = vpop.permute.xlu0 %4100
    %4102 = vrot.lane.b32.xlu0 %v4089, 64
    %v4103 = vpop.permute.xlu0 %4102
    %v4104 = vsel %vm562, %v4091, %v4093
    %v4105 = vsel %vm562, %v4093, %v4095
    %v4106 = vsel %vm562, %v4095, %v4097
    %v4107 = vsel %vm562, %v4097, %v4099
    %v4108 = vsel %vm562, %v4099, %v4101
    %v4109 = vsel %vm562, %v4101, %v4103
    %v4118 = vmul.f32 %v4064, %v4091
    %v4119 = vmul.f32 %v4077, %v4104
    %v4120 = vmul.f32 %v4078, %v4105
    %v4121 = vmul.f32 %v4079, %v4106
    %v4122 = vmul.f32 %v4080, %v4107
    %v4123 = vmul.f32 %v4081, %v4108
    %v4124 = vmul.f32 %v4082, %v4109
    %v4125 = vmul.f32 %v4076, %v4103
    %v4134 = vrot.slane %v4118, 4
    %v4135 = vrot.slane %v4119, 4
    %v4136 = vrot.slane %v4120, 4
    %v4137 = vrot.slane %v4121, 4
    %v4138 = vrot.slane %v4122, 4
    %v4139 = vrot.slane %v4123, 4
    %v4140 = vrot.slane %v4124, 4
    %v4141 = vrot.slane %v4125, 4
    %4142 = vrot.lane.b32.xlu0 %v4134, 64
    %v4143 = vpop.permute.xlu0 %4142
    %4144 = vrot.lane.b32.xlu0 %v4135, 64
    %v4145 = vpop.permute.xlu0 %4144
    %4146 = vrot.lane.b32.xlu0 %v4136, 64
    %v4147 = vpop.permute.xlu0 %4146
    %4148 = vrot.lane.b32.xlu0 %v4137, 64
    %v4149 = vpop.permute.xlu0 %4148
    %4150 = vrot.lane.b32.xlu0 %v4138, 64
    %v4151 = vpop.permute.xlu0 %4150
    %4152 = vrot.lane.b32.xlu0 %v4139, 64
    %v4153 = vpop.permute.xlu0 %4152
    %4154 = vrot.lane.b32.xlu0 %v4140, 64
    %v4155 = vpop.permute.xlu0 %4154
    %4156 = vrot.lane.b32.xlu0 %v4141, 64
    %v4157 = vpop.permute.xlu0 %4156
    %v4158 = vsel %vm562, %v4143, %v4145
    %v4159 = vsel %vm562, %v4145, %v4147
    %v4160 = vsel %vm562, %v4147, %v4149
    %v4161 = vsel %vm562, %v4149, %v4151
    %v4162 = vsel %vm562, %v4151, %v4153
    %v4163 = vsel %vm562, %v4153, %v4155
    %v4164 = vsel %vm562, %v4155, %v4157
    %v4172 = vadd.f32 %v4034, %v4158
    %v4173 = vadd.f32 %v4035, %v4159
    %v4174 = vadd.f32 %v4036, %v4160
    %v4175 = vadd.f32 %v4037, %v4161
    %v4176 = vadd.f32 %v4038, %v4162
    %v4177 = vadd.f32 %v4039, %v4163
    %v4178 = vadd.f32 %v4040, %v4164
    %v4179 = vrot.slane %v3685, 2
    %v4180 = vrot.slane %v3687, 2
    %v4181 = vrot.slane %v3762, 2
    %v4182 = vrot.slane %v3764, 2
    %v4183 = vrot.slane %v3839, 2
    %v4184 = vrot.slane %v3841, 2
    %v4185 = vrot.slane %v3916, 2
    %4193 = vrot.lane.b32.xlu0 %v4179, 72
    %v4194 = vpop.permute.xlu0 %4193
    %v4195 = vsel %vm419, %v4194, %v4185
    %4196 = vrot.lane.b32.xlu0 %v4180, 72
    %v4197 = vpop.permute.xlu0 %4196
    %4198 = vrot.lane.b32.xlu0 %v4181, 72
    %v4199 = vpop.permute.xlu0 %4198
    %4200 = vrot.lane.b32.xlu0 %v4182, 72
    %v4201 = vpop.permute.xlu0 %4200
    %4202 = vrot.lane.b32.xlu0 %v4183, 72
    %v4203 = vpop.permute.xlu0 %4202
    %4204 = vrot.lane.b32.xlu0 %v4184, 72
    %v4205 = vpop.permute.xlu0 %4204
    %4206 = vrot.lane.b32.xlu0 %v4195, 72
    %v4207 = vpop.permute.xlu0 %4206
    %v4208 = vsel %vm419, %v4197, %v4194
    %v4209 = vsel %vm419, %v4199, %v4197
    %v4210 = vsel %vm419, %v4201, %v4199
    %v4211 = vsel %vm419, %v4203, %v4201
    %v4212 = vsel %vm419, %v4205, %v4203
    %v4213 = vsel %vm419, %v4207, %v4205
    %v4214 = vrot.slane %v46, 2
    %v4215 = vrot.slane %v47, 2
    %v4216 = vrot.slane %v48, 2
    %v4217 = vrot.slane %v49, 2
    %v4218 = vrot.slane %v50, 2
    %v4219 = vrot.slane %v51, 2
    %v4220 = vrot.slane %v52, 2
    %4221 = vrot.lane.b32.xlu0 %v4214, 65
    %v4222 = vpop.permute.xlu0 %4221
    %4223 = vrot.lane.b32.xlu0 %v4215, 65
    %v4224 = vpop.permute.xlu0 %4223
    %4225 = vrot.lane.b32.xlu0 %v4216, 65
    %v4226 = vpop.permute.xlu0 %4225
    %4227 = vrot.lane.b32.xlu0 %v4217, 65
    %v4228 = vpop.permute.xlu0 %4227
    %4229 = vrot.lane.b32.xlu0 %v4218, 65
    %v4230 = vpop.permute.xlu0 %4229
    %4231 = vrot.lane.b32.xlu0 %v4219, 65
    %v4232 = vpop.permute.xlu0 %4231
    %4233 = vrot.lane.b32.xlu0 %v4220, 65
    %v4234 = vpop.permute.xlu0 %4233
    %v4235 = vsel %vm634, %v4222, %v4224
    %v4236 = vsel %vm634, %v4224, %v4226
    %v4237 = vsel %vm634, %v4226, %v4228
    %v4238 = vsel %vm634, %v4228, %v4230
    %v4239 = vsel %vm634, %v4230, %v4232
    %v4240 = vsel %vm634, %v4232, %v4234
    %v4249 = vmul.f32 %v4195, %v4222
    %v4250 = vmul.f32 %v4208, %v4235
    %v4251 = vmul.f32 %v4209, %v4236
    %v4252 = vmul.f32 %v4210, %v4237
    %v4253 = vmul.f32 %v4211, %v4238
    %v4254 = vmul.f32 %v4212, %v4239
    %v4255 = vmul.f32 %v4213, %v4240
    %v4256 = vmul.f32 %v4207, %v4234
    %v4265 = vrot.slane %v4249, 4
    %v4266 = vrot.slane %v4250, 4
    %v4267 = vrot.slane %v4251, 4
    %v4268 = vrot.slane %v4252, 4
    %v4269 = vrot.slane %v4253, 4
    %v4270 = vrot.slane %v4254, 4
    %v4271 = vrot.slane %v4255, 4
    %v4272 = vrot.slane %v4256, 4
    %4273 = vrot.lane.b32.xlu0 %v4265, 63
    %v4274 = vpop.permute.xlu0 %4273
    %4275 = vrot.lane.b32.xlu0 %v4266, 63
    %v4276 = vpop.permute.xlu0 %4275
    %4277 = vrot.lane.b32.xlu0 %v4267, 63
    %v4278 = vpop.permute.xlu0 %4277
    %4279 = vrot.lane.b32.xlu0 %v4268, 63
    %v4280 = vpop.permute.xlu0 %4279
    %4281 = vrot.lane.b32.xlu0 %v4269, 63
    %v4282 = vpop.permute.xlu0 %4281
    %4283 = vrot.lane.b32.xlu0 %v4270, 63
    %v4284 = vpop.permute.xlu0 %4283
    %4285 = vrot.lane.b32.xlu0 %v4271, 63
    %v4286 = vpop.permute.xlu0 %4285
    %4287 = vrot.lane.b32.xlu0 %v4272, 63
    %v4288 = vpop.permute.xlu0 %4287
    %v4289 = vsel %vm490, %v4274, %v4276
    %v4290 = vsel %vm490, %v4276, %v4278
    %v4291 = vsel %vm490, %v4278, %v4280
    %v4292 = vsel %vm490, %v4280, %v4282
    %v4293 = vsel %vm490, %v4282, %v4284
    %v4294 = vsel %vm490, %v4284, %v4286
    %v4295 = vsel %vm490, %v4286, %v4288
    %v4303 = vadd.f32 %v4172, %v4289
    %v4304 = vadd.f32 %v4173, %v4290
    %v4305 = vadd.f32 %v4174, %v4291
    %v4306 = vadd.f32 %v4175, %v4292
    %v4307 = vadd.f32 %v4176, %v4293
    %v4308 = vadd.f32 %v4177, %v4294
    %v4309 = vadd.f32 %v4178, %v4295
    %v4310 = vrot.slane %v3685, 3
    %v4311 = vrot.slane %v3687, 3
    %v4312 = vrot.slane %v3762, 3
    %v4313 = vrot.slane %v3764, 3
    %v4314 = vrot.slane %v3839, 3
    %v4315 = vrot.slane %v3841, 3
    %v4316 = vrot.slane %v3916, 3
    %4324 = vrot.lane.b32.xlu0 %v4310, 72
    %v4325 = vpop.permute.xlu0 %4324
    %v4326 = vsel %vm419, %v4325, %v4316
    %4327 = vrot.lane.b32.xlu0 %v4311, 72
    %v4328 = vpop.permute.xlu0 %4327
    %4329 = vrot.lane.b32.xlu0 %v4312, 72
    %v4330 = vpop.permute.xlu0 %4329
    %4331 = vrot.lane.b32.xlu0 %v4313, 72
    %v4332 = vpop.permute.xlu0 %4331
    %4333 = vrot.lane.b32.xlu0 %v4314, 72
    %v4334 = vpop.permute.xlu0 %4333
    %4335 = vrot.lane.b32.xlu0 %v4315, 72
    %v4336 = vpop.permute.xlu0 %4335
    %4337 = vrot.lane.b32.xlu0 %v4326, 72
    %v4338 = vpop.permute.xlu0 %4337
    %v4339 = vsel %vm419, %v4328, %v4325
    %v4340 = vsel %vm419, %v4330, %v4328
    %v4341 = vsel %vm419, %v4332, %v4330
    %v4342 = vsel %vm419, %v4334, %v4332
    %v4343 = vsel %vm419, %v4336, %v4334
    %v4344 = vsel %vm419, %v4338, %v4336
    %v4345 = vrot.slane %v46, 3
    %v4346 = vrot.slane %v47, 3
    %v4347 = vrot.slane %v48, 3
    %v4348 = vrot.slane %v49, 3
    %v4349 = vrot.slane %v50, 3
    %v4350 = vrot.slane %v51, 3
    %v4351 = vrot.slane %v52, 3
    %4352 = vrot.lane.b32.xlu0 %v4345, 71
    %v4353 = vpop.permute.xlu0 %4352
    %4354 = vrot.lane.b32.xlu0 %v4346, 71
    %v4355 = vpop.permute.xlu0 %4354
    %4356 = vrot.lane.b32.xlu0 %v4347, 71
    %v4357 = vpop.permute.xlu0 %4356
    %4358 = vrot.lane.b32.xlu0 %v4348, 71
    %v4359 = vpop.permute.xlu0 %4358
    %4360 = vrot.lane.b32.xlu0 %v4349, 71
    %v4361 = vpop.permute.xlu0 %4360
    %4362 = vrot.lane.b32.xlu0 %v4350, 71
    %v4363 = vpop.permute.xlu0 %4362
    %4364 = vrot.lane.b32.xlu0 %v4351, 71
    %v4365 = vpop.permute.xlu0 %4364
    %v4366 = vsel %vm706, %v4353, %v4355
    %v4367 = vsel %vm706, %v4355, %v4357
    %v4368 = vsel %vm706, %v4357, %v4359
    %v4369 = vsel %vm706, %v4359, %v4361
    %v4370 = vsel %vm706, %v4361, %v4363
    %v4371 = vsel %vm706, %v4363, %v4365
    %v4380 = vmul.f32 %v4326, %v4353
    %v4381 = vmul.f32 %v4339, %v4366
    %v4382 = vmul.f32 %v4340, %v4367
    %v4383 = vmul.f32 %v4341, %v4368
    %v4384 = vmul.f32 %v4342, %v4369
    %v4385 = vmul.f32 %v4343, %v4370
    %v4386 = vmul.f32 %v4344, %v4371
    %v4387 = vmul.f32 %v4338, %v4365
    %v4396 = vrot.slane %v4380, 4
    %v4397 = vrot.slane %v4381, 4
    %v4398 = vrot.slane %v4382, 4
    %v4399 = vrot.slane %v4383, 4
    %v4400 = vrot.slane %v4384, 4
    %v4401 = vrot.slane %v4385, 4
    %v4402 = vrot.slane %v4386, 4
    %v4403 = vrot.slane %v4387, 4
    %4404 = vrot.lane.b32.xlu0 %v4396, 57
    %v4405 = vpop.permute.xlu0 %4404
    %4406 = vrot.lane.b32.xlu0 %v4397, 57
    %v4407 = vpop.permute.xlu0 %4406
    %4408 = vrot.lane.b32.xlu0 %v4398, 57
    %v4409 = vpop.permute.xlu0 %4408
    %4410 = vrot.lane.b32.xlu0 %v4399, 57
    %v4411 = vpop.permute.xlu0 %4410
    %4412 = vrot.lane.b32.xlu0 %v4400, 57
    %v4413 = vpop.permute.xlu0 %4412
    %4414 = vrot.lane.b32.xlu0 %v4401, 57
    %v4415 = vpop.permute.xlu0 %4414
    %4416 = vrot.lane.b32.xlu0 %v4402, 57
    %v4417 = vpop.permute.xlu0 %4416
    %4418 = vrot.lane.b32.xlu0 %v4403, 57
    %v4419 = vpop.permute.xlu0 %4418
    %v4420 = vsel %vm1203, %v4405, %v4407
    %v4421 = vsel %vm1203, %v4407, %v4409
    %v4422 = vsel %vm1203, %v4409, %v4411
    %v4423 = vsel %vm1203, %v4411, %v4413
    %v4424 = vsel %vm1203, %v4413, %v4415
    %v4425 = vsel %vm1203, %v4415, %v4417
    %v4426 = vsel %vm1203, %v4417, %v4419
    %v4434 = vadd.f32 %v4303, %v4420
    %v4435 = vadd.f32 %v4304, %v4421
    %v4436 = vadd.f32 %v4305, %v4422
    %v4437 = vadd.f32 %v4306, %v4423
    %v4438 = vadd.f32 %v4307, %v4424
    %v4439 = vadd.f32 %v4308, %v4425
    %v4440 = vadd.f32 %v4309, %v4426
    %v4441 = vrot.slane %v3685, 5
    %v4442 = vrot.slane %v3687, 5
    %v4443 = vrot.slane %v3762, 5
    %v4444 = vrot.slane %v3764, 5
    %v4445 = vrot.slane %v3839, 5
    %v4446 = vrot.slane %v3841, 5
    %v4447 = vrot.slane %v3916, 5
    %4455 = vrot.lane.b32.xlu0 %v4441, 72
    %v4456 = vpop.permute.xlu0 %4455
    %v4457 = vsel %vm419, %v4456, %v4447
    %v4458 = vrot.slane %v46, 5
    %v4459 = vrot.slane %v47, 5
    %v4460 = vrot.slane %v48, 5
    %v4461 = vrot.slane %v49, 5
    %v4462 = vrot.slane %v50, 5
    %v4463 = vrot.slane %v51, 5
    %v4464 = vrot.slane %v52, 5
    %4465 = vrot.lane.b32.xlu0 %v4458, 1
    %v4466 = vpop.permute.xlu0 %4465
    %4467 = vrot.lane.b32.xlu0 %v4459, 1
    %v4468 = vpop.permute.xlu0 %4467
    %4469 = vrot.lane.b32.xlu0 %v4460, 1
    %v4470 = vpop.permute.xlu0 %4469
    %4471 = vrot.lane.b32.xlu0 %v4461, 1
    %v4472 = vpop.permute.xlu0 %4471
    %4473 = vrot.lane.b32.xlu0 %v4462, 1
    %v4474 = vpop.permute.xlu0 %4473
    %4475 = vrot.lane.b32.xlu0 %v4463, 1
    %v4476 = vpop.permute.xlu0 %4475
    %4477 = vrot.lane.b32.xlu0 %v4464, 1
    %v4478 = vpop.permute.xlu0 %4477
    %v4479 = vsel %vm778, %v4466, %v4468
    %v4480 = vsel %vm778, %v4468, %v4470
    %v4481 = vsel %vm778, %v4470, %v4472
    %v4482 = vsel %vm778, %v4472, %v4474
    %v4483 = vsel %vm778, %v4474, %v4476
    %v4484 = vsel %vm778, %v4476, %v4478
    %v4492 = vmul.f32 %v4441, %v4466
    %v4493 = vmul.f32 %v4442, %v4479
    %v4494 = vmul.f32 %v4443, %v4480
    %v4495 = vmul.f32 %v4444, %v4481
    %v4496 = vmul.f32 %v4445, %v4482
    %v4497 = vmul.f32 %v4446, %v4483
    %v4498 = vmul.f32 %v4457, %v4484
    %v4506 = vrot.slane %v4492, 4
    %v4507 = vrot.slane %v4493, 4
    %v4508 = vrot.slane %v4494, 4
    %v4509 = vrot.slane %v4495, 4
    %v4510 = vrot.slane %v4496, 4
    %v4511 = vrot.slane %v4497, 4
    %v4512 = vrot.slane %v4498, 4
    %4513 = vrot.lane.b32.xlu0 %v4506, 127
    %v4514 = vpop.permute.xlu0 %4513
    %4515 = vrot.lane.b32.xlu0 %v4507, 127
    %v4516 = vpop.permute.xlu0 %4515
    %4517 = vrot.lane.b32.xlu0 %v4508, 127
    %v4518 = vpop.permute.xlu0 %4517
    %4519 = vrot.lane.b32.xlu0 %v4509, 127
    %v4520 = vpop.permute.xlu0 %4519
    %4521 = vrot.lane.b32.xlu0 %v4510, 127
    %v4522 = vpop.permute.xlu0 %4521
    %4523 = vrot.lane.b32.xlu0 %v4511, 127
    %v4524 = vpop.permute.xlu0 %4523
    %4525 = vrot.lane.b32.xlu0 %v4512, 127
    %v4526 = vpop.permute.xlu0 %4525
    %v4527 = vsel %vm1261, %v4514, %v4516
    %v4528 = vsel %vm1261, %v4516, %v4518
    %v4529 = vsel %vm1261, %v4518, %v4520
    %v4530 = vsel %vm1261, %v4520, %v4522
    %v4531 = vsel %vm1261, %v4522, %v4524
    %v4532 = vsel %vm1261, %v4524, %v4526
    %v4540 = vadd.f32 %v4434, %v4527
    %v4541 = vadd.f32 %v4435, %v4528
    %v4542 = vadd.f32 %v4436, %v4529
    %v4543 = vadd.f32 %v4437, %v4530
    %v4544 = vadd.f32 %v4438, %v4531
    %v4545 = vadd.f32 %v4439, %v4532
    %v4546 = vadd.f32 %v4440, %v4526
    %v4547 = vrot.slane %v3685, 6
    %v4548 = vrot.slane %v3687, 6
    %v4549 = vrot.slane %v3762, 6
    %v4550 = vrot.slane %v3764, 6
    %v4551 = vrot.slane %v3839, 6
    %v4552 = vrot.slane %v3841, 6
    %v4553 = vrot.slane %v3916, 6
    %4561 = vrot.lane.b32.xlu0 %v4547, 72
    %v4562 = vpop.permute.xlu0 %4561
    %v4563 = vsel %vm419, %v4562, %v4553
    %v4564 = vrot.slane %v46, 6
    %v4565 = vrot.slane %v47, 6
    %v4566 = vrot.slane %v48, 6
    %v4567 = vrot.slane %v49, 6
    %v4568 = vrot.slane %v50, 6
    %v4569 = vrot.slane %v51, 6
    %v4570 = vrot.slane %v52, 6
    %4571 = vrot.lane.b32.xlu0 %v4564, 7
    %v4572 = vpop.permute.xlu0 %4571
    %4573 = vrot.lane.b32.xlu0 %v4565, 7
    %v4574 = vpop.permute.xlu0 %4573
    %4575 = vrot.lane.b32.xlu0 %v4566, 7
    %v4576 = vpop.permute.xlu0 %4575
    %4577 = vrot.lane.b32.xlu0 %v4567, 7
    %v4578 = vpop.permute.xlu0 %4577
    %4579 = vrot.lane.b32.xlu0 %v4568, 7
    %v4580 = vpop.permute.xlu0 %4579
    %4581 = vrot.lane.b32.xlu0 %v4569, 7
    %v4582 = vpop.permute.xlu0 %4581
    %4583 = vrot.lane.b32.xlu0 %v4570, 7
    %v4584 = vpop.permute.xlu0 %4583
    %v4585 = vsel %vm848, %v4572, %v4574
    %v4586 = vsel %vm848, %v4574, %v4576
    %v4587 = vsel %vm848, %v4576, %v4578
    %v4588 = vsel %vm848, %v4578, %v4580
    %v4589 = vsel %vm848, %v4580, %v4582
    %v4590 = vsel %vm848, %v4582, %v4584
    %v4598 = vmul.f32 %v4547, %v4572
    %v4599 = vmul.f32 %v4548, %v4585
    %v4600 = vmul.f32 %v4549, %v4586
    %v4601 = vmul.f32 %v4550, %v4587
    %v4602 = vmul.f32 %v4551, %v4588
    %v4603 = vmul.f32 %v4552, %v4589
    %v4604 = vmul.f32 %v4563, %v4590
    %v4612 = vrot.slane %v4598, 4
    %v4613 = vrot.slane %v4599, 4
    %v4614 = vrot.slane %v4600, 4
    %v4615 = vrot.slane %v4601, 4
    %v4616 = vrot.slane %v4602, 4
    %v4617 = vrot.slane %v4603, 4
    %v4618 = vrot.slane %v4604, 4
    %4619 = vrot.lane.b32.xlu0 %v4612, 121
    %v4620 = vpop.permute.xlu0 %4619
    %4621 = vrot.lane.b32.xlu0 %v4613, 121
    %v4622 = vpop.permute.xlu0 %4621
    %4623 = vrot.lane.b32.xlu0 %v4614, 121
    %v4624 = vpop.permute.xlu0 %4623
    %4625 = vrot.lane.b32.xlu0 %v4615, 121
    %v4626 = vpop.permute.xlu0 %4625
    %4627 = vrot.lane.b32.xlu0 %v4616, 121
    %v4628 = vpop.permute.xlu0 %4627
    %4629 = vrot.lane.b32.xlu0 %v4617, 121
    %v4630 = vpop.permute.xlu0 %4629
    %4631 = vrot.lane.b32.xlu0 %v4618, 121
    %v4632 = vpop.permute.xlu0 %4631
    %v4633 = vsel %vm1310, %v4620, %v4622
    %v4634 = vsel %vm1310, %v4622, %v4624
    %v4635 = vsel %vm1310, %v4624, %v4626
    %v4636 = vsel %vm1310, %v4626, %v4628
    %v4637 = vsel %vm1310, %v4628, %v4630
    %v4638 = vsel %vm1310, %v4630, %v4632
    %v4646 = vadd.f32 %v4540, %v4633
    %v4647 = vadd.f32 %v4541, %v4634
    %v4648 = vadd.f32 %v4542, %v4635
    %v4649 = vadd.f32 %v4543, %v4636
    %v4650 = vadd.f32 %v4544, %v4637
    %v4651 = vadd.f32 %v4545, %v4638
    %v4652 = vadd.f32 %v4546, %v4632
    %v4653 = vrot.slane %v3685, 7
    %v4654 = vrot.slane %v3687, 7
    %v4655 = vrot.slane %v3762, 7
    %v4656 = vrot.slane %v3764, 7
    %v4657 = vrot.slane %v3839, 7
    %v4658 = vrot.slane %v3841, 7
    %v4659 = vrot.slane %v3916, 7
    %4667 = vrot.lane.b32.xlu0 %v4653, 72
    %v4668 = vpop.permute.xlu0 %4667
    %v4669 = vsel %vm419, %v4668, %v4659
    %v4670 = vrot.slane %v46, 7
    %v4671 = vrot.slane %v47, 7
    %v4672 = vrot.slane %v48, 7
    %v4673 = vrot.slane %v49, 7
    %v4674 = vrot.slane %v50, 7
    %v4675 = vrot.slane %v51, 7
    %v4676 = vrot.slane %v52, 7
    %4677 = vrot.lane.b32.xlu0 %v4670, 8
    %v4678 = vpop.permute.xlu0 %4677
    %4679 = vrot.lane.b32.xlu0 %v4671, 8
    %v4680 = vpop.permute.xlu0 %4679
    %4681 = vrot.lane.b32.xlu0 %v4672, 8
    %v4682 = vpop.permute.xlu0 %4681
    %4683 = vrot.lane.b32.xlu0 %v4673, 8
    %v4684 = vpop.permute.xlu0 %4683
    %4685 = vrot.lane.b32.xlu0 %v4674, 8
    %v4686 = vpop.permute.xlu0 %4685
    %4687 = vrot.lane.b32.xlu0 %v4675, 8
    %v4688 = vpop.permute.xlu0 %4687
    %4689 = vrot.lane.b32.xlu0 %v4676, 8
    %v4690 = vpop.permute.xlu0 %4689
    %v4691 = vsel %vm918, %v4678, %v4680
    %v4692 = vsel %vm918, %v4680, %v4682
    %v4693 = vsel %vm918, %v4682, %v4684
    %v4694 = vsel %vm918, %v4684, %v4686
    %v4695 = vsel %vm918, %v4686, %v4688
    %v4696 = vsel %vm918, %v4688, %v4690
    %v4704 = vmul.f32 %v4653, %v4678
    %v4705 = vmul.f32 %v4654, %v4691
    %v4706 = vmul.f32 %v4655, %v4692
    %v4707 = vmul.f32 %v4656, %v4693
    %v4708 = vmul.f32 %v4657, %v4694
    %v4709 = vmul.f32 %v4658, %v4695
    %v4710 = vmul.f32 %v4669, %v4696
    %v4718 = vrot.slane %v4704, 4
    %v4719 = vrot.slane %v4705, 4
    %v4720 = vrot.slane %v4706, 4
    %v4721 = vrot.slane %v4707, 4
    %v4722 = vrot.slane %v4708, 4
    %v4723 = vrot.slane %v4709, 4
    %v4724 = vrot.slane %v4710, 4
    %4725 = vrot.lane.b32.xlu0 %v4718, 120
    %v4726 = vpop.permute.xlu0 %4725
    %4727 = vrot.lane.b32.xlu0 %v4719, 120
    %v4728 = vpop.permute.xlu0 %4727
    %4729 = vrot.lane.b32.xlu0 %v4720, 120
    %v4730 = vpop.permute.xlu0 %4729
    %4731 = vrot.lane.b32.xlu0 %v4721, 120
    %v4732 = vpop.permute.xlu0 %4731
    %4733 = vrot.lane.b32.xlu0 %v4722, 120
    %v4734 = vpop.permute.xlu0 %4733
    %4735 = vrot.lane.b32.xlu0 %v4723, 120
    %v4736 = vpop.permute.xlu0 %4735
    %4737 = vrot.lane.b32.xlu0 %v4724, 120
    %v4738 = vpop.permute.xlu0 %4737
    %v4739 = vsel %vm1359, %v4726, %v4728
    %v4740 = vsel %vm1359, %v4728, %v4730
    %v4741 = vsel %vm1359, %v4730, %v4732
    %v4742 = vsel %vm1359, %v4732, %v4734
    %v4743 = vsel %vm1359, %v4734, %v4736
    %v4744 = vsel %vm1359, %v4736, %v4738
    %v4752 = vadd.f32 %v4646, %v4739
    %v4753 = vadd.f32 %v4647, %v4740
    %v4754 = vadd.f32 %v4648, %v4741
    %v4755 = vadd.f32 %v4649, %v4742
    %v4756 = vadd.f32 %v4650, %v4743
    %v4757 = vadd.f32 %v4651, %v4744
    %v4758 = vadd.f32 %v4652, %v4738
    %4759 = vrot.lane.b32.xlu0 %v3691, 72
    %v4760 = vpop.permute.xlu0 %4759
    %v4761 = vsel %vm419, %v4760, %v3921
    %4769 = vrot.lane.b32.xlu0 %v53, 9
    %v4770 = vpop.permute.xlu0 %4769
    %4771 = vrot.lane.b32.xlu0 %v54, 9
    %v4772 = vpop.permute.xlu0 %4771
    %4773 = vrot.lane.b32.xlu0 %v55, 9
    %v4774 = vpop.permute.xlu0 %4773
    %4775 = vrot.lane.b32.xlu0 %v56, 9
    %v4776 = vpop.permute.xlu0 %4775
    %4777 = vrot.lane.b32.xlu0 %v57, 9
    %v4778 = vpop.permute.xlu0 %4777
    %4779 = vrot.lane.b32.xlu0 %v58, 9
    %v4780 = vpop.permute.xlu0 %4779
    %4781 = vrot.lane.b32.xlu0 %v59, 9
    %v4782 = vpop.permute.xlu0 %4781
    %v4783 = vsel %vm988, %v4770, %v4772
    %v4784 = vsel %vm988, %v4772, %v4774
    %v4785 = vsel %vm988, %v4774, %v4776
    %v4786 = vsel %vm988, %v4776, %v4778
    %v4787 = vsel %vm988, %v4778, %v4780
    %v4788 = vsel %vm988, %v4780, %v4782
    %v4796 = vmul.f32 %v3691, %v4770
    %v4797 = vmul.f32 %v3693, %v4783
    %v4798 = vmul.f32 %v3768, %v4784
    %v4799 = vmul.f32 %v3770, %v4785
    %v4800 = vmul.f32 %v3845, %v4786
    %v4801 = vmul.f32 %v3847, %v4787
    %v4802 = vmul.f32 %v4761, %v4788
    %v4810 = vrot.slane %v4796, 4
    %v4811 = vrot.slane %v4797, 4
    %v4812 = vrot.slane %v4798, 4
    %v4813 = vrot.slane %v4799, 4
    %v4814 = vrot.slane %v4800, 4
    %v4815 = vrot.slane %v4801, 4
    %v4816 = vrot.slane %v4802, 4
    %4817 = vrot.lane.b32.xlu0 %v4810, 119
    %v4818 = vpop.permute.xlu0 %4817
    %4819 = vrot.lane.b32.xlu0 %v4811, 119
    %v4820 = vpop.permute.xlu0 %4819
    %4821 = vrot.lane.b32.xlu0 %v4812, 119
    %v4822 = vpop.permute.xlu0 %4821
    %4823 = vrot.lane.b32.xlu0 %v4813, 119
    %v4824 = vpop.permute.xlu0 %4823
    %4825 = vrot.lane.b32.xlu0 %v4814, 119
    %v4826 = vpop.permute.xlu0 %4825
    %4827 = vrot.lane.b32.xlu0 %v4815, 119
    %v4828 = vpop.permute.xlu0 %4827
    %4829 = vrot.lane.b32.xlu0 %v4816, 119
    %v4830 = vpop.permute.xlu0 %4829
    %v4831 = vsel %vm1401, %v4818, %v4820
    %v4832 = vsel %vm1401, %v4820, %v4822
    %v4833 = vsel %vm1401, %v4822, %v4824
    %v4834 = vsel %vm1401, %v4824, %v4826
    %v4835 = vsel %vm1401, %v4826, %v4828
    %v4836 = vsel %vm1401, %v4828, %v4830
    %v4844 = vadd.f32 %v4752, %v4831
    %v4845 = vadd.f32 %v4753, %v4832
    %v4846 = vadd.f32 %v4754, %v4833
    %v4847 = vadd.f32 %v4755, %v4834
    %v4848 = vadd.f32 %v4756, %v4835
    %v4849 = vadd.f32 %v4757, %v4836
    %v4850 = vadd.f32 %v4758, %v4830
    %4852 = vset.pattern.permute.xlu0 0
    %4853 = vperm.xlu0 %4852, %v3363
    %v4854 = vpop.permute.xlu0 %4853
    %v4856 = vlaneseq
    %v4857 = vshrl.u32 %v4856, 7
    %v4858 = vsub.s32 0, %v4857
    %v4859 = vrot.slane %v4854, %v4858
    %v4860 = vadd.f32 %v4844, %v4859
    %v4861 = vadd.f32 %v4845, %v4859
    %v4862 = vadd.f32 %v4846, %v4859
    %v4863 = vadd.f32 %v4847, %v4859
    %v4864 = vadd.f32 %v4848, %v4859
    %v4865 = vadd.f32 %v4849, %v4859
    %v4866 = vadd.f32 %v4850, %v4859
    %v4874 = vcombine.high %v4860, %v4861
    %v4875 = vcombine.high %v4862, %v4863
    %v4876 = vcombine.high %v4864, %v4865
    %v4877 = vcombine.high %v4866, %v4866
    %v4879 = vunpack.c.l.s4 1966171168
    %v4880 = vunpack.c.0.s8 %v4879
    %v4881 = vlaneseq
    %v4882 = vshrl.u32 %v4881, 7
    %v4883 = vsub.s32 %v4880, %v4882
    %v4884 = vrot.slane %v4874, %v4883
    %v4886 = vunpack.c.l.s4 1966171168
    %v4887 = vunpack.c.0.s8 %v4886
    %v4888 = vlaneseq
    %v4889 = vshrl.u32 %v4888, 7
    %v4890 = vsub.s32 %v4887, %v4889
    %v4891 = vrot.slane %v4875, %v4890
    %v4893 = vunpack.c.l.s4 1966171168
    %v4894 = vunpack.c.0.s8 %v4893
    %v4895 = vlaneseq
    %v4896 = vshrl.u32 %v4895, 7
    %v4897 = vsub.s32 %v4894, %v4896
    %v4898 = vrot.slane %v4876, %v4897
    %v4900 = vunpack.c.l.s4 1966171168
    %v4901 = vunpack.c.0.s8 %v4900
    %v4902 = vlaneseq
    %v4903 = vshrl.u32 %v4902, 7
    %v4904 = vsub.s32 %v4901, %v4903
    %v4905 = vrot.slane %v4877, %v4904
    %v4906 = vcombine.low %v4884, %v4891
    %v4907 = vcombine.low %v4898, %v4905
    %v4909 = vunpack.c.l.s4 1966171168
    %v4910 = vunpack.c.0.s8 %v4909
    %v4911 = vlaneseq
    %v4912 = vshrl.u32 %v4911, 7
    %v4913 = vsub.s32 %v4910, %v4912
    %v4914 = vrot.slane %v4906, %v4913
    %v4916 = vunpack.c.l.s4 1966171168
    %v4917 = vunpack.c.0.s8 %v4916
    %v4918 = vlaneseq
    %v4919 = vshrl.u32 %v4918, 7
    %v4920 = vsub.s32 %v4917, %v4919
    %v4921 = vrot.slane %v4907, %v4920
    %v4922 = vcombine.low %v4914, %v4921
    %v4924 = vlaneseq
    %vm4925 = vcmp.ge.s32.totalorder %v4924, 0
    %vm4926 = vcmp.lt.s32.totalorder %v4924, 840
    %vm4927 = vmand %vm4925, %vm4926
    %4928 = vst.msk [vmem:[#allocation7] ss:$2 sm:$0x7f] %vm4927, %v4922
    %v4929 = vmul.f32 %v2993, %v3367
    %v4930 = vmul.f32 %v2994, %v3367
    %v4931 = vmul.f32 %v2995, %v3367
    %v4932 = vmul.f32 %v2996, %v3367
    %v4933 = vmul.f32 %v2997, %v3367
    %v4934 = vmul.f32 %v2998, %v3367
    %v4935 = vmul.f32 %v2999, %v3367
    %v4936 = vmul.f32 %v3000, %v3372
    %v4937 = vmul.f32 %v3001, %v3372
    %v4938 = vmul.f32 %v3002, %v3372
    %v4939 = vmul.f32 %v3003, %v3372
    %v4940 = vmul.f32 %v3004, %v3372
    %v4941 = vmul.f32 %v3005, %v3372
    %v4942 = vmul.f32 %v3006, %v3372
    %v4943 = vmul.f32 %v3007, %v3377
    %v4944 = vmul.f32 %v3008, %v3377
    %v4945 = vmul.f32 %v3009, %v3377
    %v4946 = vmul.f32 %v3010, %v3377
    %v4947 = vmul.f32 %v3011, %v3377
    %v4948 = vmul.f32 %v3012, %v3377
    %v4949 = vmul.f32 %v3013, %v3377
    %v4950 = vmul.f32 %v3014, %v3382
    %v4951 = vmul.f32 %v3015, %v3382
    %v4952 = vmul.f32 %v3016, %v3382
    %v4953 = vmul.f32 %v3017, %v3382
    %v4954 = vmul.f32 %v3018, %v3382
    %v4955 = vmul.f32 %v3019, %v3382
    %v4956 = vmul.f32 %v3020, %v3382
    %v4957 = vmul.f32 %v3021, %v3387
    %v4958 = vmul.f32 %v3022, %v3387
    %v4959 = vmul.f32 %v3023, %v3387
    %v4960 = vmul.f32 %v3024, %v3387
    %v4961 = vmul.f32 %v3025, %v3387
    %v4962 = vmul.f32 %v3026, %v3387
    %v4963 = vmul.f32 %v3027, %v3387
    %v4964 = vmul.f32 %v3028, %v3392
    %v4965 = vmul.f32 %v3029, %v3392
    %v4966 = vmul.f32 %v3030, %v3392
    %v4967 = vmul.f32 %v3031, %v3392
    %v4968 = vmul.f32 %v3032, %v3392
    %v4969 = vmul.f32 %v3033, %v3392
    %v4970 = vmul.f32 %v3034, %v3392
    %v4971 = vmul.f32 %v3035, %v3397
    %v4972 = vmul.f32 %v3036, %v3397
    %v4973 = vmul.f32 %v3037, %v3397
    %v4974 = vmul.f32 %v3038, %v3397
    %v4975 = vmul.f32 %v3039, %v3397
    %v4976 = vmul.f32 %v3040, %v3397
    %v4977 = vmul.f32 %v3041, %v3397
    %v4978 = vmul.f32 %v3042, %v3402
    %v4979 = vmul.f32 %v3043, %v3402
    %v4980 = vmul.f32 %v3044, %v3402
    %v4981 = vmul.f32 %v3045, %v3402
    %v4982 = vmul.f32 %v3046, %v3402
    %v4983 = vmul.f32 %v3047, %v3402
    %v4984 = vmul.f32 %v3048, %v3402
    %v4985 = vadd.f32 %v4929, %v3463
    %v4986 = vadd.f32 %v4930, %v3463
    %v4987 = vadd.f32 %v4931, %v3463
    %v4988 = vadd.f32 %v4932, %v3463
    %v4989 = vadd.f32 %v4933, %v3463
    %v4990 = vadd.f32 %v4934, %v3463
    %v4991 = vadd.f32 %v4935, %v3463
    %v4992 = vadd.f32 %v4936, %v3468
    %v4993 = vadd.f32 %v4937, %v3468
    %v4994 = vadd.f32 %v4938, %v3468
    %v4995 = vadd.f32 %v4939, %v3468
    %v4996 = vadd.f32 %v4940, %v3468
    %v4997 = vadd.f32 %v4941, %v3468
    %v4998 = vadd.f32 %v4942, %v3468
    %v4999 = vadd.f32 %v4943, %v3473
    %v5000 = vadd.f32 %v4944, %v3473
    %v5001 = vadd.f32 %v4945, %v3473
    %v5002 = vadd.f32 %v4946, %v3473
    %v5003 = vadd.f32 %v4947, %v3473
    %v5004 = vadd.f32 %v4948, %v3473
    %v5005 = vadd.f32 %v4949, %v3473
    %v5006 = vadd.f32 %v4950, %v3478
    %v5007 = vadd.f32 %v4951, %v3478
    %v5008 = vadd.f32 %v4952, %v3478
    %v5009 = vadd.f32 %v4953, %v3478
    %v5010 = vadd.f32 %v4954, %v3478
    %v5011 = vadd.f32 %v4955, %v3478
    %v5012 = vadd.f32 %v4956, %v3478
    %v5013 = vadd.f32 %v4957, %v3483
    %v5014 = vadd.f32 %v4958, %v3483
    %v5015 = vadd.f32 %v4959, %v3483
    %v5016 = vadd.f32 %v4960, %v3483
    %v5017 = vadd.f32 %v4961, %v3483
    %v5018 = vadd.f32 %v4962, %v3483
    %v5019 = vadd.f32 %v4963, %v3483
    %v5020 = vadd.f32 %v4964, %v3488
    %v5021 = vadd.f32 %v4965, %v3488
    %v5022 = vadd.f32 %v4966, %v3488
    %v5023 = vadd.f32 %v4967, %v3488
    %v5024 = vadd.f32 %v4968, %v3488
    %v5025 = vadd.f32 %v4969, %v3488
    %v5026 = vadd.f32 %v4970, %v3488
    %v5027 = vadd.f32 %v4971, %v3493
    %v5028 = vadd.f32 %v4972, %v3493
    %v5029 = vadd.f32 %v4973, %v3493
    %v5030 = vadd.f32 %v4974, %v3493
    %v5031 = vadd.f32 %v4975, %v3493
    %v5032 = vadd.f32 %v4976, %v3493
    %v5033 = vadd.f32 %v4977, %v3493
    %v5034 = vadd.f32 %v4978, %v3498
    %v5035 = vadd.f32 %v4979, %v3498
    %v5036 = vadd.f32 %v4980, %v3498
    %v5037 = vadd.f32 %v4981, %v3498
    %v5038 = vadd.f32 %v4982, %v3498
    %v5039 = vadd.f32 %v4983, %v3498
    %v5040 = vadd.f32 %v4984, %v3498
    %v5041 = vmax.f32 %v4985, 0.0
    %v5042 = vmax.f32 %v4986, 0.0
    %v5043 = vmax.f32 %v4987, 0.0
    %v5044 = vmax.f32 %v4988, 0.0
    %v5045 = vmax.f32 %v4989, 0.0
    %v5046 = vmax.f32 %v4990, 0.0
    %v5047 = vmax.f32 %v4991, 0.0
    %v5048 = vmax.f32 %v4992, 0.0
    %v5049 = vmax.f32 %v4993, 0.0
    %v5050 = vmax.f32 %v4994, 0.0
    %v5051 = vmax.f32 %v4995, 0.0
    %v5052 = vmax.f32 %v4996, 0.0
    %v5053 = vmax.f32 %v4997, 0.0
    %v5054 = vmax.f32 %v4998, 0.0
    %v5055 = vmax.f32 %v4999, 0.0
    %v5056 = vmax.f32 %v5000, 0.0
    %v5057 = vmax.f32 %v5001, 0.0
    %v5058 = vmax.f32 %v5002, 0.0
    %v5059 = vmax.f32 %v5003, 0.0
    %v5060 = vmax.f32 %v5004, 0.0
    %v5061 = vmax.f32 %v5005, 0.0
    %v5062 = vmax.f32 %v5006, 0.0
    %v5063 = vmax.f32 %v5007, 0.0
    %v5064 = vmax.f32 %v5008, 0.0
    %v5065 = vmax.f32 %v5009, 0.0
    %v5066 = vmax.f32 %v5010, 0.0
    %v5067 = vmax.f32 %v5011, 0.0
    %v5068 = vmax.f32 %v5012, 0.0
    %v5069 = vmax.f32 %v5013, 0.0
    %v5070 = vmax.f32 %v5014, 0.0
    %v5071 = vmax.f32 %v5015, 0.0
    %v5072 = vmax.f32 %v5016, 0.0
    %v5073 = vmax.f32 %v5017, 0.0
    %v5074 = vmax.f32 %v5018, 0.0
    %v5075 = vmax.f32 %v5019, 0.0
    %v5076 = vmax.f32 %v5020, 0.0
    %v5077 = vmax.f32 %v5021, 0.0
    %v5078 = vmax.f32 %v5022, 0.0
    %v5079 = vmax.f32 %v5023, 0.0
    %v5080 = vmax.f32 %v5024, 0.0
    %v5081 = vmax.f32 %v5025, 0.0
    %v5082 = vmax.f32 %v5026, 0.0
    %v5083 = vmax.f32 %v5027, 0.0
    %v5084 = vmax.f32 %v5028, 0.0
    %v5085 = vmax.f32 %v5029, 0.0
    %v5086 = vmax.f32 %v5030, 0.0
    %v5087 = vmax.f32 %v5031, 0.0
    %v5088 = vmax.f32 %v5032, 0.0
    %v5089 = vmax.f32 %v5033, 0.0
    %v5090 = vmax.f32 %v5034, 0.0
    %v5091 = vmax.f32 %v5035, 0.0
    %v5092 = vmax.f32 %v5036, 0.0
    %v5093 = vmax.f32 %v5037, 0.0
    %v5094 = vmax.f32 %v5038, 0.0
    %v5095 = vmax.f32 %v5039, 0.0
    %v5096 = vmax.f32 %v5040, 0.0
    %5097 = vmatprep.subr.mxu0 %v5042
    %5098 = vmatpush1.msra.mxu0 %v5041
    %5099 = vmatprep.subr.mxu0 %v5049
    %5100 = vmatpush1.msra.mxu0 %v5048
    %5101 = vmatprep.subr.mxu0 %v5056
    %5102 = vmatpush1.msra.mxu0 %v5055
    %5103 = vmatprep.subr.mxu0 %v5063
    %5104 = vmatpush1.msra.mxu0 %v5062
    %5105 = vmatprep.subr.mxu0 %v5070
    %5106 = vmatpush1.msra.mxu0 %v5069
    %5107 = vmatprep.subr.mxu0 %v5077
    %5108 = vmatpush1.msra.mxu0 %v5076
    %5109 = vmatprep.subr.mxu0 %v5084
    %5110 = vmatpush1.msra.mxu0 %v5083
    %5111 = vmatprep.subr.mxu0 %v5091
    %5112 = vmatpush1.msra.mxu0 %v5090
    %5113 = vmatprep.subr.mxu0 0.0
    %5114 = vmatpush1.msra.mxu0 0.0
    %5115 = vmatprep.subr.mxu0 0.0
    %5116 = vmatpush1.msra.mxu0 0.0
    %5117 = vmatprep.subr.mxu0 0.0
    %5118 = vmatpush1.msra.mxu0 0.0
    %5119 = vmatprep.subr.mxu0 0.0
    %5120 = vmatpush1.msra.mxu0 0.0
    %5121 = vmatprep.subr.mxu0 0.0
    %5122 = vmatpush1.msra.mxu0 0.0
    %5123 = vmatprep.subr.mxu0 0.0
    %5124 = vmatpush1.msra.mxu0 0.0
    %5125 = vmatprep.subr.mxu0 0.0
    %5126 = vmatpush1.msra.mxu0 0.0
    %5127 = vmatprep.subr.mxu0 0.0
    %5128 = vmatpush1.msra.mxu0 0.0
    %5129 = vmatprep.subr.mxu0 0.0
    %5130 = vmatpush1.msra.mxu0 0.0
    %5131 = vmatprep.subr.mxu0 0.0
    %5132 = vmatpush1.msra.mxu0 0.0
    %5133 = vmatprep.subr.mxu0 0.0
    %5134 = vmatpush1.msra.mxu0 0.0
    %5135 = vmatprep.subr.mxu0 0.0
    %5136 = vmatpush1.msra.mxu0 0.0
    %5137 = vmatprep.subr.mxu0 0.0
    %5138 = vmatpush1.msra.mxu0 0.0
    %5139 = vmatprep.subr.mxu0 0.0
    %5140 = vmatpush1.msra.mxu0 0.0
    %5141 = vmatprep.subr.mxu0 0.0
    %5142 = vmatpush1.msra.mxu0 0.0
    %5143 = vmatprep.subr.mxu0 0.0
    %5144 = vmatpush1.msra.mxu0 0.0
    %5145 = vmatprep.subr.mxu0 0.0
    %5146 = vmatpush1.msra.mxu0 0.0
    %5147 = vmatprep.subr.mxu0 0.0
    %5148 = vmatpush1.msra.mxu0 0.0
    %5149 = vmatprep.subr.mxu0 0.0
    %5150 = vmatpush1.msra.mxu0 0.0
    %5151 = vmatprep.subr.mxu0 0.0
    %5152 = vmatpush1.msra.mxu0 0.0
    %5153 = vmatprep.subr.mxu0 0.0
    %5154 = vmatpush1.msra.mxu0 0.0
    %5155 = vmatprep.subr.mxu0 0.0
    %5156 = vmatpush1.msra.mxu0 0.0
    %5157 = vmatprep.subr.mxu0 0.0
    %5158 = vmatpush1.msra.mxu0 0.0
    %5159 = vmatprep.subr.mxu0 0.0
    %5160 = vmatpush1.msra.mxu0 0.0
    %5161 = vmatprep.mubr.f32.mxu0 0.0
    %5162 = vmatmul.mubr.f32.gmra.mrb[0].mxu0 %v3613
    %v5163 = vpop.f32.mrb[0].mxu0
    %v5164 = vadd.f32 0.0, %v5163
    %v5165 = vpop.f32.mrb[0].mxu0
    %v5166 = vadd.f32 0.0, %v5165
    %5167 = vmatprep.mubr.f32.mxu0 0.0
    %5168 = vmatmul.mubr.f32.gmra.mrb[0].mxu0 %v3616
    %v5169 = vpop.f32.mrb[0].mxu0
    %v5170 = vadd.f32 0.0, %v5169
    %v5171 = vpop.f32.mrb[0].mxu0
    %v5172 = vadd.f32 0.0, %v5171
    %5173 = vdwg.mxu0
    %5174 = vmatprep.subr.mxu0 %v5044
    %5175 = vmatpush1.msra.mxu0 %v5043
    %5176 = vmatprep.subr.mxu0 %v5051
    %5177 = vmatpush1.msra.mxu0 %v5050
    %5178 = vmatprep.subr.mxu0 %v5058
    %5179 = vmatpush1.msra.mxu0 %v5057
    %5180 = vmatprep.subr.mxu0 %v5065
    %5181 = vmatpush1.msra.mxu0 %v5064
    %5182 = vmatprep.subr.mxu0 %v5072
    %5183 = vmatpush1.msra.mxu0 %v5071
    %5184 = vmatprep.subr.mxu0 %v5079
    %5185 = vmatpush1.msra.mxu0 %v5078
    %5186 = vmatprep.subr.mxu0 %v5086
    %5187 = vmatpush1.msra.mxu0 %v5085
    %5188 = vmatprep.subr.mxu0 %v5093
    %5189 = vmatpush1.msra.mxu0 %v5092
    %5190 = vmatprep.subr.mxu0 0.0
    %5191 = vmatpush1.msra.mxu0 0.0
    %5192 = vmatprep.subr.mxu0 0.0
    %5193 = vmatpush1.msra.mxu0 0.0
    %5194 = vmatprep.subr.mxu0 0.0
    %5195 = vmatpush1.msra.mxu0 0.0
    %5196 = vmatprep.subr.mxu0 0.0
    %5197 = vmatpush1.msra.mxu0 0.0
    %5198 = vmatprep.subr.mxu0 0.0
    %5199 = vmatpush1.msra.mxu0 0.0
    %5200 = vmatprep.subr.mxu0 0.0
    %5201 = vmatpush1.msra.mxu0 0.0
    %5202 = vmatprep.subr.mxu0 0.0
    %5203 = vmatpush1.msra.mxu0 0.0
    %5204 = vmatprep.subr.mxu0 0.0
    %5205 = vmatpush1.msra.mxu0 0.0
    %5206 = vmatprep.subr.mxu0 0.0
    %5207 = vmatpush1.msra.mxu0 0.0
    %5208 = vmatprep.subr.mxu0 0.0
    %5209 = vmatpush1.msra.mxu0 0.0
    %5210 = vmatprep.subr.mxu0 0.0
    %5211 = vmatpush1.msra.mxu0 0.0
    %5212 = vmatprep.subr.mxu0 0.0
    %5213 = vmatpush1.msra.mxu0 0.0
    %5214 = vmatprep.subr.mxu0 0.0
    %5215 = vmatpush1.msra.mxu0 0.0
    %5216 = vmatprep.subr.mxu0 0.0
    %5217 = vmatpush1.msra.mxu0 0.0
    %5218 = vmatprep.subr.mxu0 0.0
    %5219 = vmatpush1.msra.mxu0 0.0
    %5220 = vmatprep.subr.mxu0 0.0
    %5221 = vmatpush1.msra.mxu0 0.0
    %5222 = vmatprep.subr.mxu0 0.0
    %5223 = vmatpush1.msra.mxu0 0.0
    %5224 = vmatprep.subr.mxu0 0.0
    %5225 = vmatpush1.msra.mxu0 0.0
    %5226 = vmatprep.subr.mxu0 0.0
    %5227 = vmatpush1.msra.mxu0 0.0
    %5228 = vmatprep.subr.mxu0 0.0
    %5229 = vmatpush1.msra.mxu0 0.0
    %5230 = vmatprep.subr.mxu0 0.0
    %5231 = vmatpush1.msra.mxu0 0.0
    %5232 = vmatprep.subr.mxu0 0.0
    %5233 = vmatpush1.msra.mxu0 0.0
    %5234 = vmatprep.subr.mxu0 0.0
    %5235 = vmatpush1.msra.mxu0 0.0
    %5236 = vmatprep.subr.mxu0 0.0
    %5237 = vmatpush1.msra.mxu0 0.0
    %5238 = vmatprep.mubr.f32.mxu0 0.0
    %5239 = vmatmul.mubr.f32.gmra.mrb[0].mxu0 %v3613
    %v5240 = vpop.f32.mrb[0].mxu0
    %v5241 = vadd.f32 0.0, %v5240
    %v5242 = vpop.f32.mrb[0].mxu0
    %v5243 = vadd.f32 0.0, %v5242
    %5244 = vmatprep.mubr.f32.mxu0 0.0
    %5245 = vmatmul.mubr.f32.gmra.mrb[0].mxu0 %v3616
    %v5246 = vpop.f32.mrb[0].mxu0
    %v5247 = vadd.f32 0.0, %v5246
    %v5248 = vpop.f32.mrb[0].mxu0
    %v5249 = vadd.f32 0.0, %v5248
    %5250 = vdwg.mxu0
    %5251 = vmatprep.subr.mxu0 %v5046
    %5252 = vmatpush1.msra.mxu0 %v5045
    %5253 = vmatprep.subr.mxu0 %v5053
    %5254 = vmatpush1.msra.mxu0 %v5052
    %5255 = vmatprep.subr.mxu0 %v5060
    %5256 = vmatpush1.msra.mxu0 %v5059
    %5257 = vmatprep.subr.mxu0 %v5067
    %5258 = vmatpush1.msra.mxu0 %v5066
    %5259 = vmatprep.subr.mxu0 %v5074
    %5260 = vmatpush1.msra.mxu0 %v5073
    %5261 = vmatprep.subr.mxu0 %v5081
    %5262 = vmatpush1.msra.mxu0 %v5080
    %5263 = vmatprep.subr.mxu0 %v5088
    %5264 = vmatpush1.msra.mxu0 %v5087
    %5265 = vmatprep.subr.mxu0 %v5095
    %5266 = vmatpush1.msra.mxu0 %v5094
    %5267 = vmatprep.subr.mxu0 0.0
    %5268 = vmatpush1.msra.mxu0 0.0
    %5269 = vmatprep.subr.mxu0 0.0
    %5270 = vmatpush1.msra.mxu0 0.0
    %5271 = vmatprep.subr.mxu0 0.0
    %5272 = vmatpush1.msra.mxu0 0.0
    %5273 = vmatprep.subr.mxu0 0.0
    %5274 = vmatpush1.msra.mxu0 0.0
    %5275 = vmatprep.subr.mxu0 0.0
    %5276 = vmatpush1.msra.mxu0 0.0
    %5277 = vmatprep.subr.mxu0 0.0
    %5278 = vmatpush1.msra.mxu0 0.0
    %5279 = vmatprep.subr.mxu0 0.0
    %5280 = vmatpush1.msra.mxu0 0.0
    %5281 = vmatprep.subr.mxu0 0.0
    %5282 = vmatpush1.msra.mxu0 0.0
    %5283 = vmatprep.subr.mxu0 0.0
    %5284 = vmatpush1.msra.mxu0 0.0
    %5285 = vmatprep.subr.mxu0 0.0
    %5286 = vmatpush1.msra.mxu0 0.0
    %5287 = vmatprep.subr.mxu0 0.0
    %5288 = vmatpush1.msra.mxu0 0.0
    %5289 = vmatprep.subr.mxu0 0.0
    %5290 = vmatpush1.msra.mxu0 0.0
    %5291 = vmatprep.subr.mxu0 0.0
    %5292 = vmatpush1.msra.mxu0 0.0
    %5293 = vmatprep.subr.mxu0 0.0
    %5294 = vmatpush1.msra.mxu0 0.0
    %5295 = vmatprep.subr.mxu0 0.0
    %5296 = vmatpush1.msra.mxu0 0.0
    %5297 = vmatprep.subr.mxu0 0.0
    %5298 = vmatpush1.msra.mxu0 0.0
    %5299 = vmatprep.subr.mxu0 0.0
    %5300 = vmatpush1.msra.mxu0 0.0
    %5301 = vmatprep.subr.mxu0 0.0
    %5302 = vmatpush1.msra.mxu0 0.0
    %5303 = vmatprep.subr.mxu0 0.0
    %5304 = vmatpush1.msra.mxu0 0.0
    %5305 = vmatprep.subr.mxu0 0.0
    %5306 = vmatpush1.msra.mxu0 0.0
    %5307 = vmatprep.subr.mxu0 0.0
    %5308 = vmatpush1.msra.mxu0 0.0
    %5309 = vmatprep.subr.mxu0 0.0
    %5310 = vmatpush1.msra.mxu0 0.0
    %5311 = vmatprep.subr.mxu0 0.0
    %5312 = vmatpush1.msra.mxu0 0.0
    %5313 = vmatprep.subr.mxu0 0.0
    %5314 = vmatpush1.msra.mxu0 0.0
    %5315 = vmatprep.mubr.f32.mxu0 0.0
    %5316 = vmatmul.mubr.f32.gmra.mrb[0].mxu0 %v3613
    %v5317 = vpop.f32.mrb[0].mxu0
    %v5318 = vadd.f32 0.0, %v5317
    %v5319 = vpop.f32.mrb[0].mxu0
    %v5320 = vadd.f32 0.0, %v5319
    %5321 = vmatprep.mubr.f32.mxu0 0.0
    %5322 = vmatmul.mubr.f32.gmra.mrb[0].mxu0 %v3616
    %v5323 = vpop.f32.mrb[0].mxu0
    %v5324 = vadd.f32 0.0, %v5323
    %v5325 = vpop.f32.mrb[0].mxu0
    %v5326 = vadd.f32 0.0, %v5325
    %5327 = vdwg.mxu0
    %5328 = vmatprep.subr.mxu0 0.0
    %5329 = vmatpush1.msra.mxu0 %v5047
    %5330 = vmatprep.subr.mxu0 0.0
    %5331 = vmatpush1.msra.mxu0 %v5054
    %5332 = vmatprep.subr.mxu0 0.0
    %5333 = vmatpush1.msra.mxu0 %v5061
    %5334 = vmatprep.subr.mxu0 0.0
    %5335 = vmatpush1.msra.mxu0 %v5068
    %5336 = vmatprep.subr.mxu0 0.0
    %5337 = vmatpush1.msra.mxu0 %v5075
    %5338 = vmatprep.subr.mxu0 0.0
    %5339 = vmatpush1.msra.mxu0 %v5082
    %5340 = vmatprep.subr.mxu0 0.0
    %5341 = vmatpush1.msra.mxu0 %v5089
    %5342 = vmatprep.subr.mxu0 0.0
    %5343 = vmatpush1.msra.mxu0 %v5096
    %5344 = vmatprep.subr.mxu0 0.0
    %5345 = vmatpush1.msra.mxu0 0.0
    %5346 = vmatprep.subr.mxu0 0.0
    %5347 = vmatpush1.msra.mxu0 0.0
    %5348 = vmatprep.subr.mxu0 0.0
    %5349 = vmatpush1.msra.mxu0 0.0
    %5350 = vmatprep.subr.mxu0 0.0
    %5351 = vmatpush1.msra.mxu0 0.0
    %5352 = vmatprep.subr.mxu0 0.0
    %5353 = vmatpush1.msra.mxu0 0.0
    %5354 = vmatprep.subr.mxu0 0.0
    %5355 = vmatpush1.msra.mxu0 0.0
    %5356 = vmatprep.subr.mxu0 0.0
    %5357 = vmatpush1.msra.mxu0 0.0
    %5358 = vmatprep.subr.mxu0 0.0
    %5359 = vmatpush1.msra.mxu0 0.0
    %5360 = vmatprep.subr.mxu0 0.0
    %5361 = vmatpush1.msra.mxu0 0.0
    %5362 = vmatprep.subr.mxu0 0.0
    %5363 = vmatpush1.msra.mxu0 0.0
    %5364 = vmatprep.subr.mxu0 0.0
    %5365 = vmatpush1.msra.mxu0 0.0
    %5366 = vmatprep.subr.mxu0 0.0
    %5367 = vmatpush1.msra.mxu0 0.0
    %5368 = vmatprep.subr.mxu0 0.0
    %5369 = vmatpush1.msra.mxu0 0.0
    %5370 = vmatprep.subr.mxu0 0.0
    %5371 = vmatpush1.msra.mxu0 0.0
    %5372 = vmatprep.subr.mxu0 0.0
    %5373 = vmatpush1.msra.mxu0 0.0
    %5374 = vmatprep.subr.mxu0 0.0
    %5375 = vmatpush1.msra.mxu0 0.0
    %5376 = vmatprep.subr.mxu0 0.0
    %5377 = vmatpush1.msra.mxu0 0.0
    %5378 = vmatprep.subr.mxu0 0.0
    %5379 = vmatpush1.msra.mxu0 0.0
    %5380 = vmatprep.subr.mxu0 0.0
    %5381 = vmatpush1.msra.mxu0 0.0
    %5382 = vmatprep.subr.mxu0 0.0
    %5383 = vmatpush1.msra.mxu0 0.0
    %5384 = vmatprep.subr.mxu0 0.0
    %5385 = vmatpush1.msra.mxu0 0.0
    %5386 = vmatprep.subr.mxu0 0.0
    %5387 = vmatpush1.msra.mxu0 0.0
    %5388 = vmatprep.subr.mxu0 0.0
    %5389 = vmatpush1.msra.mxu0 0.0
    %5390 = vmatprep.subr.mxu0 0.0
    %5391 = vmatpush1.msra.mxu0 0.0
    %5392 = vmatprep.mubr.f32.mxu0 0.0
    %5393 = vmatmul.mubr.f32.gmra.mrb[0].mxu0 %v3613
    %v5394 = vpop.f32.mrb[0].mxu0
    %v5395 = vadd.f32 0.0, %v5394
    %v5396 = vpop.f32.mrb[0].mxu0
    %5397 = vmatprep.mubr.f32.mxu0 0.0
    %5398 = vmatmul.mubr.f32.gmra.mrb[0].mxu0 %v3616
    %v5399 = vpop.f32.mrb[0].mxu0
    %v5400 = vadd.f32 0.0, %v5399
    %v5401 = vpop.f32.mrb[0].mxu0
    %5402 = vdwg.mxu0
    %5403 = vrot.lane.b32.xlu0 %v5164, 72
    %v5404 = vpop.permute.xlu0 %5403
    %v5405 = vsel %vm419, %v5404, %v5395
    %5406 = vrot.lane.b32.xlu0 %v5166, 72
    %v5407 = vpop.permute.xlu0 %5406
    %5408 = vrot.lane.b32.xlu0 %v5241, 72
    %v5409 = vpop.permute.xlu0 %5408
    %5410 = vrot.lane.b32.xlu0 %v5243, 72
    %v5411 = vpop.permute.xlu0 %5410
    %5412 = vrot.lane.b32.xlu0 %v5318, 72
    %v5413 = vpop.permute.xlu0 %5412
    %5414 = vrot.lane.b32.xlu0 %v5320, 72
    %v5415 = vpop.permute.xlu0 %5414
    %5416 = vrot.lane.b32.xlu0 %v5405, 72
    %v5417 = vpop.permute.xlu0 %5416
    %v5418 = vsel %vm419, %v5407, %v5404
    %v5419 = vsel %vm419, %v5409, %v5407
    %v5420 = vsel %vm419, %v5411, %v5409
    %v5421 = vsel %vm419, %v5413, %v5411
    %v5422 = vsel %vm419, %v5415, %v5413
    %v5423 = vsel %vm419, %v5417, %v5415
    %v5424 = vmul.f32 %v5405, %v3953
    %v5425 = vmul.f32 %v5418, %v3966
    %v5426 = vmul.f32 %v5419, %v3967
    %v5427 = vmul.f32 %v5420, %v3968
    %v5428 = vmul.f32 %v5421, %v3969
    %v5429 = vmul.f32 %v5422, %v3970
    %v5430 = vmul.f32 %v5423, %v3971
    %v5431 = vmul.f32 %v5417, %v3965
    %v5440 = vrot.slane %v5424, 4
    %v5441 = vrot.slane %v5425, 4
    %v5442 = vrot.slane %v5426, 4
    %v5443 = vrot.slane %v5427, 4
    %v5444 = vrot.slane %v5428, 4
    %v5445 = vrot.slane %v5429, 4
    %v5446 = vrot.slane %v5430, 4
    %v5447 = vrot.slane %v5431, 4
    %5448 = vrot.lane.b32.xlu0 %v5440, 65
    %v5449 = vpop.permute.xlu0 %5448
    %5450 = vrot.lane.b32.xlu0 %v5441, 65
    %v5451 = vpop.permute.xlu0 %5450
    %5452 = vrot.lane.b32.xlu0 %v5442, 65
    %v5453 = vpop.permute.xlu0 %5452
    %5454 = vrot.lane.b32.xlu0 %v5443, 65
    %v5455 = vpop.permute.xlu0 %5454
    %5456 = vrot.lane.b32.xlu0 %v5444, 65
    %v5457 = vpop.permute.xlu0 %5456
    %5458 = vrot.lane.b32.xlu0 %v5445, 65
    %v5459 = vpop.permute.xlu0 %5458
    %5460 = vrot.lane.b32.xlu0 %v5446, 65
    %v5461 = vpop.permute.xlu0 %5460
    %5462 = vrot.lane.b32.xlu0 %v5447, 65
    %v5463 = vpop.permute.xlu0 %5462
    %v5464 = vsel %vm634, %v5449, %v5451
    %v5465 = vsel %vm634, %v5451, %v5453
    %v5466 = vsel %vm634, %v5453, %v5455
    %v5467 = vsel %vm634, %v5455, %v5457
    %v5468 = vsel %vm634, %v5457, %v5459
    %v5469 = vsel %vm634, %v5459, %v5461
    %v5470 = vsel %vm634, %v5461, %v5463
    %v5478 = vadd.f32 %v5164, %v5464
    %v5479 = vadd.f32 %v5166, %v5465
    %v5480 = vadd.f32 %v5241, %v5466
    %v5481 = vadd.f32 %v5243, %v5467
    %v5482 = vadd.f32 %v5318, %v5468
    %v5483 = vadd.f32 %v5320, %v5469
    %v5484 = vadd.f32 %v5395, %v5470
    %v5492 = vrot.slane %v5164, 1
    %v5493 = vrot.slane %v5166, 1
    %v5494 = vrot.slane %v5241, 1
    %v5495 = vrot.slane %v5243, 1
    %v5496 = vrot.slane %v5318, 1
    %v5497 = vrot.slane %v5320, 1
    %v5498 = vrot.slane %v5395, 1
    %5506 = vrot.lane.b32.xlu0 %v5492, 72
    %v5507 = vpop.permute.xlu0 %5506
    %v5508 = vsel %vm419, %v5507, %v5498
    %5509 = vrot.lane.b32.xlu0 %v5493, 72
    %v5510 = vpop.permute.xlu0 %5509
    %5511 = vrot.lane.b32.xlu0 %v5494, 72
    %v5512 = vpop.permute.xlu0 %5511
    %5513 = vrot.lane.b32.xlu0 %v5495, 72
    %v5514 = vpop.permute.xlu0 %5513
    %5515 = vrot.lane.b32.xlu0 %v5496, 72
    %v5516 = vpop.permute.xlu0 %5515
    %5517 = vrot.lane.b32.xlu0 %v5497, 72
    %v5518 = vpop.permute.xlu0 %5517
    %5519 = vrot.lane.b32.xlu0 %v5508, 72
    %v5520 = vpop.permute.xlu0 %5519
    %v5521 = vsel %vm419, %v5510, %v5507
    %v5522 = vsel %vm419, %v5512, %v5510
    %v5523 = vsel %vm419, %v5514, %v5512
    %v5524 = vsel %vm419, %v5516, %v5514
    %v5525 = vsel %vm419, %v5518, %v5516
    %v5526 = vsel %vm419, %v5520, %v5518
    %v5527 = vmul.f32 %v5508, %v4091
    %v5528 = vmul.f32 %v5521, %v4104
    %v5529 = vmul.f32 %v5522, %v4105
    %v5530 = vmul.f32 %v5523, %v4106
    %v5531 = vmul.f32 %v5524, %v4107
    %v5532 = vmul.f32 %v5525, %v4108
    %v5533 = vmul.f32 %v5526, %v4109
    %v5534 = vmul.f32 %v5520, %v4103
    %v5543 = vrot.slane %v5527, 4
    %v5544 = vrot.slane %v5528, 4
    %v5545 = vrot.slane %v5529, 4
    %v5546 = vrot.slane %v5530, 4
    %v5547 = vrot.slane %v5531, 4
    %v5548 = vrot.slane %v5532, 4
    %v5549 = vrot.slane %v5533, 4
    %v5550 = vrot.slane %v5534, 4
    %5551 = vrot.lane.b32.xlu0 %v5543, 64
    %v5552 = vpop.permute.xlu0 %5551
    %5553 = vrot.lane.b32.xlu0 %v5544, 64
    %v5554 = vpop.permute.xlu0 %5553
    %5555 = vrot.lane.b32.xlu0 %v5545, 64
    %v5556 = vpop.permute.xlu0 %5555
    %5557 = vrot.lane.b32.xlu0 %v5546, 64
    %v5558 = vpop.permute.xlu0 %5557
    %5559 = vrot.lane.b32.xlu0 %v5547, 64
    %v5560 = vpop.permute.xlu0 %5559
    %5561 = vrot.lane.b32.xlu0 %v5548, 64
    %v5562 = vpop.permute.xlu0 %5561
    %5563 = vrot.lane.b32.xlu0 %v5549, 64
    %v5564 = vpop.permute.xlu0 %5563
    %5565 = vrot.lane.b32.xlu0 %v5550, 64
    %v5566 = vpop.permute.xlu0 %5565
    %v5567 = vsel %vm562, %v5552, %v5554
    %v5568 = vsel %vm562, %v5554, %v5556
    %v5569 = vsel %vm562, %v5556, %v5558
    %v5570 = vsel %vm562, %v5558, %v5560
    %v5571 = vsel %vm562, %v5560, %v5562
    %v5572 = vsel %vm562, %v5562, %v5564
    %v5573 = vsel %vm562, %v5564, %v5566
    %v5581 = vadd.f32 %v5478, %v5567
    %v5582 = vadd.f32 %v5479, %v5568
    %v5583 = vadd.f32 %v5480, %v5569
    %v5584 = vadd.f32 %v5481, %v5570
    %v5585 = vadd.f32 %v5482, %v5571
    %v5586 = vadd.f32 %v5483, %v5572
    %v5587 = vadd.f32 %v5484, %v5573
    %v5588 = vrot.slane %v5164, 2
    %v5589 = vrot.slane %v5166, 2
    %v5590 = vrot.slane %v5241, 2
    %v5591 = vrot.slane %v5243, 2
    %v5592 = vrot.slane %v5318, 2
    %v5593 = vrot.slane %v5320, 2
    %v5594 = vrot.slane %v5395, 2
    %5602 = vrot.lane.b32.xlu0 %v5588, 72
    %v5603 = vpop.permute.xlu0 %5602
    %v5604 = vsel %vm419, %v5603, %v5594
    %5605 = vrot.lane.b32.xlu0 %v5589, 72
    %v5606 = vpop.permute.xlu0 %5605
    %5607 = vrot.lane.b32.xlu0 %v5590, 72
    %v5608 = vpop.permute.xlu0 %5607
    %5609 = vrot.lane.b32.xlu0 %v5591, 72
    %v5610 = vpop.permute.xlu0 %5609
    %5611 = vrot.lane.b32.xlu0 %v5592, 72
    %v5612 = vpop.permute.xlu0 %5611
    %5613 = vrot.lane.b32.xlu0 %v5593, 72
    %v5614 = vpop.permute.xlu0 %5613
    %5615 = vrot.lane.b32.xlu0 %v5604, 72
    %v5616 = vpop.permute.xlu0 %5615
    %v5617 = vsel %vm419, %v5606, %v5603
    %v5618 = vsel %vm419, %v5608, %v5606
    %v5619 = vsel %vm419, %v5610, %v5608
    %v5620 = vsel %vm419, %v5612, %v5610
    %v5621 = vsel %vm419, %v5614, %v5612
    %v5622 = vsel %vm419, %v5616, %v5614
    %v5623 = vmul.f32 %v5604, %v4222
    %v5624 = vmul.f32 %v5617, %v4235
    %v5625 = vmul.f32 %v5618, %v4236
    %v5626 = vmul.f32 %v5619, %v4237
    %v5627 = vmul.f32 %v5620, %v4238
    %v5628 = vmul.f32 %v5621, %v4239
    %v5629 = vmul.f32 %v5622, %v4240
    %v5630 = vmul.f32 %v5616, %v4234
    %v5639 = vrot.slane %v5623, 4
    %v5640 = vrot.slane %v5624, 4
    %v5641 = vrot.slane %v5625, 4
    %v5642 = vrot.slane %v5626, 4
    %v5643 = vrot.slane %v5627, 4
    %v5644 = vrot.slane %v5628, 4
    %v5645 = vrot.slane %v5629, 4
    %v5646 = vrot.slane %v5630, 4
    %5647 = vrot.lane.b32.xlu0 %v5639, 63
    %v5648 = vpop.permute.xlu0 %5647
    %5649 = vrot.lane.b32.xlu0 %v5640, 63
    %v5650 = vpop.permute.xlu0 %5649
    %5651 = vrot.lane.b32.xlu0 %v5641, 63
    %v5652 = vpop.permute.xlu0 %5651
    %5653 = vrot.lane.b32.xlu0 %v5642, 63
    %v5654 = vpop.permute.xlu0 %5653
    %5655 = vrot.lane.b32.xlu0 %v5643, 63
    %v5656 = vpop.permute.xlu0 %5655
    %5657 = vrot.lane.b32.xlu0 %v5644, 63
    %v5658 = vpop.permute.xlu0 %5657
    %5659 = vrot.lane.b32.xlu0 %v5645, 63
    %v5660 = vpop.permute.xlu0 %5659
    %5661 = vrot.lane.b32.xlu0 %v5646, 63
    %v5662 = vpop.permute.xlu0 %5661
    %v5663 = vsel %vm490, %v5648, %v5650
    %v5664 = vsel %vm490, %v5650, %v5652
    %v5665 = vsel %vm490, %v5652, %v5654
    %v5666 = vsel %vm490, %v5654, %v5656
    %v5667 = vsel %vm490, %v5656, %v5658
    %v5668 = vsel %vm490, %v5658, %v5660
    %v5669 = vsel %vm490, %v5660, %v5662
    %v5677 = vadd.f32 %v5581, %v5663
    %v5678 = vadd.f32 %v5582, %v5664
    %v5679 = vadd.f32 %v5583, %v5665
    %v5680 = vadd.f32 %v5584, %v5666
    %v5681 = vadd.f32 %v5585, %v5667
    %v5682 = vadd.f32 %v5586, %v5668
    %v5683 = vadd.f32 %v5587, %v5669
    %v5684 = vrot.slane %v5164, 3
    %v5685 = vrot.slane %v5166, 3
    %v5686 = vrot.slane %v5241, 3
    %v5687 = vrot.slane %v5243, 3
    %v5688 = vrot.slane %v5318, 3
    %v5689 = vrot.slane %v5320, 3
    %v5690 = vrot.slane %v5395, 3
    %5698 = vrot.lane.b32.xlu0 %v5684, 72
    %v5699 = vpop.permute.xlu0 %5698
    %v5700 = vsel %vm419, %v5699, %v5690
    %5701 = vrot.lane.b32.xlu0 %v5685, 72
    %v5702 = vpop.permute.xlu0 %5701
    %5703 = vrot.lane.b32.xlu0 %v5686, 72
    %v5704 = vpop.permute.xlu0 %5703
    %5705 = vrot.lane.b32.xlu0 %v5687, 72
    %v5706 = vpop.permute.xlu0 %5705
    %5707 = vrot.lane.b32.xlu0 %v5688, 72
    %v5708 = vpop.permute.xlu0 %5707
    %5709 = vrot.lane.b32.xlu0 %v5689, 72
    %v5710 = vpop.permute.xlu0 %5709
    %5711 = vrot.lane.b32.xlu0 %v5700, 72
    %v5712 = vpop.permute.xlu0 %5711
    %v5713 = vsel %vm419, %v5702, %v5699
    %v5714 = vsel %vm419, %v5704, %v5702
    %v5715 = vsel %vm419, %v5706, %v5704
    %v5716 = vsel %vm419, %v5708, %v5706
    %v5717 = vsel %vm419, %v5710, %v5708
    %v5718 = vsel %vm419, %v5712, %v5710
    %v5719 = vmul.f32 %v5700, %v4353
    %v5720 = vmul.f32 %v5713, %v4366
    %v5721 = vmul.f32 %v5714, %v4367
    %v5722 = vmul.f32 %v5715, %v4368
    %v5723 = vmul.f32 %v5716, %v4369
    %v5724 = vmul.f32 %v5717, %v4370
    %v5725 = vmul.f32 %v5718, %v4371
    %v5726 = vmul.f32 %v5712, %v4365
    %v5735 = vrot.slane %v5719, 4
    %v5736 = vrot.slane %v5720, 4
    %v5737 = vrot.slane %v5721, 4
    %v5738 = vrot.slane %v5722, 4
    %v5739 = vrot.slane %v5723, 4
    %v5740 = vrot.slane %v5724, 4
    %v5741 = vrot.slane %v5725, 4
    %v5742 = vrot.slane %v5726, 4
    %5743 = vrot.lane.b32.xlu0 %v5735, 57
    %v5744 = vpop.permute.xlu0 %5743
    %5745 = vrot.lane.b32.xlu0 %v5736, 57
    %v5746 = vpop.permute.xlu0 %5745
    %5747 = vrot.lane.b32.xlu0 %v5737, 57
    %v5748 = vpop.permute.xlu0 %5747
    %5749 = vrot.lane.b32.xlu0 %v5738, 57
    %v5750 = vpop.permute.xlu0 %5749
    %5751 = vrot.lane.b32.xlu0 %v5739, 57
    %v5752 = vpop.permute.xlu0 %5751
    %5753 = vrot.lane.b32.xlu0 %v5740, 57
    %v5754 = vpop.permute.xlu0 %5753
    %5755 = vrot.lane.b32.xlu0 %v5741, 57
    %v5756 = vpop.permute.xlu0 %5755
    %5757 = vrot.lane.b32.xlu0 %v5742, 57
    %v5758 = vpop.permute.xlu0 %5757
    %v5759 = vsel %vm1203, %v5744, %v5746
    %v5760 = vsel %vm1203, %v5746, %v5748
    %v5761 = vsel %vm1203, %v5748, %v5750
    %v5762 = vsel %vm1203, %v5750, %v5752
    %v5763 = vsel %vm1203, %v5752, %v5754
    %v5764 = vsel %vm1203, %v5754, %v5756
    %v5765 = vsel %vm1203, %v5756, %v5758
    %v5773 = vadd.f32 %v5677, %v5759
    %v5774 = vadd.f32 %v5678, %v5760
    %v5775 = vadd.f32 %v5679, %v5761
    %v5776 = vadd.f32 %v5680, %v5762
    %v5777 = vadd.f32 %v5681, %v5763
    %v5778 = vadd.f32 %v5682, %v5764
    %v5779 = vadd.f32 %v5683, %v5765
    %v5780 = vrot.slane %v5164, 5
    %v5781 = vrot.slane %v5166, 5
    %v5782 = vrot.slane %v5241, 5
    %v5783 = vrot.slane %v5243, 5
    %v5784 = vrot.slane %v5318, 5
    %v5785 = vrot.slane %v5320, 5
    %v5786 = vrot.slane %v5395, 5
    %5794 = vrot.lane.b32.xlu0 %v5780, 72
    %v5795 = vpop.permute.xlu0 %5794
    %v5796 = vsel %vm419, %v5795, %v5786
    %v5797 = vmul.f32 %v5780, %v4466
    %v5798 = vmul.f32 %v5781, %v4479
    %v5799 = vmul.f32 %v5782, %v4480
    %v5800 = vmul.f32 %v5783, %v4481
    %v5801 = vmul.f32 %v5784, %v4482
    %v5802 = vmul.f32 %v5785, %v4483
    %v5803 = vmul.f32 %v5796, %v4484
    %v5811 = vrot.slane %v5797, 4
    %v5812 = vrot.slane %v5798, 4
    %v5813 = vrot.slane %v5799, 4
    %v5814 = vrot.slane %v5800, 4
    %v5815 = vrot.slane %v5801, 4
    %v5816 = vrot.slane %v5802, 4
    %v5817 = vrot.slane %v5803, 4
    %5818 = vrot.lane.b32.xlu0 %v5811, 127
    %v5819 = vpop.permute.xlu0 %5818
    %5820 = vrot.lane.b32.xlu0 %v5812, 127
    %v5821 = vpop.permute.xlu0 %5820
    %5822 = vrot.lane.b32.xlu0 %v5813, 127
    %v5823 = vpop.permute.xlu0 %5822
    %5824 = vrot.lane.b32.xlu0 %v5814, 127
    %v5825 = vpop.permute.xlu0 %5824
    %5826 = vrot.lane.b32.xlu0 %v5815, 127
    %v5827 = vpop.permute.xlu0 %5826
    %5828 = vrot.lane.b32.xlu0 %v5816, 127
    %v5829 = vpop.permute.xlu0 %5828
    %5830 = vrot.lane.b32.xlu0 %v5817, 127
    %v5831 = vpop.permute.xlu0 %5830
    %v5832 = vsel %vm1261, %v5819, %v5821
    %v5833 = vsel %vm1261, %v5821, %v5823
    %v5834 = vsel %vm1261, %v5823, %v5825
    %v5835 = vsel %vm1261, %v5825, %v5827
    %v5836 = vsel %vm1261, %v5827, %v5829
    %v5837 = vsel %vm1261, %v5829, %v5831
    %v5845 = vadd.f32 %v5773, %v5832
    %v5846 = vadd.f32 %v5774, %v5833
    %v5847 = vadd.f32 %v5775, %v5834
    %v5848 = vadd.f32 %v5776, %v5835
    %v5849 = vadd.f32 %v5777, %v5836
    %v5850 = vadd.f32 %v5778, %v5837
    %v5851 = vadd.f32 %v5779, %v5831
    %v5852 = vrot.slane %v5164, 6
    %v5853 = vrot.slane %v5166, 6
    %v5854 = vrot.slane %v5241, 6
    %v5855 = vrot.slane %v5243, 6
    %v5856 = vrot.slane %v5318, 6
    %v5857 = vrot.slane %v5320, 6
    %v5858 = vrot.slane %v5395, 6
    %5866 = vrot.lane.b32.xlu0 %v5852, 72
    %v5867 = vpop.permute.xlu0 %5866
    %v5868 = vsel %vm419, %v5867, %v5858
    %v5869 = vmul.f32 %v5852, %v4572
    %v5870 = vmul.f32 %v5853, %v4585
    %v5871 = vmul.f32 %v5854, %v4586
    %v5872 = vmul.f32 %v5855, %v4587
    %v5873 = vmul.f32 %v5856, %v4588
    %v5874 = vmul.f32 %v5857, %v4589
    %v5875 = vmul.f32 %v5868, %v4590
    %v5883 = vrot.slane %v5869, 4
    %v5884 = vrot.slane %v5870, 4
    %v5885 = vrot.slane %v5871, 4
    %v5886 = vrot.slane %v5872, 4
    %v5887 = vrot.slane %v5873, 4
    %v5888 = vrot.slane %v5874, 4
    %v5889 = vrot.slane %v5875, 4
    %5890 = vrot.lane.b32.xlu0 %v5883, 121
    %v5891 = vpop.permute.xlu0 %5890
    %5892 = vrot.lane.b32.xlu0 %v5884, 121
    %v5893 = vpop.permute.xlu0 %5892
    %5894 = vrot.lane.b32.xlu0 %v5885, 121
    %v5895 = vpop.permute.xlu0 %5894
    %5896 = vrot.lane.b32.xlu0 %v5886, 121
    %v5897 = vpop.permute.xlu0 %5896
    %5898 = vrot.lane.b32.xlu0 %v5887, 121
    %v5899 = vpop.permute.xlu0 %5898
    %5900 = vrot.lane.b32.xlu0 %v5888, 121
    %v5901 = vpop.permute.xlu0 %5900
    %5902 = vrot.lane.b32.xlu0 %v5889, 121
    %v5903 = vpop.permute.xlu0 %5902
    %v5904 = vsel %vm1310, %v5891, %v5893
    %v5905 = vsel %vm1310, %v5893, %v5895
    %v5906 = vsel %vm1310, %v5895, %v5897
    %v5907 = vsel %vm1310, %v5897, %v5899
    %v5908 = vsel %vm1310, %v5899, %v5901
    %v5909 = vsel %vm1310, %v5901, %v5903
    %v5917 = vadd.f32 %v5845, %v5904
    %v5918 = vadd.f32 %v5846, %v5905
    %v5919 = vadd.f32 %v5847, %v5906
    %v5920 = vadd.f32 %v5848, %v5907
    %v5921 = vadd.f32 %v5849, %v5908
    %v5922 = vadd.f32 %v5850, %v5909
    %v5923 = vadd.f32 %v5851, %v5903
    %v5924 = vrot.slane %v5164, 7
    %v5925 = vrot.slane %v5166, 7
    %v5926 = vrot.slane %v5241, 7
    %v5927 = vrot.slane %v5243, 7
    %v5928 = vrot.slane %v5318, 7
    %v5929 = vrot.slane %v5320, 7
    %v5930 = vrot.slane %v5395, 7
    %5938 = vrot.lane.b32.xlu0 %v5924, 72
    %v5939 = vpop.permute.xlu0 %5938
    %v5940 = vsel %vm419, %v5939, %v5930
    %v5941 = vmul.f32 %v5924, %v4678
    %v5942 = vmul.f32 %v5925, %v4691
    %v5943 = vmul.f32 %v5926, %v4692
    %v5944 = vmul.f32 %v5927, %v4693
    %v5945 = vmul.f32 %v5928, %v4694
    %v5946 = vmul.f32 %v5929, %v4695
    %v5947 = vmul.f32 %v5940, %v4696
    %v5955 = vrot.slane %v5941, 4
    %v5956 = vrot.slane %v5942, 4
    %v5957 = vrot.slane %v5943, 4
    %v5958 = vrot.slane %v5944, 4
    %v5959 = vrot.slane %v5945, 4
    %v5960 = vrot.slane %v5946, 4
    %v5961 = vrot.slane %v5947, 4
    %5962 = vrot.lane.b32.xlu0 %v5955, 120
    %v5963 = vpop.permute.xlu0 %5962
    %5964 = vrot.lane.b32.xlu0 %v5956, 120
    %v5965 = vpop.permute.xlu0 %5964
    %5966 = vrot.lane.b32.xlu0 %v5957, 120
    %v5967 = vpop.permute.xlu0 %5966
    %5968 = vrot.lane.b32.xlu0 %v5958, 120
    %v5969 = vpop.permute.xlu0 %5968
    %5970 = vrot.lane.b32.xlu0 %v5959, 120
    %v5971 = vpop.permute.xlu0 %5970
    %5972 = vrot.lane.b32.xlu0 %v5960, 120
    %v5973 = vpop.permute.xlu0 %5972
    %5974 = vrot.lane.b32.xlu0 %v5961, 120
    %v5975 = vpop.permute.xlu0 %5974
    %v5976 = vsel %vm1359, %v5963, %v5965
    %v5977 = vsel %vm1359, %v5965, %v5967
    %v5978 = vsel %vm1359, %v5967, %v5969
    %v5979 = vsel %vm1359, %v5969, %v5971
    %v5980 = vsel %vm1359, %v5971, %v5973
    %v5981 = vsel %vm1359, %v5973, %v5975
    %v5989 = vadd.f32 %v5917, %v5976
    %v5990 = vadd.f32 %v5918, %v5977
    %v5991 = vadd.f32 %v5919, %v5978
    %v5992 = vadd.f32 %v5920, %v5979
    %v5993 = vadd.f32 %v5921, %v5980
    %v5994 = vadd.f32 %v5922, %v5981
    %v5995 = vadd.f32 %v5923, %v5975
    %5996 = vrot.lane.b32.xlu0 %v5170, 72
    %v5997 = vpop.permute.xlu0 %5996
    %v5998 = vsel %vm419, %v5997, %v5400
    %v5999 = vmul.f32 %v5170, %v4770
    %v6000 = vmul.f32 %v5172, %v4783
    %v6001 = vmul.f32 %v5247, %v4784
    %v6002 = vmul.f32 %v5249, %v4785
    %v6003 = vmul.f32 %v5324, %v4786
    %v6004 = vmul.f32 %v5326, %v4787
    %v6005 = vmul.f32 %v5998, %v4788
    %v6013 = vrot.slane %v5999, 4
    %v6014 = vrot.slane %v6000, 4
    %v6015 = vrot.slane %v6001, 4
    %v6016 = vrot.slane %v6002, 4
    %v6017 = vrot.slane %v6003, 4
    %v6018 = vrot.slane %v6004, 4
    %v6019 = vrot.slane %v6005, 4
    %6020 = vrot.lane.b32.xlu0 %v6013, 119
    %v6021 = vpop.permute.xlu0 %6020
    %6022 = vrot.lane.b32.xlu0 %v6014, 119
    %v6023 = vpop.permute.xlu0 %6022
    %6024 = vrot.lane.b32.xlu0 %v6015, 119
    %v6025 = vpop.permute.xlu0 %6024
    %6026 = vrot.lane.b32.xlu0 %v6016, 119
    %v6027 = vpop.permute.xlu0 %6026
    %6028 = vrot.lane.b32.xlu0 %v6017, 119
    %v6029 = vpop.permute.xlu0 %6028
    %6030 = vrot.lane.b32.xlu0 %v6018, 119
    %v6031 = vpop.permute.xlu0 %6030
    %6032 = vrot.lane.b32.xlu0 %v6019, 119
    %v6033 = vpop.permute.xlu0 %6032
    %v6034 = vsel %vm1401, %v6021, %v6023
    %v6035 = vsel %vm1401, %v6023, %v6025
    %v6036 = vsel %vm1401, %v6025, %v6027
    %v6037 = vsel %vm1401, %v6027, %v6029
    %v6038 = vsel %vm1401, %v6029, %v6031
    %v6039 = vsel %vm1401, %v6031, %v6033
    %v6047 = vadd.f32 %v5989, %v6034
    %v6048 = vadd.f32 %v5990, %v6035
    %v6049 = vadd.f32 %v5991, %v6036
    %v6050 = vadd.f32 %v5992, %v6037
    %v6051 = vadd.f32 %v5993, %v6038
    %v6052 = vadd.f32 %v5994, %v6039
    %v6053 = vadd.f32 %v5995, %v6033
    %v6054 = vadd.f32 %v6047, %v4859
    %v6055 = vadd.f32 %v6048, %v4859
    %v6056 = vadd.f32 %v6049, %v4859
    %v6057 = vadd.f32 %v6050, %v4859
    %v6058 = vadd.f32 %v6051, %v4859
    %v6059 = vadd.f32 %v6052, %v4859
    %v6060 = vadd.f32 %v6053, %v4859
    %v6068 = vcombine.high %v6054, %v6055
    %v6069 = vcombine.high %v6056, %v6057
    %v6070 = vcombine.high %v6058, %v6059
    %v6071 = vcombine.high %v6060, %v6060
    %v6073 = vunpack.c.l.s4 1966171168
    %v6074 = vunpack.c.0.s8 %v6073
    %v6075 = vlaneseq
    %v6076 = vshrl.u32 %v6075, 7
    %v6077 = vsub.s32 %v6074, %v6076
    %v6078 = vrot.slane %v6068, %v6077
    %v6080 = vunpack.c.l.s4 1966171168
    %v6081 = vunpack.c.0.s8 %v6080
    %v6082 = vlaneseq
    %v6083 = vshrl.u32 %v6082, 7
    %v6084 = vsub.s32 %v6081, %v6083
    %v6085 = vrot.slane %v6069, %v6084
    %v6087 = vunpack.c.l.s4 1966171168
    %v6088 = vunpack.c.0.s8 %v6087
    %v6089 = vlaneseq
    %v6090 = vshrl.u32 %v6089, 7
    %v6091 = vsub.s32 %v6088, %v6090
    %v6092 = vrot.slane %v6070, %v6091
    %v6094 = vunpack.c.l.s4 1966171168
    %v6095 = vunpack.c.0.s8 %v6094
    %v6096 = vlaneseq
    %v6097 = vshrl.u32 %v6096, 7
    %v6098 = vsub.s32 %v6095, %v6097
    %v6099 = vrot.slane %v6071, %v6098
    %v6100 = vcombine.low %v6078, %v6085
    %v6101 = vcombine.low %v6092, %v6099
    %v6103 = vunpack.c.l.s4 1966171168
    %v6104 = vunpack.c.0.s8 %v6103
    %v6105 = vlaneseq
    %v6106 = vshrl.u32 %v6105, 7
    %v6107 = vsub.s32 %v6104, %v6106
    %v6108 = vrot.slane %v6100, %v6107
    %v6110 = vunpack.c.l.s4 1966171168
    %v6111 = vunpack.c.0.s8 %v6110
    %v6112 = vlaneseq
    %v6113 = vshrl.u32 %v6112, 7
    %v6114 = vsub.s32 %v6111, %v6113
    %v6115 = vrot.slane %v6101, %v6114
    %v6116 = vcombine.low %v6108, %v6115
    %s6118 = scalar_lea.vmem [#allocation7], 1
    %6119 = vst.msk [vmem:[%s6118] ss:$2 sm:$0x7f] %vm4927, %v6116
    // Predicated region
    $region38: #{tpu_custom_call.1} parent=1 // pred_check
      _
    $region39: #{tpu_custom_call.1} parent=1 // pred_check_branch
      %6121 = sbr.rel (0) target = $region41
    $region40: #{tpu_custom_call.1} parent=1 // pred_region
      %s6123 = ssub.s32 224, 224
      %6124 = vsyncadd [#allocation6], %s6123
      %s6126 = sshll.u32 [#allocation7], 4
      %s6127 = int_to_ptr.vmem [resolvable:$true] %s6126
      %6129 = dma.vmem_to_hbm [thread:$0]  %s6127, 224, %s8, [#allocation6]
    $region41: #{tpu_custom_call.1} parent=1 // pred_fallthru
      _
    // Predicated region
    $region42: #{tpu_custom_call.1} parent=1 // pred_check
      _
    $region43: #{tpu_custom_call.1} parent=1 // pred_check_branch
      %6131 = sbr.rel (0) target = $region45
    $region44: #{tpu_custom_call.1} parent=1 // pred_region
      %6132 = dma.done [#allocation6], 224
    $region45: #{tpu_custom_call.1} parent=1 // pred_fallthru
      _
    %6133 = vsyncpa [#allocation5], 1
    %6134 = vsyncpa [#allocation6], 1

</llo_original>
